<compile_context>
chip_gen: v5e
topology: v5e:2x2
jax: 0.10.0
libtpu: 0.0.40
codegen_flags: <defaults>
</compile_context>

<pallas_src>
import functools

import jax
import jax.numpy as jnp
from jax.experimental import pallas as pl
from jax.experimental.pallas import tpu as pltpu


def mha_kernel(q_ref, k_ref, v_ref,
               wq_ref, bq_ref, wk_ref, bk_ref, wv_ref, bv_ref, wo_ref, bo_ref,
               out_ref, attnw_ref,
               kproj_ref, vproj_ref, ctx_ref, *, num_heads, head_size):
    # q_ref: (1, TT, E) bf16; k_ref/v_ref: (1, S, E) bf16
    # w*_ref: (E, E) bf16 (Wq pre-scaled); b*_ref: (1, E) f32 (bq pre-scaled)
    # out_ref: (1, TT, E) f32; attnw_ref: (1, TT, S) f32
    # kproj_ref/vproj_ref: (S, E) bf16 persistent scratch (K/V projections, per batch)
    # ctx_ref: (TT, E) bf16 scratch (concat-of-heads context)
    D = head_size

    # K/V projections depend only on the batch index -> compute once per batch
    # (t == 0) into persistent VMEM scratch; reused by every query tile.
    @pl.when(pl.program_id(1) == 0)
    def _():
        kproj_ref[...] = (jnp.dot(k_ref[0], wk_ref[...],
                                  preferred_element_type=jnp.float32)
                          + bk_ref[...]).astype(jnp.bfloat16)
        vproj_ref[...] = (jnp.dot(v_ref[0], wv_ref[...],
                                  preferred_element_type=jnp.float32)
                          + bv_ref[...]).astype(jnp.bfloat16)

    # Full-width Q projection (scaling already folded into Wq / bq).
    q_all = (jnp.dot(q_ref[0], wq_ref[...], preferred_element_type=jnp.float32)
             + bq_ref[...]).astype(jnp.bfloat16)                          # (TT, E)

    # TODO(synk): attn_mask / key_padding_mask (optional inputs, default None) and
    # nonzero weight_dropout are not implemented.

    w_max = None
    for h in range(num_heads):                    # unrolled: static lane slices
        lo, hi = h * D, (h + 1) * D
        qh = q_all[:, lo:hi]                      # (TT, D) bf16
        kh = kproj_ref[:, lo:hi]                  # (S, D) bf16
        vh = vproj_ref[:, lo:hi]                  # (S, D) bf16

        # scores[t, s] = sum_d qh[t, d] * kh[s, d]
        scores = jax.lax.dot_general(
            qh, kh, (((1,), (1,)), ((), ())),
            preferred_element_type=jnp.float32)                           # (TT, S)

        # softmax over the src dimension (f32 elementwise, EUP reciprocal).
        m = jnp.max(scores, axis=-1, keepdims=True)
        e = jnp.exp(scores - m)
        inv = pl.reciprocal(jnp.sum(e, axis=-1, keepdims=True), approx=True)
        w = e * inv                                                       # (TT, S)

        # max-over-heads, kept in registers; single store after the loop.
        w_max = w if h == 0 else jnp.maximum(w_max, w)

        # Per-head context written at its static lane offset (replaces concat).
        ctx_ref[:, lo:hi] = jnp.dot(
            w.astype(jnp.bfloat16), vh,
            preferred_element_type=jnp.float32).astype(jnp.bfloat16)      # (TT, D)

    attnw_ref[0] = w_max.astype(attnw_ref.dtype)

    # One full-width output projection (K = E) instead of H K=D matmuls.
    out_ref[0] = (jnp.dot(ctx_ref[...], wo_ref[...],
                          preferred_element_type=jnp.float32)
                  + bo_ref[...]).astype(out_ref.dtype)


def _prepare_params(params, scaling):
    """Wrapper-side weight prep: bf16 weights, f32 biases, scaling folded into Wq/bq."""
    return {
        "wq": (params["wq"] * scaling).astype(jnp.bfloat16),
        "bq": (params["bq"] * scaling).astype(jnp.float32),
        "wk": params["wk"].astype(jnp.bfloat16),
        "bk": params["bk"].astype(jnp.float32),
        "wv": params["wv"].astype(jnp.bfloat16),
        "bv": params["bv"].astype(jnp.float32),
        "wo": params["wo"].astype(jnp.bfloat16),
        "bo": params["bo"].astype(jnp.float32),
    }


def _pick_tile_t(T, tile_t):
    """Largest divisor of T that is <= tile_t and a multiple of 8 (else T)."""
    tile_t = min(tile_t, T)
    if T % tile_t == 0 and (tile_t % 8 == 0 or tile_t == T):
        return tile_t
    for d in range(tile_t, 0, -1):
        if T % d == 0 and d % 8 == 0:
            return d
    return T


def multi_head_attention(query, key, value, params, num_heads, tile_t=256):
    B, T, E = query.shape
    S = key.shape[1]
    D = E // num_heads
    assert D * num_heads == E, "embedding size must be divisible by num_heads"
    scaling = float(D) ** -0.5

    tile_t = _pick_tile_t(T, tile_t)
    p = _prepare_params(params, scaling)

    # bf16 activations into the kernel (halves DMA bytes / resident K-V VMEM).
    q_bf = query.astype(jnp.bfloat16)
    k_bf = key.astype(jnp.bfloat16)
    v_bf = value.astype(jnp.bfloat16)

    kernel = functools.partial(mha_kernel, num_heads=num_heads, head_size=D)

    w_spec = pl.BlockSpec((E, E), lambda b, t: (0, 0))     # resident weights
    b_spec = pl.BlockSpec((1, E), lambda b, t: (0, 0))     # resident biases

    out_shapes = (jax.ShapeDtypeStruct((B, T, E), jnp.float32),
                  jax.ShapeDtypeStruct((B, T, S), jnp.float32))

    return pl.pallas_call(
        kernel,
        out_shape=out_shapes,
        grid_spec=pltpu.PrefetchScalarGridSpec(
            num_scalar_prefetch=0,
            grid=(B, T // tile_t),
            in_specs=[
                pl.BlockSpec((1, tile_t, E), lambda b, t: (b, t, 0)),  # query tile
                pl.BlockSpec((1, S, E), lambda b, t: (b, 0, 0)),       # key (resident in t)
                pl.BlockSpec((1, S, E), lambda b, t: (b, 0, 0)),       # value (resident in t)
                w_spec, b_spec,                                        # Wq, bq (pre-scaled)
                w_spec, b_spec,                                        # Wk, bk
                w_spec, b_spec,                                        # Wv, bv
                w_spec, b_spec,                                        # Wo, bo
            ],
            out_specs=[
                pl.BlockSpec((1, tile_t, E), lambda b, t: (b, t, 0)),  # attn_repre
                pl.BlockSpec((1, tile_t, S), lambda b, t: (b, t, 0)),  # attn_weights
            ],
            scratch_shapes=[
                pltpu.VMEM((S, E), jnp.bfloat16),        # projected K (persists over t)
                pltpu.VMEM((S, E), jnp.bfloat16),        # projected V (persists over t)
                pltpu.VMEM((tile_t, E), jnp.bfloat16),   # concat-of-heads context
            ],
        ),
        compiler_params=pltpu.CompilerParams(
            # t must be "arbitrary": the t == 0 step writes the K/V projection scratch
            # that later t steps of the same batch reuse.
            dimension_semantics=("parallel", "arbitrary")),
    )(q_bf, k_bf, v_bf,
      p["wq"], p["bq"], p["wk"], p["bk"], p["wv"], p["bv"], p["wo"], p["bo"])


def _reference(query, key, value, params, num_heads):
    """Pure-JAX f32 reference mirroring the PyTorch forward exactly."""
    B, T, E = query.shape
    S = key.shape[1]
    D = E // num_heads
    scaling = float(D) ** -0.5
    q = (query @ params["wq"] + params["bq"]) * scaling
    k = key @ params["wk"] + params["bk"]
    v = value @ params["wv"] + params["bv"]
    q = q.reshape(B, T, num_heads, D).transpose(0, 2, 1, 3)          # (B,H,T,D)
    k = k.reshape(B, S, num_heads, D).transpose(0, 2, 3, 1)          # (B,H,D,S)
    v = v.reshape(B, S, num_heads, D).transpose(0, 2, 1, 3)          # (B,H,S,D)
    w = jax.nn.softmax(jnp.matmul(q, k), axis=-1)                    # (B,H,T,S)
    rep = jnp.matmul(w, v).transpose(0, 2, 1, 3).reshape(B, T, E)
    rep = rep @ params["wo"] + params["bo"]
    return rep, jnp.max(w, axis=1)


if __name__ == "__main__":
    # Lane-dense shapes (E, S multiples of 128). T = 512 gives 2 query tiles per batch
    # at the default tile_t=256, exercising the once-per-batch K/V-projection cache.
    B, T, S, E, H = 2, 512, 128, 128, 4

    key0 = jax.random.PRNGKey(0)
    ks = jax.random.split(key0, 12)

    # Weights ~ N(0, 0.02) as in the module's init; biases ~ U(-1/sqrt(E), 1/sqrt(E))
    # (PyTorch Linear default). Stored pre-transposed as (in, out).
    bound = 1.0 / (E ** 0.5)
    params = {
        "wq": 0.02 * jax.random.normal(ks[0], (E, E), jnp.float32),
        "bq": jax.random.uniform(ks[1], (1, E), jnp.float32, -bound, bound),
        "wk": 0.02 * jax.random.normal(ks[2], (E, E), jnp.float32),
        "bk": jax.random.uniform(ks[3], (1, E), jnp.float32, -bound, bound),
        "wv": 0.02 * jax.random.normal(ks[4], (E, E), jnp.float32),
        "bv": jax.random.uniform(ks[5], (1, E), jnp.float32, -bound, bound),
        "wo": 0.02 * jax.random.normal(ks[6], (E, E), jnp.float32),
        "bo": jax.random.uniform(ks[7], (1, E), jnp.float32, -bound, bound),
    }

    query = jax.random.normal(ks[8], (B, T, E), jnp.float32)
    key_ = jax.random.normal(ks[9], (B, S, E), jnp.float32)
    value = jax.random.normal(ks[10], (B, S, E), jnp.float32)

    attn_repre, attn_weights = multi_head_attention(query, key_, value, params, H)
    jax.block_until_ready((attn_repre, attn_weights))

    ref_repre, ref_weights = _reference(query, key_, value, params, H)
    assert attn_repre.shape == (B, T, E)
    assert attn_weights.shape == (B, T, S)
    # bf16 MXU operands + approx reciprocal -> compare against the f32 reference with
    # a correspondingly relaxed tolerance.
    assert jnp.allclose(attn_repre, ref_repre, atol=2e-2, rtol=2e-2), (
        float(jnp.max(jnp.abs(attn_repre - ref_repre))))
    assert jnp.allclose(attn_weights, ref_weights, atol=2e-2, rtol=2e-2), (
        float(jnp.max(jnp.abs(attn_weights - ref_weights))))

    print("KERNEL_OK")
</pallas_src>

<mosaic_0001>
module attributes {stable_mosaic.version = 11 : i64} {
  func.func @mha_kernel(%arg0: i32, %arg1: i32, %arg2: memref<1x256x128xbf16, #tpu.memory_space<vmem>>, %arg3: memref<1x128x128xbf16, #tpu.memory_space<vmem>>, %arg4: memref<1x128x128xbf16, #tpu.memory_space<vmem>>, %arg5: memref<128x128xbf16, #tpu.memory_space<vmem>>, %arg6: memref<1x128xf32, #tpu.memory_space<vmem>>, %arg7: memref<128x128xbf16, #tpu.memory_space<vmem>>, %arg8: memref<1x128xf32, #tpu.memory_space<vmem>>, %arg9: memref<128x128xbf16, #tpu.memory_space<vmem>>, %arg10: memref<1x128xf32, #tpu.memory_space<vmem>>, %arg11: memref<128x128xbf16, #tpu.memory_space<vmem>>, %arg12: memref<1x128xf32, #tpu.memory_space<vmem>>, %arg13: memref<1x256x128xf32, #tpu.memory_space<vmem>>, %arg14: memref<1x256x128xf32, #tpu.memory_space<vmem>>, %arg15: memref<128x128xbf16, #tpu.memory_space<vmem>>, %arg16: memref<128x128xbf16, #tpu.memory_space<vmem>>, %arg17: memref<256x128xbf16, #tpu.memory_space<vmem>>) attributes {dimension_semantics = [#tpu.dimension_semantics<parallel>, #tpu.dimension_semantics<arbitrary>], iteration_bounds = array<i64: 2, 2>, scalar_prefetch = 0 : i64, scratch_operands = 3 : i64, tpu.core_type = #tpu.core_type<tc>, window_params = [{transform_indices = @transform_0, window_bounds = array<i64: 1, 256, 128>}, {transform_indices = @transform_1, window_bounds = array<i64: 1, 128, 128>}, {transform_indices = @transform_2, window_bounds = array<i64: 1, 128, 128>}, {pipeline_mode = #tpu.pipeline_mode<synchronous>, transform_indices = @transform_3, window_bounds = array<i64: 128, 128>}, {pipeline_mode = #tpu.pipeline_mode<synchronous>, transform_indices = @transform_4, window_bounds = array<i64: 1, 128>}, {pipeline_mode = #tpu.pipeline_mode<synchronous>, transform_indices = @transform_5, window_bounds = array<i64: 128, 128>}, {pipeline_mode = #tpu.pipeline_mode<synchronous>, transform_indices = @transform_6, window_bounds = array<i64: 1, 128>}, {pipeline_mode = #tpu.pipeline_mode<synchronous>, transform_indices = @transform_7, window_bounds = array<i64: 128, 128>}, {pipeline_mode = #tpu.pipeline_mode<synchronous>, transform_indices = @transform_8, window_bounds = array<i64: 1, 128>}, {pipeline_mode = #tpu.pipeline_mode<synchronous>, transform_indices = @transform_9, window_bounds = array<i64: 128, 128>}, {pipeline_mode = #tpu.pipeline_mode<synchronous>, transform_indices = @transform_10, window_bounds = array<i64: 1, 128>}, {transform_indices = @transform_11, window_bounds = array<i64: 1, 256, 128>}, {transform_indices = @transform_12, window_bounds = array<i64: 1, 256, 128>}]} {
    %c0_i32 = arith.constant 0 : i32
    %0 = arith.cmpi eq, %arg1, %c0_i32 : i32
    %1 = arith.extui %0 : i1 to i32
    %c0_i32_0 = arith.constant 0 : i32
    %2 = arith.cmpi ne, %1, %c0_i32_0 : i32
    scf.if %2 {
      %c0_57 = arith.constant 0 : index
      %c0_58 = arith.constant 0 : index
      %c0_59 = arith.constant 0 : index
      %98 = vector.load %arg3[%c0_57, %c0_58, %c0_59] : memref<1x128x128xbf16, #tpu.memory_space<vmem>>, vector<1x128x128xbf16>
      %99 = vector.shape_cast %98 : vector<1x128x128xbf16> to vector<128x128xbf16>
      %c0_60 = arith.constant 0 : index
      %c0_61 = arith.constant 0 : index
      %100 = vector.load %arg7[%c0_60, %c0_61] : memref<128x128xbf16, #tpu.memory_space<vmem>>, vector<128x128xbf16>
      %cst_62 = arith.constant dense<0.000000e+00> : vector<128x128xf32>
      %101 = tpu.matmul %99, %100, %cst_62 {dimension_numbers = #tpu.dot_dimension_numbers<[1], [0], [0], [1], [0, 0, 1, 1], [], []>} : vector<128x128xbf16>, vector<128x128xbf16>, vector<128x128xf32> -> vector<128x128xf32>
      %c0_63 = arith.constant 0 : index
      %c0_64 = arith.constant 0 : index
      %102 = vector.load %arg8[%c0_63, %c0_64] : memref<1x128xf32, #tpu.memory_space<vmem>>, vector<1x128xf32>
      %103 = vector.broadcast %102 : vector<1x128xf32> to vector<128x128xf32>
      %104 = arith.addf %101, %103 : vector<128x128xf32>
      %105 = arith.truncf %104 : vector<128x128xf32> to vector<128x128xbf16>
      %c0_65 = arith.constant 0 : index
      %c0_66 = arith.constant 0 : index
      %106 = vector.load %arg15[%c0_65, %c0_66] : memref<128x128xbf16, #tpu.memory_space<vmem>>, vector<128x128xbf16>
      tpu.vector_store %arg15[%c0_65, %c0_66], %105 {strides = array<i32>} : memref<128x128xbf16, #tpu.memory_space<vmem>>, vector<128x128xbf16>,
      %c0_67 = arith.constant 0 : index
      %c0_68 = arith.constant 0 : index
      %c0_69 = arith.constant 0 : index
      %107 = vector.load %arg4[%c0_67, %c0_68, %c0_69] : memref<1x128x128xbf16, #tpu.memory_space<vmem>>, vector<1x128x128xbf16>
      %108 = vector.shape_cast %107 : vector<1x128x128xbf16> to vector<128x128xbf16>
      %c0_70 = arith.constant 0 : index
      %c0_71 = arith.constant 0 : index
      %109 = vector.load %arg9[%c0_70, %c0_71] : memref<128x128xbf16, #tpu.memory_space<vmem>>, vector<128x128xbf16>
      %cst_72 = arith.constant dense<0.000000e+00> : vector<128x128xf32>
      %110 = tpu.matmul %108, %109, %cst_72 {dimension_numbers = #tpu.dot_dimension_numbers<[1], [0], [0], [1], [0, 0, 1, 1], [], []>} : vector<128x128xbf16>, vector<128x128xbf16>, vector<128x128xf32> -> vector<128x128xf32>
      %c0_73 = arith.constant 0 : index
      %c0_74 = arith.constant 0 : index
      %111 = vector.load %arg10[%c0_73, %c0_74] : memref<1x128xf32, #tpu.memory_space<vmem>>, vector<1x128xf32>
      %112 = vector.broadcast %111 : vector<1x128xf32> to vector<128x128xf32>
      %113 = arith.addf %110, %112 : vector<128x128xf32>
      %114 = arith.truncf %113 : vector<128x128xf32> to vector<128x128xbf16>
      %c0_75 = arith.constant 0 : index
      %c0_76 = arith.constant 0 : index
      %115 = vector.load %arg16[%c0_75, %c0_76] : memref<128x128xbf16, #tpu.memory_space<vmem>>, vector<128x128xbf16>
      tpu.vector_store %arg16[%c0_75, %c0_76], %114 {strides = array<i32>} : memref<128x128xbf16, #tpu.memory_space<vmem>>, vector<128x128xbf16>,
    } else {
    }
    %c0 = arith.constant 0 : index
    %c0_1 = arith.constant 0 : index
    %c0_2 = arith.constant 0 : index
    %3 = vector.load %arg2[%c0, %c0_1, %c0_2] : memref<1x256x128xbf16, #tpu.memory_space<vmem>>, vector<1x256x128xbf16>
    %4 = vector.shape_cast %3 : vector<1x256x128xbf16> to vector<256x128xbf16>
    %c0_3 = arith.constant 0 : index
    %c0_4 = arith.constant 0 : index
    %5 = vector.load %arg5[%c0_3, %c0_4] : memref<128x128xbf16, #tpu.memory_space<vmem>>, vector<128x128xbf16>
    %cst = arith.constant dense<0.000000e+00> : vector<256x128xf32>
    %6 = tpu.matmul %4, %5, %cst {dimension_numbers = #tpu.dot_dimension_numbers<[1], [0], [0], [1], [0, 0, 1, 1], [], []>} : vector<256x128xbf16>, vector<128x128xbf16>, vector<256x128xf32> -> vector<256x128xf32>
    %c0_5 = arith.constant 0 : index
    %c0_6 = arith.constant 0 : index
    %7 = vector.load %arg6[%c0_5, %c0_6] : memref<1x128xf32, #tpu.memory_space<vmem>>, vector<1x128xf32>
    %8 = vector.broadcast %7 : vector<1x128xf32> to vector<256x128xf32>
    %9 = arith.addf %6, %8 : vector<256x128xf32>
    %10 = arith.truncf %9 : vector<256x128xf32> to vector<256x128xbf16>
    %11 = vector.extract_strided_slice %10 {offsets = [0, 0], sizes = [256, 32], strides = [1, 1]} : vector<256x128xbf16> to vector<256x32xbf16>
    %c0_7 = arith.constant 0 : index
    %c0_8 = arith.constant 0 : index
    %12 = vector.load %arg15[%c0_7, %c0_8] : memref<128x128xbf16, #tpu.memory_space<vmem>>, vector<128x32xbf16>
    %c0_9 = arith.constant 0 : index
    %c0_10 = arith.constant 0 : index
    %13 = vector.load %arg16[%c0_9, %c0_10] : memref<128x128xbf16, #tpu.memory_space<vmem>>, vector<128x32xbf16>
    %cst_11 = arith.constant dense<0.000000e+00> : vector<256x128xf32>
    %14 = tpu.matmul %11, %12, %cst_11 {dimension_numbers = #tpu.dot_dimension_numbers<[1], [1], [0], [0], [0, 0, 1, 0], [], []>} : vector<256x32xbf16>, vector<128x32xbf16>, vector<256x128xf32> -> vector<256x128xf32>
    %cst_12 = arith.constant dense<0xFF800000> : vector<256xf32>
    %15 = vector.multi_reduction <maximumf>, %14, %cst_12 [1] : vector<256x128xf32> to vector<256xf32>
    %16 = vector.shape_cast %15 : vector<256xf32> to vector<256x1xf32>
    %17 = vector.broadcast %16 : vector<256x1xf32> to vector<256x128xf32>
    %18 = arith.subf %14, %17 : vector<256x128xf32>
    %19 = math.exp %18 : vector<256x128xf32>
    %cst_13 = arith.constant dense<0.000000e+00> : vector<256xf32>
    %20 = vector.multi_reduction <add>, %19, %cst_13 [1] : vector<256x128xf32> to vector<256xf32>
    %21 = vector.shape_cast %20 : vector<256xf32> to vector<256x1xf32>
    %22 = tpu.reciprocal %21 {approx = true} : vector<256x1xf32> -> vector<256x1xf32>
    %23 = vector.broadcast %22 : vector<256x1xf32> to vector<256x128xf32>
    %24 = arith.mulf %19, %23 : vector<256x128xf32>
    %25 = arith.truncf %24 : vector<256x128xf32> to vector<256x128xbf16>
    %cst_14 = arith.constant dense<0.000000e+00> : vector<256x32xf32>
    %26 = tpu.matmul %25, %13, %cst_14 {dimension_numbers = #tpu.dot_dimension_numbers<[1], [0], [0], [1], [0, 0, 1, 1], [], []>} : vector<256x128xbf16>, vector<128x32xbf16>, vector<256x32xf32> -> vector<256x32xf32>
    %27 = arith.truncf %26 : vector<256x32xf32> to vector<256x32xbf16>
    %c0_15 = arith.constant 0 : index
    %c0_16 = arith.constant 0 : index
    %28 = vector.load %arg17[%c0_15, %c0_16] : memref<256x128xbf16, #tpu.memory_space<vmem>>, vector<256x32xbf16>
    tpu.vector_store %arg17[%c0_15, %c0_16], %27 {strides = array<i32>} : memref<256x128xbf16, #tpu.memory_space<vmem>>, vector<256x32xbf16>,
    %29 = vector.extract_strided_slice %10 {offsets = [0, 32], sizes = [256, 32], strides = [1, 1]} : vector<256x128xbf16> to vector<256x32xbf16>
    %c0_17 = arith.constant 0 : index
    %c32 = arith.constant 32 : index
    %30 = vector.load %arg15[%c0_17, %c32] : memref<128x128xbf16, #tpu.memory_space<vmem>>, vector<128x32xbf16>
    %c0_18 = arith.constant 0 : index
    %c32_19 = arith.constant 32 : index
    %31 = vector.load %arg16[%c0_18, %c32_19] : memref<128x128xbf16, #tpu.memory_space<vmem>>, vector<128x32xbf16>
    %cst_20 = arith.constant dense<0.000000e+00> : vector<256x128xf32>
    %32 = tpu.matmul %29, %30, %cst_20 {dimension_numbers = #tpu.dot_dimension_numbers<[1], [1], [0], [0], [0, 0, 1, 0], [], []>} : vector<256x32xbf16>, vector<128x32xbf16>, vector<256x128xf32> -> vector<256x128xf32>
    %cst_21 = arith.constant dense<0xFF800000> : vector<256xf32>
    %33 = vector.multi_reduction <maximumf>, %32, %cst_21 [1] : vector<256x128xf32> to vector<256xf32>
    %34 = vector.shape_cast %33 : vector<256xf32> to vector<256x1xf32>
    %35 = vector.broadcast %34 : vector<256x1xf32> to vector<256x128xf32>
    %36 = arith.subf %32, %35 : vector<256x128xf32>
    %37 = math.exp %36 : vector<256x128xf32>
    %cst_22 = arith.constant dense<0.000000e+00> : vector<256xf32>
    %38 = vector.multi_reduction <add>, %37, %cst_22 [1] : vector<256x128xf32> to vector<256xf32>
    %39 = vector.shape_cast %38 : vector<256xf32> to vector<256x1xf32>
    %40 = tpu.reciprocal %39 {approx = true} : vector<256x1xf32> -> vector<256x1xf32>
    %41 = vector.broadcast %40 : vector<256x1xf32> to vector<256x128xf32>
    %42 = arith.mulf %37, %41 : vector<256x128xf32>
    %43 = arith.maximumf %24, %42 : vector<256x128xf32>
    %44 = arith.truncf %42 : vector<256x128xf32> to vector<256x128xbf16>
    %cst_23 = arith.constant dense<0.000000e+00> : vector<256x32xf32>
    %45 = tpu.matmul %44, %31, %cst_23 {dimension_numbers = #tpu.dot_dimension_numbers<[1], [0], [0], [1], [0, 0, 1, 1], [], []>} : vector<256x128xbf16>, vector<128x32xbf16>, vector<256x32xf32> -> vector<256x32xf32>
    %46 = arith.truncf %45 : vector<256x32xf32> to vector<256x32xbf16>
    %c0_24 = arith.constant 0 : index
    %c32_25 = arith.constant 32 : index
    %47 = vector.load %arg17[%c0_24, %c32_25] : memref<256x128xbf16, #tpu.memory_space<vmem>>, vector<256x32xbf16>
    tpu.vector_store %arg17[%c0_24, %c32_25], %46 {strides = array<i32>} : memref<256x128xbf16, #tpu.memory_space<vmem>>, vector<256x32xbf16>,
    %48 = vector.extract_strided_slice %10 {offsets = [0, 64], sizes = [256, 32], strides = [1, 1]} : vector<256x128xbf16> to vector<256x32xbf16>
    %c0_26 = arith.constant 0 : index
    %c64 = arith.constant 64 : index
    %49 = vector.load %arg15[%c0_26, %c64] : memref<128x128xbf16, #tpu.memory_space<vmem>>, vector<128x32xbf16>
    %c0_27 = arith.constant 0 : index
    %c64_28 = arith.constant 64 : index
    %50 = vector.load %arg16[%c0_27, %c64_28] : memref<128x128xbf16, #tpu.memory_space<vmem>>, vector<128x32xbf16>
    %cst_29 = arith.constant dense<0.000000e+00> : vector<256x128xf32>
    %51 = tpu.matmul %48, %49, %cst_29 {dimension_numbers = #tpu.dot_dimension_numbers<[1], [1], [0], [0], [0, 0, 1, 0], [], []>} : vector<256x32xbf16>, vector<128x32xbf16>, vector<256x128xf32> -> vector<256x128xf32>
    %cst_30 = arith.constant dense<0xFF800000> : vector<256xf32>
    %52 = vector.multi_reduction <maximumf>, %51, %cst_30 [1] : vector<256x128xf32> to vector<256xf32>
    %53 = vector.shape_cast %52 : vector<256xf32> to vector<256x1xf32>
    %54 = vector.broadcast %53 : vector<256x1xf32> to vector<256x128xf32>
    %55 = arith.subf %51, %54 : vector<256x128xf32>
    %56 = math.exp %55 : vector<256x128xf32>
    %cst_31 = arith.constant dense<0.000000e+00> : vector<256xf32>
    %57 = vector.multi_reduction <add>, %56, %cst_31 [1] : vector<256x128xf32> to vector<256xf32>
    %58 = vector.shape_cast %57 : vector<256xf32> to vector<256x1xf32>
    %59 = tpu.reciprocal %58 {approx = true} : vector<256x1xf32> -> vector<256x1xf32>
    %60 = vector.broadcast %59 : vector<256x1xf32> to vector<256x128xf32>
    %61 = arith.mulf %56, %60 : vector<256x128xf32>
    %62 = arith.maximumf %43, %61 : vector<256x128xf32>
    %63 = arith.truncf %61 : vector<256x128xf32> to vector<256x128xbf16>
    %cst_32 = arith.constant dense<0.000000e+00> : vector<256x32xf32>
    %64 = tpu.matmul %63, %50, %cst_32 {dimension_numbers = #tpu.dot_dimension_numbers<[1], [0], [0], [1], [0, 0, 1, 1], [], []>} : vector<256x128xbf16>, vector<128x32xbf16>, vector<256x32xf32> -> vector<256x32xf32>
    %65 = arith.truncf %64 : vector<256x32xf32> to vector<256x32xbf16>
    %c0_33 = arith.constant 0 : index
    %c64_34 = arith.constant 64 : index
    %66 = vector.load %arg17[%c0_33, %c64_34] : memref<256x128xbf16, #tpu.memory_space<vmem>>, vector<256x32xbf16>
    tpu.vector_store %arg17[%c0_33, %c64_34], %65 {strides = array<i32>} : memref<256x128xbf16, #tpu.memory_space<vmem>>, vector<256x32xbf16>,
    %67 = vector.extract_strided_slice %10 {offsets = [0, 96], sizes = [256, 32], strides = [1, 1]} : vector<256x128xbf16> to vector<256x32xbf16>
    %c0_35 = arith.constant 0 : index
    %c96 = arith.constant 96 : index
    %68 = vector.load %arg15[%c0_35, %c96] : memref<128x128xbf16, #tpu.memory_space<vmem>>, vector<128x32xbf16>
    %c0_36 = arith.constant 0 : index
    %c96_37 = arith.constant 96 : index
    %69 = vector.load %arg16[%c0_36, %c96_37] : memref<128x128xbf16, #tpu.memory_space<vmem>>, vector<128x32xbf16>
    %cst_38 = arith.constant dense<0.000000e+00> : vector<256x128xf32>
    %70 = tpu.matmul %67, %68, %cst_38 {dimension_numbers = #tpu.dot_dimension_numbers<[1], [1], [0], [0], [0, 0, 1, 0], [], []>} : vector<256x32xbf16>, vector<128x32xbf16>, vector<256x128xf32> -> vector<256x128xf32>
    %cst_39 = arith.constant dense<0xFF800000> : vector<256xf32>
    %71 = vector.multi_reduction <maximumf>, %70, %cst_39 [1] : vector<256x128xf32> to vector<256xf32>
    %72 = vector.shape_cast %71 : vector<256xf32> to vector<256x1xf32>
    %73 = vector.broadcast %72 : vector<256x1xf32> to vector<256x128xf32>
    %74 = arith.subf %70, %73 : vector<256x128xf32>
    %75 = math.exp %74 : vector<256x128xf32>
    %cst_40 = arith.constant dense<0.000000e+00> : vector<256xf32>
    %76 = vector.multi_reduction <add>, %75, %cst_40 [1] : vector<256x128xf32> to vector<256xf32>
    %77 = vector.shape_cast %76 : vector<256xf32> to vector<256x1xf32>
    %78 = tpu.reciprocal %77 {approx = true} : vector<256x1xf32> -> vector<256x1xf32>
    %79 = vector.broadcast %78 : vector<256x1xf32> to vector<256x128xf32>
    %80 = arith.mulf %75, %79 : vector<256x128xf32>
    %81 = arith.maximumf %62, %80 : vector<256x128xf32>
    %82 = arith.truncf %80 : vector<256x128xf32> to vector<256x128xbf16>
    %cst_41 = arith.constant dense<0.000000e+00> : vector<256x32xf32>
    %83 = tpu.matmul %82, %69, %cst_41 {dimension_numbers = #tpu.dot_dimension_numbers<[1], [0], [0], [1], [0, 0, 1, 1], [], []>} : vector<256x128xbf16>, vector<128x32xbf16>, vector<256x32xf32> -> vector<256x32xf32>
    %84 = arith.truncf %83 : vector<256x32xf32> to vector<256x32xbf16>
    %c0_42 = arith.constant 0 : index
    %c96_43 = arith.constant 96 : index
    %85 = vector.load %arg17[%c0_42, %c96_43] : memref<256x128xbf16, #tpu.memory_space<vmem>>, vector<256x32xbf16>
    tpu.vector_store %arg17[%c0_42, %c96_43], %84 {strides = array<i32>} : memref<256x128xbf16, #tpu.memory_space<vmem>>, vector<256x32xbf16>,
    %c0_44 = arith.constant 0 : index
    %c0_45 = arith.constant 0 : index
    %c0_46 = arith.constant 0 : index
    %86 = vector.load %arg14[%c0_44, %c0_45, %c0_46] : memref<1x256x128xf32, #tpu.memory_space<vmem>>, vector<1x256x128xf32>
    %87 = vector.shape_cast %86 : vector<1x256x128xf32> to vector<256x128xf32>
    %88 = vector.shape_cast %81 : vector<256x128xf32> to vector<1x256x128xf32>
    tpu.vector_store %arg14[%c0_44, %c0_45, %c0_46], %88 {strides = array<i32>} : memref<1x256x128xf32, #tpu.memory_space<vmem>>, vector<1x256x128xf32>,
    %c0_47 = arith.constant 0 : index
    %c0_48 = arith.constant 0 : index
    %89 = vector.load %arg17[%c0_47, %c0_48] : memref<256x128xbf16, #tpu.memory_space<vmem>>, vector<256x128xbf16>
    %c0_49 = arith.constant 0 : index
    %c0_50 = arith.constant 0 : index
    %90 = vector.load %arg11[%c0_49, %c0_50] : memref<128x128xbf16, #tpu.memory_space<vmem>>, vector<128x128xbf16>
    %cst_51 = arith.constant dense<0.000000e+00> : vector<256x128xf32>
    %91 = tpu.matmul %89, %90, %cst_51 {dimension_numbers = #tpu.dot_dimension_numbers<[1], [0], [0], [1], [0, 0, 1, 1], [], []>} : vector<256x128xbf16>, vector<128x128xbf16>, vector<256x128xf32> -> vector<256x128xf32>
    %c0_52 = arith.constant 0 : index
    %c0_53 = arith.constant 0 : index
    %92 = vector.load %arg12[%c0_52, %c0_53] : memref<1x128xf32, #tpu.memory_space<vmem>>, vector<1x128xf32>
    %93 = vector.broadcast %92 : vector<1x128xf32> to vector<256x128xf32>
    %94 = arith.addf %91, %93 : vector<256x128xf32>
    %c0_54 = arith.constant 0 : index
    %c0_55 = arith.constant 0 : index
    %c0_56 = arith.constant 0 : index
    %95 = vector.load %arg13[%c0_54, %c0_55, %c0_56] : memref<1x256x128xf32, #tpu.memory_space<vmem>>, vector<1x256x128xf32>
    %96 = vector.shape_cast %95 : vector<1x256x128xf32> to vector<256x128xf32>
    %97 = vector.shape_cast %94 : vector<256x128xf32> to vector<1x256x128xf32>
    tpu.vector_store %arg13[%c0_54, %c0_55, %c0_56], %97 {strides = array<i32>} : memref<1x256x128xf32, #tpu.memory_space<vmem>>, vector<1x256x128xf32>,
    return
  }
  func.func @transform_0(%arg0: i32, %arg1: i32) -> (i32, i32, i32) {
    %c0_i32 = arith.constant 0 : i32
    %c0_i32_0 = arith.constant 0 : i32
    return %arg0, %arg1, %c0_i32 : i32, i32, i32
  }
  func.func @transform_1(%arg0: i32, %arg1: i32) -> (i32, i32, i32) {
    %c0_i32 = arith.constant 0 : i32
    %c0_i32_0 = arith.constant 0 : i32
    %c0_i32_1 = arith.constant 0 : i32
    return %arg0, %c0_i32, %c0_i32_0 : i32, i32, i32
  }
  func.func @transform_2(%arg0: i32, %arg1: i32) -> (i32, i32, i32) {
    %c0_i32 = arith.constant 0 : i32
    %c0_i32_0 = arith.constant 0 : i32
    %c0_i32_1 = arith.constant 0 : i32
    return %arg0, %c0_i32, %c0_i32_0 : i32, i32, i32
  }
  func.func @transform_3(%arg0: i32, %arg1: i32) -> (i32, i32) {
    %c0_i32 = arith.constant 0 : i32
    %c0_i32_0 = arith.constant 0 : i32
    %c0_i32_1 = arith.constant 0 : i32
    return %c0_i32, %c0_i32_0 : i32, i32
  }
  func.func @transform_4(%arg0: i32, %arg1: i32) -> (i32, i32) {
    %c0_i32 = arith.constant 0 : i32
    %c0_i32_0 = arith.constant 0 : i32
    %c0_i32_1 = arith.constant 0 : i32
    return %c0_i32, %c0_i32_0 : i32, i32
  }
  func.func @transform_5(%arg0: i32, %arg1: i32) -> (i32, i32) {
    %c0_i32 = arith.constant 0 : i32
    %c0_i32_0 = arith.constant 0 : i32
    %c0_i32_1 = arith.constant 0 : i32
    return %c0_i32, %c0_i32_0 : i32, i32
  }
  func.func @transform_6(%arg0: i32, %arg1: i32) -> (i32, i32) {
    %c0_i32 = arith.constant 0 : i32
    %c0_i32_0 = arith.constant 0 : i32
    %c0_i32_1 = arith.constant 0 : i32
    return %c0_i32, %c0_i32_0 : i32, i32
  }
  func.func @transform_7(%arg0: i32, %arg1: i32) -> (i32, i32) {
    %c0_i32 = arith.constant 0 : i32
    %c0_i32_0 = arith.constant 0 : i32
    %c0_i32_1 = arith.constant 0 : i32
    return %c0_i32, %c0_i32_0 : i32, i32
  }
  func.func @transform_8(%arg0: i32, %arg1: i32) -> (i32, i32) {
    %c0_i32 = arith.constant 0 : i32
    %c0_i32_0 = arith.constant 0 : i32
    %c0_i32_1 = arith.constant 0 : i32
    return %c0_i32, %c0_i32_0 : i32, i32
  }
  func.func @transform_9(%arg0: i32, %arg1: i32) -> (i32, i32) {
    %c0_i32 = arith.constant 0 : i32
    %c0_i32_0 = arith.constant 0 : i32
    %c0_i32_1 = arith.constant 0 : i32
    return %c0_i32, %c0_i32_0 : i32, i32
  }
  func.func @transform_10(%arg0: i32, %arg1: i32) -> (i32, i32) {
    %c0_i32 = arith.constant 0 : i32
    %c0_i32_0 = arith.constant 0 : i32
    %c0_i32_1 = arith.constant 0 : i32
    return %c0_i32, %c0_i32_0 : i32, i32
  }
  func.func @transform_11(%arg0: i32, %arg1: i32) -> (i32, i32, i32) {
    %c0_i32 = arith.constant 0 : i32
    %c0_i32_0 = arith.constant 0 : i32
    return %arg0, %arg1, %c0_i32 : i32, i32, i32
  }
  func.func @transform_12(%arg0: i32, %arg1: i32) -> (i32, i32, i32) {
    %c0_i32 = arith.constant 0 : i32
    %c0_i32_0 = arith.constant 0 : i32
    return %arg0, %arg1, %c0_i32 : i32, i32, i32
  }
}

</mosaic_0001>

<llo_original>
// kernel: tpu_custom_call.1
$region0: #{tpu_custom_call.1}
  #allocation0 [shape = 'u32[]', space=smem, size = 0x4, offset = 0x4, fixed_abs, tag = 'smem constant byte address 0x4 - core index']
  #allocation1 [shape = 'u32[72,128]{1,0:T(1,128)}', space=vmem, size = 0x9000, scoped, tag = 'internal scratch']
  #allocation2 [shape = 'bf16[128,128]{1,0:T(8,128)(2,1)}', space=vmem, size = 0x8000, scoped, tag = 'scratch operand']
  #allocation3 [shape = 'bf16[128,128]{1,0:T(8,128)(2,1)}', space=vmem, size = 0x8000, scoped, tag = 'scratch operand']
  #allocation4 [shape = 'bf16[256,128]{1,0:T(8,128)(2,1)}', space=vmem, size = 0x10000, scoped, tag = 'scratch operand']
  %s0 = inlined_call_operand.hbm [shape: bf16[2,512,128], index: 0, kind: input, shape index: {}]
  %s1 = inlined_call_operand.hbm [shape: bf16[2,128,128], index: 1, kind: input, shape index: {}]
  %s2 = inlined_call_operand.hbm [shape: bf16[2,128,128], index: 2, kind: input, shape index: {}]
  %s3 = inlined_call_operand.hbm [shape: bf16[128,128], index: 3, kind: input, shape index: {}]
  %s4 = inlined_call_operand.vmem [shape: f32[1,128], index: 4, kind: input, shape index: {}]
  %s5 = inlined_call_operand.hbm [shape: bf16[128,128], index: 5, kind: input, shape index: {}]
  %s6 = inlined_call_operand.vmem [shape: f32[1,128], index: 6, kind: input, shape index: {}]
  %s7 = inlined_call_operand.hbm [shape: bf16[128,128], index: 7, kind: input, shape index: {}]
  %s8 = inlined_call_operand.vmem [shape: f32[1,128], index: 8, kind: input, shape index: {}]
  %s9 = inlined_call_operand.hbm [shape: bf16[128,128], index: 9, kind: input, shape index: {}]
  %s10 = inlined_call_operand.vmem [shape: f32[1,128], index: 10, kind: input, shape index: {}]
  %s11 = inlined_call_operand.hbm [shape: f32[2,512,128], index: 11, kind: output, shape index: {0}]
  %s12 = inlined_call_operand.hbm [shape: f32[2,512,128], index: 12, kind: output, shape index: {1}]
  %13 = xla_tuple %s11, %s12
  %s14 = sld [smem:[#allocation0]]
  $region117: #{tpu_custom_call.1} parent=0
    _
  %s16 = ssub.s32 1, %s14
  %s17 = scalar_select 0, %s16, %s14
  $region1: #{tpu_custom_call.1} parent=0
    #allocation5 [shape = 'u8[131072]{0}', space=vmem, size = 0x20000, scoped, tag = 'input window, operand 0']
    #allocation6 [shape = 's32[2]{0}', space=sflag, size = 0x8, scoped, tag = 'scoped memory for tpu_custom_call.1']
    #allocation7 [shape = 's32[2]{0}', space=sflag, size = 0x8, scoped, tag = 'scoped memory for tpu_custom_call.1']
    #allocation8 [shape = 'u8[65536]{0}', space=vmem, size = 0x10000, scoped, tag = 'input window, operand 1']
    #allocation9 [shape = 's32[2]{0}', space=sflag, size = 0x8, scoped, tag = 'scoped memory for tpu_custom_call.1']
    #allocation10 [shape = 'u8[65536]{0}', space=vmem, size = 0x10000, scoped, tag = 'input window, operand 2']
    #allocation11 [shape = 'u8[32768]{0}', space=vmem, size = 0x8000, scoped, tag = 'input window, operand 3, single buffered']
    #allocation12 [shape = 's32[1]{0}', space=sflag, size = 0x4, scoped, tag = 'scoped memory for tpu_custom_call.1']
    #allocation13 [shape = 'u8[32768]{0}', space=vmem, size = 0x8000, scoped, tag = 'input window, operand 5, single buffered']
    #allocation14 [shape = 'u8[32768]{0}', space=vmem, size = 0x8000, scoped, tag = 'input window, operand 7, single buffered']
    #allocation15 [shape = 's32[1]{0}', space=sflag, size = 0x4, scoped, tag = 'scoped memory for tpu_custom_call.1']
    #allocation16 [shape = 'u8[32768]{0}', space=vmem, size = 0x8000, scoped, tag = 'input window, operand 9, single buffered']
    #allocation17 [shape = 'u8[262144]{0}', space=vmem, size = 0x40000, scoped, tag = 'output window, operand 0']
    #allocation18 [shape = 'u8[262144]{0}', space=vmem, size = 0x40000, scoped, tag = 'output window, operand 1']
    #allocation19 [shape = 's32[2]{0}', space=sflag, size = 0x8, scoped, tag = 'scoped memory for tpu_custom_call.1']
    %18 = vsyncpa [#allocation6], 0
    %s19 = scalar_lea.sflag [#allocation6], 1
    %20 = vsyncpa %s19, 0
    %21 = vsyncpa [#allocation9], 0
    %s22 = scalar_lea.sflag [#allocation9], 1
    %23 = vsyncpa %s22, 0
    %24 = vsyncpa [#allocation12], 0
    %25 = vsyncpa [#allocation15], 0
    %26 = vsyncpa [#allocation7], 0
    %s27 = scalar_lea.sflag [#allocation7], 1
    %28 = vsyncpa %s27, 0
    %29 = vsyncpa [#allocation19], 0
    %s30 = scalar_lea.sflag [#allocation19], 1
    %31 = vsyncpa %s30, 0
    loop: start=0, step=1, limit=6
    $region2: #{tpu_custom_call.1} parent=1 // loop_pre_header
      _
    $region3: #{tpu_custom_call.1} parent=1 // loop_header
      %s33 = sphi 0, %s37
      %p34 = scmp.ge.s32.totalorder %s33, 6
      %s40 = sphi 0, %s52
      %s41 = sphi 0, %s48
      %s42 = sphi 0, %s40
      %s43 = sphi 0, %s41
      %s44 = sphi 0, %s42
      %s45 = sphi 0, %s43
      %s57 = sphi 0, %s59
      %s60 = sphi 0, %s57
      %s61 = sphi 0, %s60
      %s77 = sphi 0, %s61
      %s83 = sphi 0, %s85
      %s86 = sphi 0, %s83
      %s87 = sphi 0, %s86
      %s103 = sphi 0, %s87
      %s109 = sphi 0, %s111
      %s112 = sphi 0, %s109
      %s113 = sphi 0, %s112
      %s129 = sphi 0, %s113
      %s133 = sphi 0, %s133
      %s135 = sphi 0, %s133
      %s136 = sphi 0, %s135
      %s150 = sphi 0, %s136
      %s154 = sphi 0, %s154
      %s156 = sphi 0, %s154
      %s157 = sphi 0, %s156
      %s171 = sphi 0, %s157
      %s175 = sphi 0, %s175
      %s177 = sphi 0, %s175
      %s178 = sphi 0, %s177
      %s192 = sphi 0, %s178
      %s196 = sphi 0, %s196
      %s198 = sphi 0, %s196
      %s199 = sphi 0, %s198
      %s213 = sphi 0, %s199
      %s217 = sphi 0, %s217
      %s219 = sphi 0, %s217
      %s220 = sphi 0, %s219
      %s234 = sphi 0, %s220
      %s238 = sphi 0, %s238
      %s240 = sphi 0, %s238
      %s241 = sphi 0, %s240
      %s255 = sphi 0, %s241
      %s259 = sphi 0, %s259
      %s261 = sphi 0, %s259
      %s262 = sphi 0, %s261
      %s276 = sphi 0, %s262
      %s280 = sphi 0, %s280
      %s282 = sphi 0, %s280
      %s283 = sphi 0, %s282
      %s297 = sphi 0, %s283
      %s305 = sphi 0, %s307
      %s308 = sphi 0, %s305
      %s309 = sphi 0, %s308
      %s325 = sphi 0, %s309
      %s333 = sphi 0, %s335
      %s336 = sphi 0, %s333
      %s337 = sphi 0, %s336
      %s353 = sphi 0, %s337
    $region4: #{tpu_custom_call.1} parent=1 // loop_header_branch
      %36 = sbr.rel (%p34) target = $region8
    $region5: #{tpu_custom_call.1} parent=1 // loop_body
      %s38 = ssub.s32 %s33, 1
      %s39 = ssub.s32 %s33, 2
      %s46 = sadd.s32 1, %s41
      %p47 = scmp.ge.s32.totalorder %s46, 2
      %s48 = scalar_select %p47, 0, %s46
      %s49 = sadd.s32 1, %s40
      %s50 = scalar_select %p47, %s49, %s40
      %p51 = scmp.ge.s32.totalorder %s50, 2
      %s52 = scalar_select %p51, 0, %s50
      %s53 = ssub.s32 %s40, %s52
      %s54 = ssub.s32 %s41, %s48
      %s55 = sor.u32 %s53, %s54
      %p56 = scmp.eq.s32.totalorder %s55, 0
      %s58 = sadd.s32 %s57, 1
      %s59 = scalar_select %p56, %s57, %s58
      %p62 = pneg %p56
      %p63 = scmp.eq.s32.totalorder %s33, 3
      %p64 = por %p62, %p63
      %p65 = scmp.ne.s32.totalorder %s57, %s60
      %p66 = scmp.eq.s32.totalorder %s33, 0
      %p67 = por %p65, %p66
      %p68 = scmp.ne.s32.totalorder %s57, %s60
      %p69 = scmp.eq.s32.totalorder %s38, 3
      %p70 = por %p68, %p69
      %p71 = scmp.ne.s32.totalorder %s60, %s61
      %p72 = scmp.eq.s32.totalorder %s38, 0
      %p73 = por %p71, %p72
      %p74 = scmp.ne.s32.totalorder %s60, %s61
      %p75 = scmp.eq.s32.totalorder %s39, 3
      %p76 = por %p74, %p75
      %p78 = scmp.ne.s32.totalorder %s61, %s77
      %p79 = scmp.eq.s32.totalorder %s39, 0
      %p80 = por %p78, %p79
      %s81 = ssub.s32 %s40, %s52
      %p82 = scmp.eq.s32.totalorder %s81, 0
      %s84 = sadd.s32 %s83, 1
      %s85 = scalar_select %p82, %s83, %s84
      %p88 = pneg %p82
      %p89 = scmp.eq.s32.totalorder %s33, 3
      %p90 = por %p88, %p89
      %p91 = scmp.ne.s32.totalorder %s83, %s86
      %p92 = scmp.eq.s32.totalorder %s33, 0
      %p93 = por %p91, %p92
      %p94 = scmp.ne.s32.totalorder %s83, %s86
      %p95 = scmp.eq.s32.totalorder %s38, 3
      %p96 = por %p94, %p95
      %p97 = scmp.ne.s32.totalorder %s86, %s87
      %p98 = scmp.eq.s32.totalorder %s38, 0
      %p99 = por %p97, %p98
      %p100 = scmp.ne.s32.totalorder %s86, %s87
      %p101 = scmp.eq.s32.totalorder %s39, 3
      %p102 = por %p100, %p101
      %p104 = scmp.ne.s32.totalorder %s87, %s103
      %p105 = scmp.eq.s32.totalorder %s39, 0
      %p106 = por %p104, %p105
      %s107 = ssub.s32 %s40, %s52
      %p108 = scmp.eq.s32.totalorder %s107, 0
      %s110 = sadd.s32 %s109, 1
      %s111 = scalar_select %p108, %s109, %s110
      %p114 = pneg %p108
      %p115 = scmp.eq.s32.totalorder %s33, 3
      %p116 = por %p114, %p115
      %p117 = scmp.ne.s32.totalorder %s109, %s112
      %p118 = scmp.eq.s32.totalorder %s33, 0
      %p119 = por %p117, %p118
      %p120 = scmp.ne.s32.totalorder %s109, %s112
      %p121 = scmp.eq.s32.totalorder %s38, 3
      %p122 = por %p120, %p121
      %p123 = scmp.ne.s32.totalorder %s112, %s113
      %p124 = scmp.eq.s32.totalorder %s38, 0
      %p125 = por %p123, %p124
      %p126 = scmp.ne.s32.totalorder %s112, %s113
      %p127 = scmp.eq.s32.totalorder %s39, 3
      %p128 = por %p126, %p127
      %p130 = scmp.ne.s32.totalorder %s113, %s129
      %p131 = scmp.eq.s32.totalorder %s39, 0
      %p132 = por %p130, %p131
      %s134 = sadd.s32 %s133, 1
      %p137 = scmp.eq.s32.totalorder %s33, 3
      %p138 = scmp.ne.s32.totalorder %s133, %s135
      %p139 = scmp.eq.s32.totalorder %s33, 0
      %p140 = por %p138, %p139
      %p141 = scmp.ne.s32.totalorder %s133, %s135
      %p142 = scmp.eq.s32.totalorder %s38, 3
      %p143 = por %p141, %p142
      %p144 = scmp.ne.s32.totalorder %s135, %s136
      %p145 = scmp.eq.s32.totalorder %s38, 0
      %p146 = por %p144, %p145
      %p147 = scmp.ne.s32.totalorder %s135, %s136
      %p148 = scmp.eq.s32.totalorder %s39, 3
      %p149 = por %p147, %p148
      %p151 = scmp.ne.s32.totalorder %s136, %s150
      %p152 = scmp.eq.s32.totalorder %s39, 0
      %p153 = por %p151, %p152
      %s155 = sadd.s32 %s154, 1
      %p158 = scmp.eq.s32.totalorder %s33, 3
      %p159 = scmp.ne.s32.totalorder %s154, %s156
      %p160 = scmp.eq.s32.totalorder %s33, 0
      %p161 = por %p159, %p160
      %p162 = scmp.ne.s32.totalorder %s154, %s156
      %p163 = scmp.eq.s32.totalorder %s38, 3
      %p164 = por %p162, %p163
      %p165 = scmp.ne.s32.totalorder %s156, %s157
      %p166 = scmp.eq.s32.totalorder %s38, 0
      %p167 = por %p165, %p166
      %p168 = scmp.ne.s32.totalorder %s156, %s157
      %p169 = scmp.eq.s32.totalorder %s39, 3
      %p170 = por %p168, %p169
      %p172 = scmp.ne.s32.totalorder %s157, %s171
      %p173 = scmp.eq.s32.totalorder %s39, 0
      %p174 = por %p172, %p173
      %s176 = sadd.s32 %s175, 1
      %p179 = scmp.eq.s32.totalorder %s33, 3
      %p180 = scmp.ne.s32.totalorder %s175, %s177
      %p181 = scmp.eq.s32.totalorder %s33, 0
      %p182 = por %p180, %p181
      %p183 = scmp.ne.s32.totalorder %s175, %s177
      %p184 = scmp.eq.s32.totalorder %s38, 3
      %p185 = por %p183, %p184
      %p186 = scmp.ne.s32.totalorder %s177, %s178
      %p187 = scmp.eq.s32.totalorder %s38, 0
      %p188 = por %p186, %p187
      %p189 = scmp.ne.s32.totalorder %s177, %s178
      %p190 = scmp.eq.s32.totalorder %s39, 3
      %p191 = por %p189, %p190
      %p193 = scmp.ne.s32.totalorder %s178, %s192
      %p194 = scmp.eq.s32.totalorder %s39, 0
      %p195 = por %p193, %p194
      %s197 = sadd.s32 %s196, 1
      %p200 = scmp.eq.s32.totalorder %s33, 3
      %p201 = scmp.ne.s32.totalorder %s196, %s198
      %p202 = scmp.eq.s32.totalorder %s33, 0
      %p203 = por %p201, %p202
      %p204 = scmp.ne.s32.totalorder %s196, %s198
      %p205 = scmp.eq.s32.totalorder %s38, 3
      %p206 = por %p204, %p205
      %p207 = scmp.ne.s32.totalorder %s198, %s199
      %p208 = scmp.eq.s32.totalorder %s38, 0
      %p209 = por %p207, %p208
      %p210 = scmp.ne.s32.totalorder %s198, %s199
      %p211 = scmp.eq.s32.totalorder %s39, 3
      %p212 = por %p210, %p211
      %p214 = scmp.ne.s32.totalorder %s199, %s213
      %p215 = scmp.eq.s32.totalorder %s39, 0
      %p216 = por %p214, %p215
      %s218 = sadd.s32 %s217, 1
      %p221 = scmp.eq.s32.totalorder %s33, 3
      %p222 = scmp.ne.s32.totalorder %s217, %s219
      %p223 = scmp.eq.s32.totalorder %s33, 0
      %p224 = por %p222, %p223
      %p225 = scmp.ne.s32.totalorder %s217, %s219
      %p226 = scmp.eq.s32.totalorder %s38, 3
      %p227 = por %p225, %p226
      %p228 = scmp.ne.s32.totalorder %s219, %s220
      %p229 = scmp.eq.s32.totalorder %s38, 0
      %p230 = por %p228, %p229
      %p231 = scmp.ne.s32.totalorder %s219, %s220
      %p232 = scmp.eq.s32.totalorder %s39, 3
      %p233 = por %p231, %p232
      %p235 = scmp.ne.s32.totalorder %s220, %s234
      %p236 = scmp.eq.s32.totalorder %s39, 0
      %p237 = por %p235, %p236
      %s239 = sadd.s32 %s238, 1
      %p242 = scmp.eq.s32.totalorder %s33, 3
      %p243 = scmp.ne.s32.totalorder %s238, %s240
      %p244 = scmp.eq.s32.totalorder %s33, 0
      %p245 = por %p243, %p244
      %p246 = scmp.ne.s32.totalorder %s238, %s240
      %p247 = scmp.eq.s32.totalorder %s38, 3
      %p248 = por %p246, %p247
      %p249 = scmp.ne.s32.totalorder %s240, %s241
      %p250 = scmp.eq.s32.totalorder %s38, 0
      %p251 = por %p249, %p250
      %p252 = scmp.ne.s32.totalorder %s240, %s241
      %p253 = scmp.eq.s32.totalorder %s39, 3
      %p254 = por %p252, %p253
      %p256 = scmp.ne.s32.totalorder %s241, %s255
      %p257 = scmp.eq.s32.totalorder %s39, 0
      %p258 = por %p256, %p257
      %s260 = sadd.s32 %s259, 1
      %p263 = scmp.eq.s32.totalorder %s33, 3
      %p264 = scmp.ne.s32.totalorder %s259, %s261
      %p265 = scmp.eq.s32.totalorder %s33, 0
      %p266 = por %p264, %p265
      %p267 = scmp.ne.s32.totalorder %s259, %s261
      %p268 = scmp.eq.s32.totalorder %s38, 3
      %p269 = por %p267, %p268
      %p270 = scmp.ne.s32.totalorder %s261, %s262
      %p271 = scmp.eq.s32.totalorder %s38, 0
      %p272 = por %p270, %p271
      %p273 = scmp.ne.s32.totalorder %s261, %s262
      %p274 = scmp.eq.s32.totalorder %s39, 3
      %p275 = por %p273, %p274
      %p277 = scmp.ne.s32.totalorder %s262, %s276
      %p278 = scmp.eq.s32.totalorder %s39, 0
      %p279 = por %p277, %p278
      %s281 = sadd.s32 %s280, 1
      %p284 = scmp.eq.s32.totalorder %s33, 3
      %p285 = scmp.ne.s32.totalorder %s280, %s282
      %p286 = scmp.eq.s32.totalorder %s33, 0
      %p287 = por %p285, %p286
      %p288 = scmp.ne.s32.totalorder %s280, %s282
      %p289 = scmp.eq.s32.totalorder %s38, 3
      %p290 = por %p288, %p289
      %p291 = scmp.ne.s32.totalorder %s282, %s283
      %p292 = scmp.eq.s32.totalorder %s38, 0
      %p293 = por %p291, %p292
      %p294 = scmp.ne.s32.totalorder %s282, %s283
      %p295 = scmp.eq.s32.totalorder %s39, 3
      %p296 = por %p294, %p295
      %p298 = scmp.ne.s32.totalorder %s283, %s297
      %p299 = scmp.eq.s32.totalorder %s39, 0
      %p300 = por %p298, %p299
      %s301 = ssub.s32 %s40, %s52
      %s302 = ssub.s32 %s41, %s48
      %s303 = sor.u32 %s301, %s302
      %p304 = scmp.eq.s32.totalorder %s303, 0
      %s306 = sadd.s32 %s305, 1
      %s307 = scalar_select %p304, %s305, %s306
      %p310 = pneg %p304
      %p311 = scmp.eq.s32.totalorder %s33, 3
      %p312 = por %p310, %p311
      %p313 = scmp.ne.s32.totalorder %s305, %s308
      %p314 = scmp.eq.s32.totalorder %s33, 0
      %p315 = por %p313, %p314
      %p316 = scmp.ne.s32.totalorder %s305, %s308
      %p317 = scmp.eq.s32.totalorder %s38, 3
      %p318 = por %p316, %p317
      %p319 = scmp.ne.s32.totalorder %s308, %s309
      %p320 = scmp.eq.s32.totalorder %s38, 0
      %p321 = por %p319, %p320
      %p322 = scmp.ne.s32.totalorder %s308, %s309
      %p323 = scmp.eq.s32.totalorder %s39, 3
      %p324 = por %p322, %p323
      %p326 = scmp.ne.s32.totalorder %s309, %s325
      %p327 = scmp.eq.s32.totalorder %s39, 0
      %p328 = por %p326, %p327
      %s329 = ssub.s32 %s40, %s52
      %s330 = ssub.s32 %s41, %s48
      %s331 = sor.u32 %s329, %s330
      %p332 = scmp.eq.s32.totalorder %s331, 0
      %s334 = sadd.s32 %s333, 1
      %s335 = scalar_select %p332, %s333, %s334
      %p338 = pneg %p332
      %p339 = scmp.eq.s32.totalorder %s33, 3
      %p340 = por %p338, %p339
      %p341 = scmp.ne.s32.totalorder %s333, %s336
      %p342 = scmp.eq.s32.totalorder %s33, 0
      %p343 = por %p341, %p342
      %p344 = scmp.ne.s32.totalorder %s333, %s336
      %p345 = scmp.eq.s32.totalorder %s38, 3
      %p346 = por %p344, %p345
      %p347 = scmp.ne.s32.totalorder %s336, %s337
      %p348 = scmp.eq.s32.totalorder %s38, 0
      %p349 = por %p347, %p348
      %p350 = scmp.ne.s32.totalorder %s336, %s337
      %p351 = scmp.eq.s32.totalorder %s39, 3
      %p352 = por %p350, %p351
      %p354 = scmp.ne.s32.totalorder %s337, %s353
      %p355 = scmp.eq.s32.totalorder %s39, 0
      %p356 = por %p354, %p355
      %p357 = scmp.le.s32.totalorder 1, %s33
      %p358 = scmp.lt.s32.totalorder %s33, 5
      %p359 = pnand %p357, %p358
      %p360 = pneg %p359
      // Predicated region
      $region9: #{tpu_custom_call.1} parent=5 // pred_check
        _
      $region10: #{tpu_custom_call.1} parent=5 // pred_check_branch
        %362 = sbr.rel (%p359) target = $region12
      $region11: #{tpu_custom_call.1} parent=5 // pred_region
        %s363 = ssub.s32 %s33, 1
        // Predicated region
        $region13: #{tpu_custom_call.1} parent=11 // pred_check
          %p364 = pneg %p146
        $region14: #{tpu_custom_call.1} parent=11 // pred_check_branch
          %366 = sbr.rel (%p364) target = $region16
        $region15: #{tpu_custom_call.1} parent=11 // pred_region
          %368 = vsyncadd [#allocation12], 0
          %s369 = sshll.u32 %s3, 4
          %s370 = int_to_ptr.hbm [resolvable:$true] %s369
          %s371 = sshll.u32 [#allocation11], 4
          %s372 = int_to_ptr.vmem [resolvable:$true] %s371
          %377 = dma.hbm_to_vmem [thread:$0]  %s370, 1024, %s372, [#allocation12], 64, 64, 4
        $region16: #{tpu_custom_call.1} parent=11 // pred_fallthru
          _
        // Predicated region
        $region17: #{tpu_custom_call.1} parent=11 // pred_check
          %p378 = pneg %p167
        $region18: #{tpu_custom_call.1} parent=11 // pred_check_branch
          %380 = sbr.rel (%p378) target = $region20
        $region19: #{tpu_custom_call.1} parent=11 // pred_region
          _
        $region20: #{tpu_custom_call.1} parent=11 // pred_fallthru
          _
        // Predicated region
        $region21: #{tpu_custom_call.1} parent=11 // pred_check
          %p381 = pneg %p188
        $region22: #{tpu_custom_call.1} parent=11 // pred_check_branch
          %383 = sbr.rel (%p381) target = $region24
        $region23: #{tpu_custom_call.1} parent=11 // pred_region
          %385 = vsyncadd [#allocation12], 0
          %s386 = sshll.u32 %s5, 4
          %s387 = int_to_ptr.hbm [resolvable:$true] %s386
          %s388 = sshll.u32 [#allocation13], 4
          %s389 = int_to_ptr.vmem [resolvable:$true] %s388
          %394 = dma.hbm_to_vmem [thread:$0]  %s387, 1024, %s389, [#allocation12], 64, 64, 4
        $region24: #{tpu_custom_call.1} parent=11 // pred_fallthru
          _
        // Predicated region
        $region25: #{tpu_custom_call.1} parent=11 // pred_check
          %p395 = pneg %p209
        $region26: #{tpu_custom_call.1} parent=11 // pred_check_branch
          %397 = sbr.rel (%p395) target = $region28
        $region27: #{tpu_custom_call.1} parent=11 // pred_region
          _
        $region28: #{tpu_custom_call.1} parent=11 // pred_fallthru
          _
        // Predicated region
        $region29: #{tpu_custom_call.1} parent=11 // pred_check
          %p398 = pneg %p230
        $region30: #{tpu_custom_call.1} parent=11 // pred_check_branch
          %400 = sbr.rel (%p398) target = $region32
        $region31: #{tpu_custom_call.1} parent=11 // pred_region
          %402 = vsyncadd [#allocation15], 0
          %s403 = sshll.u32 %s7, 4
          %s404 = int_to_ptr.hbm [resolvable:$true] %s403
          %s405 = sshll.u32 [#allocation14], 4
          %s406 = int_to_ptr.vmem [resolvable:$true] %s405
          %411 = dma.hbm_to_vmem [thread:$0]  %s404, 1024, %s406, [#allocation15], 64, 64, 4
        $region32: #{tpu_custom_call.1} parent=11 // pred_fallthru
          _
        // Predicated region
        $region33: #{tpu_custom_call.1} parent=11 // pred_check
          %p412 = pneg %p251
        $region34: #{tpu_custom_call.1} parent=11 // pred_check_branch
          %414 = sbr.rel (%p412) target = $region36
        $region35: #{tpu_custom_call.1} parent=11 // pred_region
          _
        $region36: #{tpu_custom_call.1} parent=11 // pred_fallthru
          _
        // Predicated region
        $region37: #{tpu_custom_call.1} parent=11 // pred_check
          %p415 = pneg %p272
        $region38: #{tpu_custom_call.1} parent=11 // pred_check_branch
          %417 = sbr.rel (%p415) target = $region40
        $region39: #{tpu_custom_call.1} parent=11 // pred_region
          %419 = vsyncadd [#allocation15], 0
          %s420 = sshll.u32 %s9, 4
          %s421 = int_to_ptr.hbm [resolvable:$true] %s420
          %s422 = sshll.u32 [#allocation16], 4
          %s423 = int_to_ptr.vmem [resolvable:$true] %s422
          %428 = dma.hbm_to_vmem [thread:$0]  %s421, 1024, %s423, [#allocation15], 64, 64, 4
        $region40: #{tpu_custom_call.1} parent=11 // pred_fallthru
          _
        // Predicated region
        $region41: #{tpu_custom_call.1} parent=11 // pred_check
          %p429 = pneg %p293
        $region42: #{tpu_custom_call.1} parent=11 // pred_check_branch
          %431 = sbr.rel (%p429) target = $region44
        $region43: #{tpu_custom_call.1} parent=11 // pred_region
          _
        $region44: #{tpu_custom_call.1} parent=11 // pred_fallthru
          _
      $region12: #{tpu_custom_call.1} parent=5 // pred_fallthru
        _
      %p432 = scmp.lt.s32.totalorder %s33, 4
      // Predicated region
      $region45: #{tpu_custom_call.1} parent=5 // pred_check
        %p433 = pneg %p432
      $region46: #{tpu_custom_call.1} parent=5 // pred_check_branch
        %435 = sbr.rel (%p433) target = $region48
      $region47: #{tpu_custom_call.1} parent=5 // pred_region
        // Predicated region
        $region49: #{tpu_custom_call.1} parent=47 // pred_check
          %p436 = pneg %p67
        $region50: #{tpu_custom_call.1} parent=47 // pred_check_branch
          %438 = sbr.rel (%p436) target = $region52
        $region51: #{tpu_custom_call.1} parent=47 // pred_region
          %s439 = sand.u32 %s57, 1
          %s440 = scalar_lea.sflag [#allocation6], %s439
          %s441 = sand.u32 %s57, 1
          %s442 = smul.addr %s441, 128
          %s443 = scalar_lea.vmem [#allocation5], %s442
          %s444 = smul.u32 32, %s41
          %446 = vsyncadd %s440, 0
          %s447 = smul.addr %s40, 64
          %s448 = sadd.s32 %s444, %s447
          %s449 = smul.addr %s448, 4
          %s450 = scalar_lea.hbm %s0, %s449
          %s451 = sshll.u32 %s450, 4
          %s452 = int_to_ptr.hbm [resolvable:$true] %s451
          %s453 = sshll.u32 %s443, 4
          %s454 = int_to_ptr.vmem [resolvable:$true] %s453
          %459 = dma.hbm_to_vmem [thread:$0]  %s452, 2048, %s454, %s440, 64, 64, 4
        $region52: #{tpu_custom_call.1} parent=47 // pred_fallthru
          _
        // Predicated region
        $region53: #{tpu_custom_call.1} parent=47 // pred_check
          %p460 = pneg %p93
        $region54: #{tpu_custom_call.1} parent=47 // pred_check_branch
          %462 = sbr.rel (%p460) target = $region56
        $region55: #{tpu_custom_call.1} parent=47 // pred_region
          %s463 = sand.u32 %s33, 1
          %s464 = scalar_lea.sflag [#allocation9], %s463
          %s465 = sand.u32 %s83, 1
          %s466 = smul.addr %s465, 64
          %s467 = scalar_lea.vmem [#allocation8], %s466
          %469 = vsyncadd %s464, 0
          %s470 = smul.addr %s40, 16
          %s471 = smul.addr %s470, 4
          %s472 = scalar_lea.hbm %s1, %s471
          %s473 = sshll.u32 %s472, 4
          %s474 = int_to_ptr.hbm [resolvable:$true] %s473
          %s475 = sshll.u32 %s467, 4
          %s476 = int_to_ptr.vmem [resolvable:$true] %s475
          %481 = dma.hbm_to_vmem [thread:$0]  %s474, 1024, %s476, %s464, 64, 64, 4
        $region56: #{tpu_custom_call.1} parent=47 // pred_fallthru
          _
        // Predicated region
        $region57: #{tpu_custom_call.1} parent=47 // pred_check
          %p482 = pneg %p119
        $region58: #{tpu_custom_call.1} parent=47 // pred_check_branch
          %484 = sbr.rel (%p482) target = $region60
        $region59: #{tpu_custom_call.1} parent=47 // pred_region
          %s485 = sand.u32 %s33, 1
          %s486 = scalar_lea.sflag [#allocation9], %s485
          %s487 = sand.u32 %s109, 1
          %s488 = smul.addr %s487, 64
          %s489 = scalar_lea.vmem [#allocation10], %s488
          %491 = vsyncadd %s486, 0
          %s492 = smul.addr %s40, 16
          %s493 = smul.addr %s492, 4
          %s494 = scalar_lea.hbm %s2, %s493
          %s495 = sshll.u32 %s494, 4
          %s496 = int_to_ptr.hbm [resolvable:$true] %s495
          %s497 = sshll.u32 %s489, 4
          %s498 = int_to_ptr.vmem [resolvable:$true] %s497
          %503 = dma.hbm_to_vmem [thread:$0]  %s496, 1024, %s498, %s486, 64, 64, 4
        $region60: #{tpu_custom_call.1} parent=47 // pred_fallthru
          _
      $region48: #{tpu_custom_call.1} parent=5 // pred_fallthru
        _
      %p504 = scmp.le.s32.totalorder 1, %s33
      %p505 = scmp.lt.s32.totalorder %s33, 5
      %p506 = pnand %p504, %p505
      %p507 = pneg %p506
      // Predicated region
      $region61: #{tpu_custom_call.1} parent=5 // pred_check
        _
      $region62: #{tpu_custom_call.1} parent=5 // pred_check_branch
        %509 = sbr.rel (%p506) target = $region64
      $region63: #{tpu_custom_call.1} parent=5 // pred_region
        %s510 = ssub.s32 %s33, 1
        %s511 = sand.u32 %s60, 1
        %s512 = scalar_lea.sflag [#allocation6], %s511
        %s513 = sand.u32 %s60, 1
        %s514 = smul.addr %s513, 128
        %s515 = scalar_lea.vmem [#allocation5], %s514
        // Predicated region
        $region65: #{tpu_custom_call.1} parent=63 // pred_check
          %p516 = pneg %p73
        $region66: #{tpu_custom_call.1} parent=63 // pred_check_branch
          %518 = sbr.rel (%p516) target = $region68
        $region67: #{tpu_custom_call.1} parent=63 // pred_region
          %520 = dma.done %s512, 2048
        $region68: #{tpu_custom_call.1} parent=63 // pred_fallthru
          _
        %s521 = sand.u32 %s38, 1
        %s522 = scalar_lea.sflag [#allocation9], %s521
        %s523 = sand.u32 %s86, 1
        %s524 = smul.addr %s523, 64
        %s525 = scalar_lea.vmem [#allocation8], %s524
        // Predicated region
        $region69: #{tpu_custom_call.1} parent=63 // pred_check
          %p526 = pneg %p99
        $region70: #{tpu_custom_call.1} parent=63 // pred_check_branch
          %528 = sbr.rel (%p526) target = $region72
        $region71: #{tpu_custom_call.1} parent=63 // pred_region
          %530 = dma.done %s522, 1024
        $region72: #{tpu_custom_call.1} parent=63 // pred_fallthru
          _
        %s531 = sand.u32 %s38, 1
        %s532 = scalar_lea.sflag [#allocation9], %s531
        %s533 = sand.u32 %s112, 1
        %s534 = smul.addr %s533, 64
        %s535 = scalar_lea.vmem [#allocation10], %s534
        // Predicated region
        $region73: #{tpu_custom_call.1} parent=63 // pred_check
          %p536 = pneg %p125
        $region74: #{tpu_custom_call.1} parent=63 // pred_check_branch
          %538 = sbr.rel (%p536) target = $region76
        $region75: #{tpu_custom_call.1} parent=63 // pred_region
          %540 = dma.done %s532, 1024
        $region76: #{tpu_custom_call.1} parent=63 // pred_fallthru
          _
        // Predicated region
        $region77: #{tpu_custom_call.1} parent=63 // pred_check
          %p541 = pneg %p146
        $region78: #{tpu_custom_call.1} parent=63 // pred_check_branch
          %543 = sbr.rel (%p541) target = $region80
        $region79: #{tpu_custom_call.1} parent=63 // pred_region
          %545 = dma.done [#allocation12], 1024
        $region80: #{tpu_custom_call.1} parent=63 // pred_fallthru
          _
        // Predicated region
        $region81: #{tpu_custom_call.1} parent=63 // pred_check
          %p546 = pneg %p188
        $region82: #{tpu_custom_call.1} parent=63 // pred_check_branch
          %548 = sbr.rel (%p546) target = $region84
        $region83: #{tpu_custom_call.1} parent=63 // pred_region
          %550 = dma.done [#allocation12], 1024
        $region84: #{tpu_custom_call.1} parent=63 // pred_fallthru
          _
        // Predicated region
        $region85: #{tpu_custom_call.1} parent=63 // pred_check
          %p551 = pneg %p230
        $region86: #{tpu_custom_call.1} parent=63 // pred_check_branch
          %553 = sbr.rel (%p551) target = $region88
        $region87: #{tpu_custom_call.1} parent=63 // pred_region
          %555 = dma.done [#allocation15], 1024
        $region88: #{tpu_custom_call.1} parent=63 // pred_fallthru
          _
        // Predicated region
        $region89: #{tpu_custom_call.1} parent=63 // pred_check
          %p556 = pneg %p272
        $region90: #{tpu_custom_call.1} parent=63 // pred_check_branch
          %558 = sbr.rel (%p556) target = $region92
        $region91: #{tpu_custom_call.1} parent=63 // pred_region
          %560 = dma.done [#allocation15], 1024
        $region92: #{tpu_custom_call.1} parent=63 // pred_fallthru
          _
        %s561 = sand.u32 %s60, 1
        %s562 = scalar_lea.sflag [#allocation6], %s561
        %s563 = sand.u32 %s60, 1
        %s564 = smul.addr %s563, 128
        %s565 = scalar_lea.vmem [#allocation5], %s564
        %p566 = pneg %p73
        %p567 = pneg %p70
        %s568 = sand.u32 %s38, 1
        %s569 = scalar_lea.sflag [#allocation9], %s568
        %s570 = sand.u32 %s86, 1
        %s571 = smul.addr %s570, 64
        %s572 = scalar_lea.vmem [#allocation8], %s571
        %p573 = pneg %p99
        %p574 = pneg %p96
        %s575 = sand.u32 %s38, 1
        %s576 = scalar_lea.sflag [#allocation9], %s575
        %s577 = sand.u32 %s112, 1
        %s578 = smul.addr %s577, 64
        %s579 = scalar_lea.vmem [#allocation10], %s578
        %p580 = pneg %p125
        %p581 = pneg %p122
        %p582 = pneg %p146
        %p583 = pneg %p143
        %p584 = pneg %p167
        %p585 = pneg %p164
        %p586 = pneg %p188
        %p587 = pneg %p185
        %p588 = pneg %p209
        %p589 = pneg %p206
        %p590 = pneg %p230
        %p591 = pneg %p227
        %p592 = pneg %p251
        %p593 = pneg %p248
        %p594 = pneg %p272
        %p595 = pneg %p269
        %p596 = pneg %p293
        %p597 = pneg %p290
        %p598 = pneg %p321
        %p599 = pneg %p318
        %s600 = sand.u32 %s308, 1
        %s601 = scalar_lea.sflag [#allocation7], %s600
        %s602 = sand.u32 %s308, 1
        %s603 = smul.addr %s602, 256
        %s604 = scalar_lea.vmem [#allocation17], %s603
        %p605 = pneg %p349
        %p606 = pneg %p346
        %s607 = sand.u32 %s336, 1
        %s608 = scalar_lea.sflag [#allocation19], %s607
        %s609 = sand.u32 %s336, 1
        %s610 = smul.addr %s609, 256
        %s611 = scalar_lea.vmem [#allocation18], %s610
        %s612 = smul.u32 32, %s43
        %s613 = smul.u32 32, %s43
        %s614 = smul.u32 32, %s43
        %p615 = scmp.eq.s32.totalorder %s43, 0
        // Predicated region
        $region93: #{tpu_custom_call.1} parent=63 // pred_check
          %p616 = pneg %p615
        $region94: #{tpu_custom_call.1} parent=63 // pred_check_branch
          %618 = sbr.rel (%p616) target = $region96
        $region95: #{tpu_custom_call.1} parent=63 // pred_region
          %v619 = vld [vmem:[%s525] sm:$0xf]
          %v620 = vld [vmem:[%s525 + $0x4] sm:$0xf]
          %v621 = vld [vmem:[%s525 + $0x8] sm:$0xf]
          %v622 = vld [vmem:[%s525 + $0xc] sm:$0xf]
          %v623 = vld [vmem:[%s525 + $0x10] sm:$0xf]
          %v624 = vld [vmem:[%s525 + $0x14] sm:$0xf]
          %v625 = vld [vmem:[%s525 + $0x18] sm:$0xf]
          %v626 = vld [vmem:[%s525 + $0x1c] sm:$0xf]
          %v627 = vld [vmem:[%s525 + $0x20] sm:$0xf]
          %v628 = vld [vmem:[%s525 + $0x24] sm:$0xf]
          %v629 = vld [vmem:[%s525 + $0x28] sm:$0xf]
          %v630 = vld [vmem:[%s525 + $0x2c] sm:$0xf]
          %v631 = vld [vmem:[%s525 + $0x30] sm:$0xf]
          %v632 = vld [vmem:[%s525 + $0x34] sm:$0xf]
          %v633 = vld [vmem:[%s525 + $0x38] sm:$0xf]
          %v634 = vld [vmem:[%s525 + $0x3c] sm:$0xf]
          %v635 = vld [vmem:[#allocation13] sm:$0xf]
          %v636 = vld [vmem:[#allocation13 + $0x4] sm:$0xf]
          %v637 = vld [vmem:[#allocation13 + $0x8] sm:$0xf]
          %v638 = vld [vmem:[#allocation13 + $0xc] sm:$0xf]
          %v639 = vld [vmem:[#allocation13 + $0x10] sm:$0xf]
          %v640 = vld [vmem:[#allocation13 + $0x14] sm:$0xf]
          %v641 = vld [vmem:[#allocation13 + $0x18] sm:$0xf]
          %v642 = vld [vmem:[#allocation13 + $0x1c] sm:$0xf]
          %v643 = vld [vmem:[#allocation13 + $0x20] sm:$0xf]
          %v644 = vld [vmem:[#allocation13 + $0x24] sm:$0xf]
          %v645 = vld [vmem:[#allocation13 + $0x28] sm:$0xf]
          %v646 = vld [vmem:[#allocation13 + $0x2c] sm:$0xf]
          %v647 = vld [vmem:[#allocation13 + $0x30] sm:$0xf]
          %v648 = vld [vmem:[#allocation13 + $0x34] sm:$0xf]
          %v649 = vld [vmem:[#allocation13 + $0x38] sm:$0xf]
          %v650 = vld [vmem:[#allocation13 + $0x3c] sm:$0xf]
          %v651 = vld [vmem:[%s6] sm:$0x1]
          %v653 = vperm.slane %v651, 0
          %v671 = vunpack.c.l.b16 %v619
          %v672 = vunpack.c.l.b16 %v620
          %v673 = vunpack.c.l.b16 %v621
          %v674 = vunpack.c.l.b16 %v622
          %v675 = vunpack.c.l.b16 %v623
          %v676 = vunpack.c.l.b16 %v624
          %v677 = vunpack.c.l.b16 %v625
          %v678 = vunpack.c.l.b16 %v626
          %v679 = vunpack.c.l.b16 %v627
          %v680 = vunpack.c.l.b16 %v628
          %v681 = vunpack.c.l.b16 %v629
          %v682 = vunpack.c.l.b16 %v630
          %v683 = vunpack.c.l.b16 %v631
          %v684 = vunpack.c.l.b16 %v632
          %v685 = vunpack.c.l.b16 %v633
          %v686 = vunpack.c.l.b16 %v634
          %v687 = vpack.c.b16 %v672, %v671
          %v688 = vpack.c.b16 %v674, %v673
          %v689 = vpack.c.b16 %v676, %v675
          %v690 = vpack.c.b16 %v678, %v677
          %v691 = vpack.c.b16 %v680, %v679
          %v692 = vpack.c.b16 %v682, %v681
          %v693 = vpack.c.b16 %v684, %v683
          %v694 = vpack.c.b16 %v686, %v685
          %v719 = vunpack.c.l.b16 %v635
          %v720 = vunpack.c.l.b16 %v636
          %v721 = vunpack.c.l.b16 %v637
          %v722 = vunpack.c.l.b16 %v638
          %v723 = vunpack.c.l.b16 %v639
          %v724 = vunpack.c.l.b16 %v640
          %v725 = vunpack.c.l.b16 %v641
          %v726 = vunpack.c.l.b16 %v642
          %v727 = vunpack.c.l.b16 %v643
          %v728 = vunpack.c.l.b16 %v644
          %v729 = vunpack.c.l.b16 %v645
          %v730 = vunpack.c.l.b16 %v646
          %v731 = vunpack.c.l.b16 %v647
          %v732 = vunpack.c.l.b16 %v648
          %v733 = vunpack.c.l.b16 %v649
          %v734 = vunpack.c.l.b16 %v650
          %v735 = vpack.c.b16 %v720, %v719
          %v736 = vpack.c.b16 %v722, %v721
          %v737 = vpack.c.b16 %v724, %v723
          %v738 = vpack.c.b16 %v726, %v725
          %v739 = vpack.c.b16 %v728, %v727
          %v740 = vpack.c.b16 %v730, %v729
          %v741 = vpack.c.b16 %v732, %v731
          %v742 = vpack.c.b16 %v734, %v733
          %751 = vmatpush.bf16.msra.mxu0 %v742
          %752 = vmatpush.bf16.msra.mxu0 %v741
          %753 = vmatpush.bf16.msra.mxu0 %v740
          %754 = vmatpush.bf16.msra.mxu0 %v739
          %755 = vmatpush.bf16.msra.mxu0 %v738
          %756 = vmatpush.bf16.msra.mxu0 %v737
          %757 = vmatpush.bf16.msra.mxu0 %v736
          %758 = vmatpush.bf16.msra.mxu0 %v735
          %759 = vmatmul.bf16.gmra.mxu0 %v687
          %v760 = vpop.f32.mrf.mxu0
          %v761 = vadd.f32 %v653, %v760
          %v762 = vpop.f32.mrf.mxu0
          %v763 = vadd.f32 %v653, %v762
          %764 = vmatmul.bf16.gmra.mxu0 %v688
          %v765 = vpop.f32.mrf.mxu0
          %v766 = vadd.f32 %v653, %v765
          %v767 = vpop.f32.mrf.mxu0
          %v768 = vadd.f32 %v653, %v767
          %769 = vmatmul.bf16.gmra.mxu0 %v689
          %v770 = vpop.f32.mrf.mxu0
          %v771 = vadd.f32 %v653, %v770
          %v772 = vpop.f32.mrf.mxu0
          %v773 = vadd.f32 %v653, %v772
          %774 = vmatmul.bf16.gmra.mxu0 %v690
          %v775 = vpop.f32.mrf.mxu0
          %v776 = vadd.f32 %v653, %v775
          %v777 = vpop.f32.mrf.mxu0
          %v778 = vadd.f32 %v653, %v777
          %779 = vmatmul.bf16.gmra.mxu0 %v691
          %v780 = vpop.f32.mrf.mxu0
          %v781 = vadd.f32 %v653, %v780
          %v782 = vpop.f32.mrf.mxu0
          %v783 = vadd.f32 %v653, %v782
          %784 = vmatmul.bf16.gmra.mxu0 %v692
          %v785 = vpop.f32.mrf.mxu0
          %v786 = vadd.f32 %v653, %v785
          %v787 = vpop.f32.mrf.mxu0
          %v788 = vadd.f32 %v653, %v787
          %789 = vmatmul.bf16.gmra.mxu0 %v693
          %v790 = vpop.f32.mrf.mxu0
          %v791 = vadd.f32 %v653, %v790
          %v792 = vpop.f32.mrf.mxu0
          %v793 = vadd.f32 %v653, %v792
          %794 = vmatmul.bf16.gmra.mxu0 %v694
          %v795 = vpop.f32.mrf.mxu0
          %v796 = vadd.f32 %v653, %v795
          %v797 = vpop.f32.mrf.mxu0
          %v798 = vadd.f32 %v653, %v797
          %799 = vdwg.mxu0
          %v800 = vpack.c.bf16 %v761, %v761
          %v801 = vpack.c.bf16 %v763, %v763
          %v802 = vpack.c.bf16 %v766, %v766
          %v803 = vpack.c.bf16 %v768, %v768
          %v804 = vpack.c.bf16 %v771, %v771
          %v805 = vpack.c.bf16 %v773, %v773
          %v806 = vpack.c.bf16 %v776, %v776
          %v807 = vpack.c.bf16 %v778, %v778
          %v808 = vpack.c.bf16 %v781, %v781
          %v809 = vpack.c.bf16 %v783, %v783
          %v810 = vpack.c.bf16 %v786, %v786
          %v811 = vpack.c.bf16 %v788, %v788
          %v812 = vpack.c.bf16 %v791, %v791
          %v813 = vpack.c.bf16 %v793, %v793
          %v814 = vpack.c.bf16 %v796, %v796
          %v815 = vpack.c.bf16 %v798, %v798
          %816 = vst [vmem:[#allocation2] sm:$0xf] %v800
          %817 = vst [vmem:[#allocation2 + $0x4] sm:$0xf] %v801
          %818 = vst [vmem:[#allocation2 + $0x8] sm:$0xf] %v802
          %819 = vst [vmem:[#allocation2 + $0xc] sm:$0xf] %v803
          %820 = vst [vmem:[#allocation2 + $0x10] sm:$0xf] %v804
          %821 = vst [vmem:[#allocation2 + $0x14] sm:$0xf] %v805
          %822 = vst [vmem:[#allocation2 + $0x18] sm:$0xf] %v806
          %823 = vst [vmem:[#allocation2 + $0x1c] sm:$0xf] %v807
          %824 = vst [vmem:[#allocation2 + $0x20] sm:$0xf] %v808
          %825 = vst [vmem:[#allocation2 + $0x24] sm:$0xf] %v809
          %826 = vst [vmem:[#allocation2 + $0x28] sm:$0xf] %v810
          %827 = vst [vmem:[#allocation2 + $0x2c] sm:$0xf] %v811
          %828 = vst [vmem:[#allocation2 + $0x30] sm:$0xf] %v812
          %829 = vst [vmem:[#allocation2 + $0x34] sm:$0xf] %v813
          %830 = vst [vmem:[#allocation2 + $0x38] sm:$0xf] %v814
          %831 = vst [vmem:[#allocation2 + $0x3c] sm:$0xf] %v815
          %v832 = vld [vmem:[%s535] sm:$0xf]
          %v833 = vld [vmem:[%s535 + $0x4] sm:$0xf]
          %v834 = vld [vmem:[%s535 + $0x8] sm:$0xf]
          %v835 = vld [vmem:[%s535 + $0xc] sm:$0xf]
          %v836 = vld [vmem:[%s535 + $0x10] sm:$0xf]
          %v837 = vld [vmem:[%s535 + $0x14] sm:$0xf]
          %v838 = vld [vmem:[%s535 + $0x18] sm:$0xf]
          %v839 = vld [vmem:[%s535 + $0x1c] sm:$0xf]
          %v840 = vld [vmem:[%s535 + $0x20] sm:$0xf]
          %v841 = vld [vmem:[%s535 + $0x24] sm:$0xf]
          %v842 = vld [vmem:[%s535 + $0x28] sm:$0xf]
          %v843 = vld [vmem:[%s535 + $0x2c] sm:$0xf]
          %v844 = vld [vmem:[%s535 + $0x30] sm:$0xf]
          %v845 = vld [vmem:[%s535 + $0x34] sm:$0xf]
          %v846 = vld [vmem:[%s535 + $0x38] sm:$0xf]
          %v847 = vld [vmem:[%s535 + $0x3c] sm:$0xf]
          %v848 = vld [vmem:[#allocation14] sm:$0xf]
          %v849 = vld [vmem:[#allocation14 + $0x4] sm:$0xf]
          %v850 = vld [vmem:[#allocation14 + $0x8] sm:$0xf]
          %v851 = vld [vmem:[#allocation14 + $0xc] sm:$0xf]
          %v852 = vld [vmem:[#allocation14 + $0x10] sm:$0xf]
          %v853 = vld [vmem:[#allocation14 + $0x14] sm:$0xf]
          %v854 = vld [vmem:[#allocation14 + $0x18] sm:$0xf]
          %v855 = vld [vmem:[#allocation14 + $0x1c] sm:$0xf]
          %v856 = vld [vmem:[#allocation14 + $0x20] sm:$0xf]
          %v857 = vld [vmem:[#allocation14 + $0x24] sm:$0xf]
          %v858 = vld [vmem:[#allocation14 + $0x28] sm:$0xf]
          %v859 = vld [vmem:[#allocation14 + $0x2c] sm:$0xf]
          %v860 = vld [vmem:[#allocation14 + $0x30] sm:$0xf]
          %v861 = vld [vmem:[#allocation14 + $0x34] sm:$0xf]
          %v862 = vld [vmem:[#allocation14 + $0x38] sm:$0xf]
          %v863 = vld [vmem:[#allocation14 + $0x3c] sm:$0xf]
          %v864 = vld [vmem:[%s8] sm:$0x1]
          %v866 = vperm.slane %v864, 0
          %v884 = vunpack.c.l.b16 %v832
          %v885 = vunpack.c.l.b16 %v833
          %v886 = vunpack.c.l.b16 %v834
          %v887 = vunpack.c.l.b16 %v835
          %v888 = vunpack.c.l.b16 %v836
          %v889 = vunpack.c.l.b16 %v837
          %v890 = vunpack.c.l.b16 %v838
          %v891 = vunpack.c.l.b16 %v839
          %v892 = vunpack.c.l.b16 %v840
          %v893 = vunpack.c.l.b16 %v841
          %v894 = vunpack.c.l.b16 %v842
          %v895 = vunpack.c.l.b16 %v843
          %v896 = vunpack.c.l.b16 %v844
          %v897 = vunpack.c.l.b16 %v845
          %v898 = vunpack.c.l.b16 %v846
          %v899 = vunpack.c.l.b16 %v847
          %v900 = vpack.c.b16 %v885, %v884
          %v901 = vpack.c.b16 %v887, %v886
          %v902 = vpack.c.b16 %v889, %v888
          %v903 = vpack.c.b16 %v891, %v890
          %v904 = vpack.c.b16 %v893, %v892
          %v905 = vpack.c.b16 %v895, %v894
          %v906 = vpack.c.b16 %v897, %v896
          %v907 = vpack.c.b16 %v899, %v898
          %v932 = vunpack.c.l.b16 %v848
          %v933 = vunpack.c.l.b16 %v849
          %v934 = vunpack.c.l.b16 %v850
          %v935 = vunpack.c.l.b16 %v851
          %v936 = vunpack.c.l.b16 %v852
          %v937 = vunpack.c.l.b16 %v853
          %v938 = vunpack.c.l.b16 %v854
          %v939 = vunpack.c.l.b16 %v855
          %v940 = vunpack.c.l.b16 %v856
          %v941 = vunpack.c.l.b16 %v857
          %v942 = vunpack.c.l.b16 %v858
          %v943 = vunpack.c.l.b16 %v859
          %v944 = vunpack.c.l.b16 %v860
          %v945 = vunpack.c.l.b16 %v861
          %v946 = vunpack.c.l.b16 %v862
          %v947 = vunpack.c.l.b16 %v863
          %v948 = vpack.c.b16 %v933, %v932
          %v949 = vpack.c.b16 %v935, %v934
          %v950 = vpack.c.b16 %v937, %v936
          %v951 = vpack.c.b16 %v939, %v938
          %v952 = vpack.c.b16 %v941, %v940
          %v953 = vpack.c.b16 %v943, %v942
          %v954 = vpack.c.b16 %v945, %v944
          %v955 = vpack.c.b16 %v947, %v946
          %964 = vmatpush.bf16.msra.mxu0 %v955
          %965 = vmatpush.bf16.msra.mxu0 %v954
          %966 = vmatpush.bf16.msra.mxu0 %v953
          %967 = vmatpush.bf16.msra.mxu0 %v952
          %968 = vmatpush.bf16.msra.mxu0 %v951
          %969 = vmatpush.bf16.msra.mxu0 %v950
          %970 = vmatpush.bf16.msra.mxu0 %v949
          %971 = vmatpush.bf16.msra.mxu0 %v948
          %972 = vmatmul.bf16.gmra.mxu0 %v900
          %v973 = vpop.f32.mrf.mxu0
          %v974 = vadd.f32 %v866, %v973
          %v975 = vpop.f32.mrf.mxu0
          %v976 = vadd.f32 %v866, %v975
          %977 = vmatmul.bf16.gmra.mxu0 %v901
          %v978 = vpop.f32.mrf.mxu0
          %v979 = vadd.f32 %v866, %v978
          %v980 = vpop.f32.mrf.mxu0
          %v981 = vadd.f32 %v866, %v980
          %982 = vmatmul.bf16.gmra.mxu0 %v902
          %v983 = vpop.f32.mrf.mxu0
          %v984 = vadd.f32 %v866, %v983
          %v985 = vpop.f32.mrf.mxu0
          %v986 = vadd.f32 %v866, %v985
          %987 = vmatmul.bf16.gmra.mxu0 %v903
          %v988 = vpop.f32.mrf.mxu0
          %v989 = vadd.f32 %v866, %v988
          %v990 = vpop.f32.mrf.mxu0
          %v991 = vadd.f32 %v866, %v990
          %992 = vmatmul.bf16.gmra.mxu0 %v904
          %v993 = vpop.f32.mrf.mxu0
          %v994 = vadd.f32 %v866, %v993
          %v995 = vpop.f32.mrf.mxu0
          %v996 = vadd.f32 %v866, %v995
          %997 = vmatmul.bf16.gmra.mxu0 %v905
          %v998 = vpop.f32.mrf.mxu0
          %v999 = vadd.f32 %v866, %v998
          %v1000 = vpop.f32.mrf.mxu0
          %v1001 = vadd.f32 %v866, %v1000
          %1002 = vmatmul.bf16.gmra.mxu0 %v906
          %v1003 = vpop.f32.mrf.mxu0
          %v1004 = vadd.f32 %v866, %v1003
          %v1005 = vpop.f32.mrf.mxu0
          %v1006 = vadd.f32 %v866, %v1005
          %1007 = vmatmul.bf16.gmra.mxu0 %v907
          %v1008 = vpop.f32.mrf.mxu0
          %v1009 = vadd.f32 %v866, %v1008
          %v1010 = vpop.f32.mrf.mxu0
          %v1011 = vadd.f32 %v866, %v1010
          %1012 = vdwg.mxu0
          %v1013 = vpack.c.bf16 %v974, %v974
          %v1014 = vpack.c.bf16 %v976, %v976
          %v1015 = vpack.c.bf16 %v979, %v979
          %v1016 = vpack.c.bf16 %v981, %v981
          %v1017 = vpack.c.bf16 %v984, %v984
          %v1018 = vpack.c.bf16 %v986, %v986
          %v1019 = vpack.c.bf16 %v989, %v989
          %v1020 = vpack.c.bf16 %v991, %v991
          %v1021 = vpack.c.bf16 %v994, %v994
          %v1022 = vpack.c.bf16 %v996, %v996
          %v1023 = vpack.c.bf16 %v999, %v999
          %v1024 = vpack.c.bf16 %v1001, %v1001
          %v1025 = vpack.c.bf16 %v1004, %v1004
          %v1026 = vpack.c.bf16 %v1006, %v1006
          %v1027 = vpack.c.bf16 %v1009, %v1009
          %v1028 = vpack.c.bf16 %v1011, %v1011
          %1029 = vst [vmem:[#allocation3] sm:$0xf] %v1013
          %1030 = vst [vmem:[#allocation3 + $0x4] sm:$0xf] %v1014
          %1031 = vst [vmem:[#allocation3 + $0x8] sm:$0xf] %v1015
          %1032 = vst [vmem:[#allocation3 + $0xc] sm:$0xf] %v1016
          %1033 = vst [vmem:[#allocation3 + $0x10] sm:$0xf] %v1017
          %1034 = vst [vmem:[#allocation3 + $0x14] sm:$0xf] %v1018
          %1035 = vst [vmem:[#allocation3 + $0x18] sm:$0xf] %v1019
          %1036 = vst [vmem:[#allocation3 + $0x1c] sm:$0xf] %v1020
          %1037 = vst [vmem:[#allocation3 + $0x20] sm:$0xf] %v1021
          %1038 = vst [vmem:[#allocation3 + $0x24] sm:$0xf] %v1022
          %1039 = vst [vmem:[#allocation3 + $0x28] sm:$0xf] %v1023
          %1040 = vst [vmem:[#allocation3 + $0x2c] sm:$0xf] %v1024
          %1041 = vst [vmem:[#allocation3 + $0x30] sm:$0xf] %v1025
          %1042 = vst [vmem:[#allocation3 + $0x34] sm:$0xf] %v1026
          %1043 = vst [vmem:[#allocation3 + $0x38] sm:$0xf] %v1027
          %1044 = vst [vmem:[#allocation3 + $0x3c] sm:$0xf] %v1028
        $region96: #{tpu_custom_call.1} parent=63 // pred_fallthru
          _
        %v1045 = vld [vmem:[%s515] sm:$0xf]
        %v1046 = vld [vmem:[%s515 + $0x4] sm:$0xf]
        %v1047 = vld [vmem:[%s515 + $0x8] sm:$0xf]
        %v1048 = vld [vmem:[%s515 + $0xc] sm:$0xf]
        %v1049 = vld [vmem:[%s515 + $0x10] sm:$0xf]
        %v1050 = vld [vmem:[%s515 + $0x14] sm:$0xf]
        %v1051 = vld [vmem:[%s515 + $0x18] sm:$0xf]
        %v1052 = vld [vmem:[%s515 + $0x1c] sm:$0xf]
        %v1053 = vld [vmem:[%s515 + $0x20] sm:$0xf]
        %v1054 = vld [vmem:[%s515 + $0x24] sm:$0xf]
        %v1055 = vld [vmem:[%s515 + $0x28] sm:$0xf]
        %v1056 = vld [vmem:[%s515 + $0x2c] sm:$0xf]
        %v1057 = vld [vmem:[%s515 + $0x30] sm:$0xf]
        %v1058 = vld [vmem:[%s515 + $0x34] sm:$0xf]
        %v1059 = vld [vmem:[%s515 + $0x38] sm:$0xf]
        %v1060 = vld [vmem:[%s515 + $0x3c] sm:$0xf]
        %v1061 = vld [vmem:[%s515 + $0x40] sm:$0xf]
        %v1062 = vld [vmem:[%s515 + $0x44] sm:$0xf]
        %v1063 = vld [vmem:[%s515 + $0x48] sm:$0xf]
        %v1064 = vld [vmem:[%s515 + $0x4c] sm:$0xf]
        %v1065 = vld [vmem:[%s515 + $0x50] sm:$0xf]
        %v1066 = vld [vmem:[%s515 + $0x54] sm:$0xf]
        %v1067 = vld [vmem:[%s515 + $0x58] sm:$0xf]
        %v1068 = vld [vmem:[%s515 + $0x5c] sm:$0xf]
        %v1069 = vld [vmem:[%s515 + $0x60] sm:$0xf]
        %v1070 = vld [vmem:[%s515 + $0x64] sm:$0xf]
        %v1071 = vld [vmem:[%s515 + $0x68] sm:$0xf]
        %v1072 = vld [vmem:[%s515 + $0x6c] sm:$0xf]
        %v1073 = vld [vmem:[%s515 + $0x70] sm:$0xf]
        %v1074 = vld [vmem:[%s515 + $0x74] sm:$0xf]
        %v1075 = vld [vmem:[%s515 + $0x78] sm:$0xf]
        %v1076 = vld [vmem:[%s515 + $0x7c] sm:$0xf]
        %v1077 = vld [vmem:[#allocation11] sm:$0xf]
        %v1078 = vld [vmem:[#allocation11 + $0x4] sm:$0xf]
        %v1079 = vld [vmem:[#allocation11 + $0x8] sm:$0xf]
        %v1080 = vld [vmem:[#allocation11 + $0xc] sm:$0xf]
        %v1081 = vld [vmem:[#allocation11 + $0x10] sm:$0xf]
        %v1082 = vld [vmem:[#allocation11 + $0x14] sm:$0xf]
        %v1083 = vld [vmem:[#allocation11 + $0x18] sm:$0xf]
        %v1084 = vld [vmem:[#allocation11 + $0x1c] sm:$0xf]
        %v1085 = vld [vmem:[#allocation11 + $0x20] sm:$0xf]
        %v1086 = vld [vmem:[#allocation11 + $0x24] sm:$0xf]
        %v1087 = vld [vmem:[#allocation11 + $0x28] sm:$0xf]
        %v1088 = vld [vmem:[#allocation11 + $0x2c] sm:$0xf]
        %v1089 = vld [vmem:[#allocation11 + $0x30] sm:$0xf]
        %v1090 = vld [vmem:[#allocation11 + $0x34] sm:$0xf]
        %v1091 = vld [vmem:[#allocation11 + $0x38] sm:$0xf]
        %v1092 = vld [vmem:[#allocation11 + $0x3c] sm:$0xf]
        %v1093 = vld [vmem:[%s4] sm:$0x1]
        %v1095 = vperm.slane %v1093, 0
        %v1129 = vunpack.c.l.b16 %v1045
        %v1130 = vunpack.c.l.b16 %v1046
        %v1131 = vunpack.c.l.b16 %v1047
        %v1132 = vunpack.c.l.b16 %v1048
        %v1133 = vunpack.c.l.b16 %v1049
        %v1134 = vunpack.c.l.b16 %v1050
        %v1135 = vunpack.c.l.b16 %v1051
        %v1136 = vunpack.c.l.b16 %v1052
        %v1137 = vunpack.c.l.b16 %v1053
        %v1138 = vunpack.c.l.b16 %v1054
        %v1139 = vunpack.c.l.b16 %v1055
        %v1140 = vunpack.c.l.b16 %v1056
        %v1141 = vunpack.c.l.b16 %v1057
        %v1142 = vunpack.c.l.b16 %v1058
        %v1143 = vunpack.c.l.b16 %v1059
        %v1144 = vunpack.c.l.b16 %v1060
        %v1145 = vunpack.c.l.b16 %v1061
        %v1146 = vunpack.c.l.b16 %v1062
        %v1147 = vunpack.c.l.b16 %v1063
        %v1148 = vunpack.c.l.b16 %v1064
        %v1149 = vunpack.c.l.b16 %v1065
        %v1150 = vunpack.c.l.b16 %v1066
        %v1151 = vunpack.c.l.b16 %v1067
        %v1152 = vunpack.c.l.b16 %v1068
        %v1153 = vunpack.c.l.b16 %v1069
        %v1154 = vunpack.c.l.b16 %v1070
        %v1155 = vunpack.c.l.b16 %v1071
        %v1156 = vunpack.c.l.b16 %v1072
        %v1157 = vunpack.c.l.b16 %v1073
        %v1158 = vunpack.c.l.b16 %v1074
        %v1159 = vunpack.c.l.b16 %v1075
        %v1160 = vunpack.c.l.b16 %v1076
        %v1161 = vpack.c.b16 %v1130, %v1129
        %v1162 = vpack.c.b16 %v1132, %v1131
        %v1163 = vpack.c.b16 %v1134, %v1133
        %v1164 = vpack.c.b16 %v1136, %v1135
        %v1165 = vpack.c.b16 %v1138, %v1137
        %v1166 = vpack.c.b16 %v1140, %v1139
        %v1167 = vpack.c.b16 %v1142, %v1141
        %v1168 = vpack.c.b16 %v1144, %v1143
        %v1169 = vpack.c.b16 %v1146, %v1145
        %v1170 = vpack.c.b16 %v1148, %v1147
        %v1171 = vpack.c.b16 %v1150, %v1149
        %v1172 = vpack.c.b16 %v1152, %v1151
        %v1173 = vpack.c.b16 %v1154, %v1153
        %v1174 = vpack.c.b16 %v1156, %v1155
        %v1175 = vpack.c.b16 %v1158, %v1157
        %v1176 = vpack.c.b16 %v1160, %v1159
        %v1209 = vunpack.c.l.b16 %v1077
        %v1210 = vunpack.c.l.b16 %v1078
        %v1211 = vunpack.c.l.b16 %v1079
        %v1212 = vunpack.c.l.b16 %v1080
        %v1213 = vunpack.c.l.b16 %v1081
        %v1214 = vunpack.c.l.b16 %v1082
        %v1215 = vunpack.c.l.b16 %v1083
        %v1216 = vunpack.c.l.b16 %v1084
        %v1217 = vunpack.c.l.b16 %v1085
        %v1218 = vunpack.c.l.b16 %v1086
        %v1219 = vunpack.c.l.b16 %v1087
        %v1220 = vunpack.c.l.b16 %v1088
        %v1221 = vunpack.c.l.b16 %v1089
        %v1222 = vunpack.c.l.b16 %v1090
        %v1223 = vunpack.c.l.b16 %v1091
        %v1224 = vunpack.c.l.b16 %v1092
        %v1225 = vpack.c.b16 %v1210, %v1209
        %v1226 = vpack.c.b16 %v1212, %v1211
        %v1227 = vpack.c.b16 %v1214, %v1213
        %v1228 = vpack.c.b16 %v1216, %v1215
        %v1229 = vpack.c.b16 %v1218, %v1217
        %v1230 = vpack.c.b16 %v1220, %v1219
        %v1231 = vpack.c.b16 %v1222, %v1221
        %v1232 = vpack.c.b16 %v1224, %v1223
        %1241 = vmatpush.bf16.msra.mxu0 %v1232
        %1242 = vmatpush.bf16.msra.mxu0 %v1231
        %1243 = vmatpush.bf16.msra.mxu0 %v1230
        %1244 = vmatpush.bf16.msra.mxu0 %v1229
        %1245 = vmatpush.bf16.msra.mxu0 %v1228
        %1246 = vmatpush.bf16.msra.mxu0 %v1227
        %1247 = vmatpush.bf16.msra.mxu0 %v1226
        %1248 = vmatpush.bf16.msra.mxu0 %v1225
        %1249 = vmatmul.bf16.gmra.mxu0 %v1161
        %v1250 = vpop.f32.mrf.mxu0
        %v1251 = vadd.f32 %v1095, %v1250
        %v1252 = vpop.f32.mrf.mxu0
        %v1253 = vadd.f32 %v1095, %v1252
        %1254 = vmatmul.bf16.gmra.mxu0 %v1162
        %v1255 = vpop.f32.mrf.mxu0
        %v1256 = vadd.f32 %v1095, %v1255
        %v1257 = vpop.f32.mrf.mxu0
        %v1258 = vadd.f32 %v1095, %v1257
        %1259 = vmatmul.bf16.gmra.mxu0 %v1163
        %v1260 = vpop.f32.mrf.mxu0
        %v1261 = vadd.f32 %v1095, %v1260
        %v1262 = vpop.f32.mrf.mxu0
        %v1263 = vadd.f32 %v1095, %v1262
        %1264 = vmatmul.bf16.gmra.mxu0 %v1164
        %v1265 = vpop.f32.mrf.mxu0
        %v1266 = vadd.f32 %v1095, %v1265
        %v1267 = vpop.f32.mrf.mxu0
        %v1268 = vadd.f32 %v1095, %v1267
        %1269 = vmatmul.bf16.gmra.mxu0 %v1165
        %v1270 = vpop.f32.mrf.mxu0
        %v1271 = vadd.f32 %v1095, %v1270
        %v1272 = vpop.f32.mrf.mxu0
        %v1273 = vadd.f32 %v1095, %v1272
        %1274 = vmatmul.bf16.gmra.mxu0 %v1166
        %v1275 = vpop.f32.mrf.mxu0
        %v1276 = vadd.f32 %v1095, %v1275
        %v1277 = vpop.f32.mrf.mxu0
        %v1278 = vadd.f32 %v1095, %v1277
        %1279 = vmatmul.bf16.gmra.mxu0 %v1167
        %v1280 = vpop.f32.mrf.mxu0
        %v1281 = vadd.f32 %v1095, %v1280
        %v1282 = vpop.f32.mrf.mxu0
        %v1283 = vadd.f32 %v1095, %v1282
        %1284 = vmatmul.bf16.gmra.mxu0 %v1168
        %v1285 = vpop.f32.mrf.mxu0
        %v1286 = vadd.f32 %v1095, %v1285
        %v1287 = vpop.f32.mrf.mxu0
        %v1288 = vadd.f32 %v1095, %v1287
        %1289 = vmatmul.bf16.gmra.mxu0 %v1169
        %v1290 = vpop.f32.mrf.mxu0
        %v1291 = vadd.f32 %v1095, %v1290
        %v1292 = vpop.f32.mrf.mxu0
        %v1293 = vadd.f32 %v1095, %v1292
        %1294 = vmatmul.bf16.gmra.mxu0 %v1170
        %v1295 = vpop.f32.mrf.mxu0
        %v1296 = vadd.f32 %v1095, %v1295
        %v1297 = vpop.f32.mrf.mxu0
        %v1298 = vadd.f32 %v1095, %v1297
        %1299 = vmatmul.bf16.gmra.mxu0 %v1171
        %v1300 = vpop.f32.mrf.mxu0
        %v1301 = vadd.f32 %v1095, %v1300
        %v1302 = vpop.f32.mrf.mxu0
        %v1303 = vadd.f32 %v1095, %v1302
        %1304 = vmatmul.bf16.gmra.mxu0 %v1172
        %v1305 = vpop.f32.mrf.mxu0
        %v1306 = vadd.f32 %v1095, %v1305
        %v1307 = vpop.f32.mrf.mxu0
        %v1308 = vadd.f32 %v1095, %v1307
        %1309 = vmatmul.bf16.gmra.mxu0 %v1173
        %v1310 = vpop.f32.mrf.mxu0
        %v1311 = vadd.f32 %v1095, %v1310
        %v1312 = vpop.f32.mrf.mxu0
        %v1313 = vadd.f32 %v1095, %v1312
        %1314 = vmatmul.bf16.gmra.mxu0 %v1174
        %v1315 = vpop.f32.mrf.mxu0
        %v1316 = vadd.f32 %v1095, %v1315
        %v1317 = vpop.f32.mrf.mxu0
        %v1318 = vadd.f32 %v1095, %v1317
        %1319 = vmatmul.bf16.gmra.mxu0 %v1175
        %v1320 = vpop.f32.mrf.mxu0
        %v1321 = vadd.f32 %v1095, %v1320
        %v1322 = vpop.f32.mrf.mxu0
        %v1323 = vadd.f32 %v1095, %v1322
        %1324 = vmatmul.bf16.gmra.mxu0 %v1176
        %v1325 = vpop.f32.mrf.mxu0
        %v1326 = vadd.f32 %v1095, %v1325
        %v1327 = vpop.f32.mrf.mxu0
        %v1328 = vadd.f32 %v1095, %v1327
        %1329 = vdwg.mxu0
        %v1330 = vpack.c.bf16 %v1251, %v1251
        %v1331 = vpack.c.bf16 %v1253, %v1253
        %v1332 = vpack.c.bf16 %v1256, %v1256
        %v1333 = vpack.c.bf16 %v1258, %v1258
        %v1334 = vpack.c.bf16 %v1261, %v1261
        %v1335 = vpack.c.bf16 %v1263, %v1263
        %v1336 = vpack.c.bf16 %v1266, %v1266
        %v1337 = vpack.c.bf16 %v1268, %v1268
        %v1338 = vpack.c.bf16 %v1271, %v1271
        %v1339 = vpack.c.bf16 %v1273, %v1273
        %v1340 = vpack.c.bf16 %v1276, %v1276
        %v1341 = vpack.c.bf16 %v1278, %v1278
        %v1342 = vpack.c.bf16 %v1281, %v1281
        %v1343 = vpack.c.bf16 %v1283, %v1283
        %v1344 = vpack.c.bf16 %v1286, %v1286
        %v1345 = vpack.c.bf16 %v1288, %v1288
        %v1346 = vpack.c.bf16 %v1291, %v1291
        %v1347 = vpack.c.bf16 %v1293, %v1293
        %v1348 = vpack.c.bf16 %v1296, %v1296
        %v1349 = vpack.c.bf16 %v1298, %v1298
        %v1350 = vpack.c.bf16 %v1301, %v1301
        %v1351 = vpack.c.bf16 %v1303, %v1303
        %v1352 = vpack.c.bf16 %v1306, %v1306
        %v1353 = vpack.c.bf16 %v1308, %v1308
        %v1354 = vpack.c.bf16 %v1311, %v1311
        %v1355 = vpack.c.bf16 %v1313, %v1313
        %v1356 = vpack.c.bf16 %v1316, %v1316
        %v1357 = vpack.c.bf16 %v1318, %v1318
        %v1358 = vpack.c.bf16 %v1321, %v1321
        %v1359 = vpack.c.bf16 %v1323, %v1323
        %v1360 = vpack.c.bf16 %v1326, %v1326
        %v1361 = vpack.c.bf16 %v1328, %v1328
        %v1362 = vld [vmem:[#allocation2] sm:$0xf]
        %v1363 = vld [vmem:[#allocation2 + $0x4] sm:$0xf]
        %v1364 = vld [vmem:[#allocation2 + $0x8] sm:$0xf]
        %v1365 = vld [vmem:[#allocation2 + $0xc] sm:$0xf]
        %v1366 = vld [vmem:[#allocation2 + $0x10] sm:$0xf]
        %v1367 = vld [vmem:[#allocation2 + $0x14] sm:$0xf]
        %v1368 = vld [vmem:[#allocation2 + $0x18] sm:$0xf]
        %v1369 = vld [vmem:[#allocation2 + $0x1c] sm:$0xf]
        %v1370 = vld [vmem:[#allocation2 + $0x20] sm:$0xf]
        %v1371 = vld [vmem:[#allocation2 + $0x24] sm:$0xf]
        %v1372 = vld [vmem:[#allocation2 + $0x28] sm:$0xf]
        %v1373 = vld [vmem:[#allocation2 + $0x2c] sm:$0xf]
        %v1374 = vld [vmem:[#allocation2 + $0x30] sm:$0xf]
        %v1375 = vld [vmem:[#allocation2 + $0x34] sm:$0xf]
        %v1376 = vld [vmem:[#allocation2 + $0x38] sm:$0xf]
        %v1377 = vld [vmem:[#allocation2 + $0x3c] sm:$0xf]
        %v1378 = vld [vmem:[#allocation3] sm:$0xf]
        %v1379 = vld [vmem:[#allocation3 + $0x4] sm:$0xf]
        %v1380 = vld [vmem:[#allocation3 + $0x8] sm:$0xf]
        %v1381 = vld [vmem:[#allocation3 + $0xc] sm:$0xf]
        %v1382 = vld [vmem:[#allocation3 + $0x10] sm:$0xf]
        %v1383 = vld [vmem:[#allocation3 + $0x14] sm:$0xf]
        %v1384 = vld [vmem:[#allocation3 + $0x18] sm:$0xf]
        %v1385 = vld [vmem:[#allocation3 + $0x1c] sm:$0xf]
        %v1386 = vld [vmem:[#allocation3 + $0x20] sm:$0xf]
        %v1387 = vld [vmem:[#allocation3 + $0x24] sm:$0xf]
        %v1388 = vld [vmem:[#allocation3 + $0x28] sm:$0xf]
        %v1389 = vld [vmem:[#allocation3 + $0x2c] sm:$0xf]
        %v1390 = vld [vmem:[#allocation3 + $0x30] sm:$0xf]
        %v1391 = vld [vmem:[#allocation3 + $0x34] sm:$0xf]
        %v1392 = vld [vmem:[#allocation3 + $0x38] sm:$0xf]
        %v1393 = vld [vmem:[#allocation3 + $0x3c] sm:$0xf]
        %v1426 = vunpack.c.l.b16 %v1330
        %v1427 = vunpack.c.l.b16 %v1331
        %v1428 = vunpack.c.l.b16 %v1332
        %v1429 = vunpack.c.l.b16 %v1333
        %v1430 = vunpack.c.l.b16 %v1334
        %v1431 = vunpack.c.l.b16 %v1335
        %v1432 = vunpack.c.l.b16 %v1336
        %v1433 = vunpack.c.l.b16 %v1337
        %v1434 = vunpack.c.l.b16 %v1338
        %v1435 = vunpack.c.l.b16 %v1339
        %v1436 = vunpack.c.l.b16 %v1340
        %v1437 = vunpack.c.l.b16 %v1341
        %v1438 = vunpack.c.l.b16 %v1342
        %v1439 = vunpack.c.l.b16 %v1343
        %v1440 = vunpack.c.l.b16 %v1344
        %v1441 = vunpack.c.l.b16 %v1345
        %v1442 = vunpack.c.l.b16 %v1346
        %v1443 = vunpack.c.l.b16 %v1347
        %v1444 = vunpack.c.l.b16 %v1348
        %v1445 = vunpack.c.l.b16 %v1349
        %v1446 = vunpack.c.l.b16 %v1350
        %v1447 = vunpack.c.l.b16 %v1351
        %v1448 = vunpack.c.l.b16 %v1352
        %v1449 = vunpack.c.l.b16 %v1353
        %v1450 = vunpack.c.l.b16 %v1354
        %v1451 = vunpack.c.l.b16 %v1355
        %v1452 = vunpack.c.l.b16 %v1356
        %v1453 = vunpack.c.l.b16 %v1357
        %v1454 = vunpack.c.l.b16 %v1358
        %v1455 = vunpack.c.l.b16 %v1359
        %v1456 = vunpack.c.l.b16 %v1360
        %v1457 = vunpack.c.l.b16 %v1361
        %v1458 = vpack.c.b16 %v1427, %v1426
        %v1459 = vpack.c.b16 %v1429, %v1428
        %v1460 = vpack.c.b16 %v1431, %v1430
        %v1461 = vpack.c.b16 %v1433, %v1432
        %v1462 = vpack.c.b16 %v1435, %v1434
        %v1463 = vpack.c.b16 %v1437, %v1436
        %v1464 = vpack.c.b16 %v1439, %v1438
        %v1465 = vpack.c.b16 %v1441, %v1440
        %v1466 = vpack.c.b16 %v1443, %v1442
        %v1467 = vpack.c.b16 %v1445, %v1444
        %v1468 = vpack.c.b16 %v1447, %v1446
        %v1469 = vpack.c.b16 %v1449, %v1448
        %v1470 = vpack.c.b16 %v1451, %v1450
        %v1471 = vpack.c.b16 %v1453, %v1452
        %v1472 = vpack.c.b16 %v1455, %v1454
        %v1473 = vpack.c.b16 %v1457, %v1456
        %v1490 = vunpack.c.l.b16 %v1362
        %v1491 = vunpack.c.l.b16 %v1363
        %v1492 = vunpack.c.l.b16 %v1364
        %v1493 = vunpack.c.l.b16 %v1365
        %v1494 = vunpack.c.l.b16 %v1366
        %v1495 = vunpack.c.l.b16 %v1367
        %v1496 = vunpack.c.l.b16 %v1368
        %v1497 = vunpack.c.l.b16 %v1369
        %v1498 = vunpack.c.l.b16 %v1370
        %v1499 = vunpack.c.l.b16 %v1371
        %v1500 = vunpack.c.l.b16 %v1372
        %v1501 = vunpack.c.l.b16 %v1373
        %v1502 = vunpack.c.l.b16 %v1374
        %v1503 = vunpack.c.l.b16 %v1375
        %v1504 = vunpack.c.l.b16 %v1376
        %v1505 = vunpack.c.l.b16 %v1377
        %v1506 = vpack.c.b16 %v1491, %v1490
        %v1507 = vpack.c.b16 %v1493, %v1492
        %v1508 = vpack.c.b16 %v1495, %v1494
        %v1509 = vpack.c.b16 %v1497, %v1496
        %v1510 = vpack.c.b16 %v1499, %v1498
        %v1511 = vpack.c.b16 %v1501, %v1500
        %v1512 = vpack.c.b16 %v1503, %v1502
        %v1513 = vpack.c.b16 %v1505, %v1504
        %vm1514 = vcmask 261120
        %v1516 = vsel %vm1514, %v1458, 0
        %v1519 = vsel %vm1514, %v1459, 0
        %v1522 = vsel %vm1514, %v1460, 0
        %v1525 = vsel %vm1514, %v1461, 0
        %v1528 = vsel %vm1514, %v1462, 0
        %v1531 = vsel %vm1514, %v1463, 0
        %v1534 = vsel %vm1514, %v1464, 0
        %v1537 = vsel %vm1514, %v1465, 0
        %v1540 = vsel %vm1514, %v1466, 0
        %v1543 = vsel %vm1514, %v1467, 0
        %v1546 = vsel %vm1514, %v1468, 0
        %v1549 = vsel %vm1514, %v1469, 0
        %v1552 = vsel %vm1514, %v1470, 0
        %v1555 = vsel %vm1514, %v1471, 0
        %v1558 = vsel %vm1514, %v1472, 0
        %v1561 = vsel %vm1514, %v1473, 0
        %v1564 = vsel %vm1514, %v1506, 0
        %v1567 = vsel %vm1514, %v1507, 0
        %v1570 = vsel %vm1514, %v1508, 0
        %v1573 = vsel %vm1514, %v1509, 0
        %v1576 = vsel %vm1514, %v1510, 0
        %v1579 = vsel %vm1514, %v1511, 0
        %v1582 = vsel %vm1514, %v1512, 0
        %v1585 = vsel %vm1514, %v1513, 0
        %1587 = vmatpush.bf16.xpose.msra.mxu0 %v1585
        %1588 = vmatpush.bf16.xpose.msra.mxu0 %v1582
        %1589 = vmatpush.bf16.xpose.msra.mxu0 %v1579
        %1590 = vmatpush.bf16.xpose.msra.mxu0 %v1576
        %1591 = vmatpush.bf16.xpose.msra.mxu0 %v1573
        %1592 = vmatpush.bf16.xpose.msra.mxu0 %v1570
        %1593 = vmatpush.bf16.xpose.msra.mxu0 %v1567
        %1594 = vmatpush.bf16.xpose.msra.mxu0 %v1564
        %1595 = vmatmul.bf16.gmra.mxu0 %v1516
        %v1596 = vpop.f32.mrf.mxu0
        %v1597 = vadd.f32 0.0, %v1596
        %v1598 = vpop.f32.mrf.mxu0
        %v1599 = vadd.f32 0.0, %v1598
        %1600 = vmatmul.bf16.gmra.mxu0 %v1519
        %v1601 = vpop.f32.mrf.mxu0
        %v1602 = vadd.f32 0.0, %v1601
        %v1603 = vpop.f32.mrf.mxu0
        %v1604 = vadd.f32 0.0, %v1603
        %1605 = vmatmul.bf16.gmra.mxu0 %v1522
        %v1606 = vpop.f32.mrf.mxu0
        %v1607 = vadd.f32 0.0, %v1606
        %v1608 = vpop.f32.mrf.mxu0
        %v1609 = vadd.f32 0.0, %v1608
        %1610 = vmatmul.bf16.gmra.mxu0 %v1525
        %v1611 = vpop.f32.mrf.mxu0
        %v1612 = vadd.f32 0.0, %v1611
        %v1613 = vpop.f32.mrf.mxu0
        %v1614 = vadd.f32 0.0, %v1613
        %1615 = vmatmul.bf16.gmra.mxu0 %v1528
        %v1616 = vpop.f32.mrf.mxu0
        %v1617 = vadd.f32 0.0, %v1616
        %v1618 = vpop.f32.mrf.mxu0
        %v1619 = vadd.f32 0.0, %v1618
        %1620 = vmatmul.bf16.gmra.mxu0 %v1531
        %v1621 = vpop.f32.mrf.mxu0
        %v1622 = vadd.f32 0.0, %v1621
        %v1623 = vpop.f32.mrf.mxu0
        %v1624 = vadd.f32 0.0, %v1623
        %1625 = vmatmul.bf16.gmra.mxu0 %v1534
        %v1626 = vpop.f32.mrf.mxu0
        %v1627 = vadd.f32 0.0, %v1626
        %v1628 = vpop.f32.mrf.mxu0
        %v1629 = vadd.f32 0.0, %v1628
        %1630 = vmatmul.bf16.gmra.mxu0 %v1537
        %v1631 = vpop.f32.mrf.mxu0
        %v1632 = vadd.f32 0.0, %v1631
        %v1633 = vpop.f32.mrf.mxu0
        %v1634 = vadd.f32 0.0, %v1633
        %1635 = vmatmul.bf16.gmra.mxu0 %v1540
        %v1636 = vpop.f32.mrf.mxu0
        %v1637 = vadd.f32 0.0, %v1636
        %v1638 = vpop.f32.mrf.mxu0
        %v1639 = vadd.f32 0.0, %v1638
        %1640 = vmatmul.bf16.gmra.mxu0 %v1543
        %v1641 = vpop.f32.mrf.mxu0
        %v1642 = vadd.f32 0.0, %v1641
        %v1643 = vpop.f32.mrf.mxu0
        %v1644 = vadd.f32 0.0, %v1643
        %1645 = vmatmul.bf16.gmra.mxu0 %v1546
        %v1646 = vpop.f32.mrf.mxu0
        %v1647 = vadd.f32 0.0, %v1646
        %v1648 = vpop.f32.mrf.mxu0
        %v1649 = vadd.f32 0.0, %v1648
        %1650 = vmatmul.bf16.gmra.mxu0 %v1549
        %v1651 = vpop.f32.mrf.mxu0
        %v1652 = vadd.f32 0.0, %v1651
        %v1653 = vpop.f32.mrf.mxu0
        %v1654 = vadd.f32 0.0, %v1653
        %1655 = vmatmul.bf16.gmra.mxu0 %v1552
        %v1656 = vpop.f32.mrf.mxu0
        %v1657 = vadd.f32 0.0, %v1656
        %v1658 = vpop.f32.mrf.mxu0
        %v1659 = vadd.f32 0.0, %v1658
        %1660 = vmatmul.bf16.gmra.mxu0 %v1555
        %v1661 = vpop.f32.mrf.mxu0
        %v1662 = vadd.f32 0.0, %v1661
        %v1663 = vpop.f32.mrf.mxu0
        %v1664 = vadd.f32 0.0, %v1663
        %1665 = vmatmul.bf16.gmra.mxu0 %v1558
        %v1666 = vpop.f32.mrf.mxu0
        %v1667 = vadd.f32 0.0, %v1666
        %v1668 = vpop.f32.mrf.mxu0
        %v1669 = vadd.f32 0.0, %v1668
        %1670 = vmatmul.bf16.gmra.mxu0 %v1561
        %v1671 = vpop.f32.mrf.mxu0
        %v1672 = vadd.f32 0.0, %v1671
        %v1673 = vpop.f32.mrf.mxu0
        %v1674 = vadd.f32 0.0, %v1673
        %1675 = vdwg.mxu0
        %1676 = vmax.xlane.f32.xlu0 %v1597
        %v1677 = vpop.xlane.xlu0 %1676
        %1678 = vmax.xlane.f32.xlu0 %v1599
        %v1679 = vpop.xlane.xlu0 %1678
        %1680 = vmax.xlane.f32.xlu0 %v1602
        %v1681 = vpop.xlane.xlu0 %1680
        %1682 = vmax.xlane.f32.xlu0 %v1604
        %v1683 = vpop.xlane.xlu0 %1682
        %1684 = vmax.xlane.f32.xlu0 %v1607
        %v1685 = vpop.xlane.xlu0 %1684
        %1686 = vmax.xlane.f32.xlu0 %v1609
        %v1687 = vpop.xlane.xlu0 %1686
        %1688 = vmax.xlane.f32.xlu0 %v1612
        %v1689 = vpop.xlane.xlu0 %1688
        %1690 = vmax.xlane.f32.xlu0 %v1614
        %v1691 = vpop.xlane.xlu0 %1690
        %1692 = vmax.xlane.f32.xlu0 %v1617
        %v1693 = vpop.xlane.xlu0 %1692
        %1694 = vmax.xlane.f32.xlu0 %v1619
        %v1695 = vpop.xlane.xlu0 %1694
        %1696 = vmax.xlane.f32.xlu0 %v1622
        %v1697 = vpop.xlane.xlu0 %1696
        %1698 = vmax.xlane.f32.xlu0 %v1624
        %v1699 = vpop.xlane.xlu0 %1698
        %1700 = vmax.xlane.f32.xlu0 %v1627
        %v1701 = vpop.xlane.xlu0 %1700
        %1702 = vmax.xlane.f32.xlu0 %v1629
        %v1703 = vpop.xlane.xlu0 %1702
        %1704 = vmax.xlane.f32.xlu0 %v1632
        %v1705 = vpop.xlane.xlu0 %1704
        %1706 = vmax.xlane.f32.xlu0 %v1634
        %v1707 = vpop.xlane.xlu0 %1706
        %1708 = vmax.xlane.f32.xlu0 %v1637
        %v1709 = vpop.xlane.xlu0 %1708
        %1710 = vmax.xlane.f32.xlu0 %v1639
        %v1711 = vpop.xlane.xlu0 %1710
        %1712 = vmax.xlane.f32.xlu0 %v1642
        %v1713 = vpop.xlane.xlu0 %1712
        %1714 = vmax.xlane.f32.xlu0 %v1644
        %v1715 = vpop.xlane.xlu0 %1714
        %1716 = vmax.xlane.f32.xlu0 %v1647
        %v1717 = vpop.xlane.xlu0 %1716
        %1718 = vmax.xlane.f32.xlu0 %v1649
        %v1719 = vpop.xlane.xlu0 %1718
        %1720 = vmax.xlane.f32.xlu0 %v1652
        %v1721 = vpop.xlane.xlu0 %1720
        %1722 = vmax.xlane.f32.xlu0 %v1654
        %v1723 = vpop.xlane.xlu0 %1722
        %1724 = vmax.xlane.f32.xlu0 %v1657
        %v1725 = vpop.xlane.xlu0 %1724
        %1726 = vmax.xlane.f32.xlu0 %v1659
        %v1727 = vpop.xlane.xlu0 %1726
        %1728 = vmax.xlane.f32.xlu0 %v1662
        %v1729 = vpop.xlane.xlu0 %1728
        %1730 = vmax.xlane.f32.xlu0 %v1664
        %v1731 = vpop.xlane.xlu0 %1730
        %1732 = vmax.xlane.f32.xlu0 %v1667
        %v1733 = vpop.xlane.xlu0 %1732
        %1734 = vmax.xlane.f32.xlu0 %v1669
        %v1735 = vpop.xlane.xlu0 %1734
        %1736 = vmax.xlane.f32.xlu0 %v1672
        %v1737 = vpop.xlane.xlu0 %1736
        %1738 = vmax.xlane.f32.xlu0 %v1674
        %v1739 = vpop.xlane.xlu0 %1738
        %v1740 = vsub.f32 %v1597, %v1677
        %v1741 = vsub.f32 %v1599, %v1679
        %v1742 = vsub.f32 %v1602, %v1681
        %v1743 = vsub.f32 %v1604, %v1683
        %v1744 = vsub.f32 %v1607, %v1685
        %v1745 = vsub.f32 %v1609, %v1687
        %v1746 = vsub.f32 %v1612, %v1689
        %v1747 = vsub.f32 %v1614, %v1691
        %v1748 = vsub.f32 %v1617, %v1693
        %v1749 = vsub.f32 %v1619, %v1695
        %v1750 = vsub.f32 %v1622, %v1697
        %v1751 = vsub.f32 %v1624, %v1699
        %v1752 = vsub.f32 %v1627, %v1701
        %v1753 = vsub.f32 %v1629, %v1703
        %v1754 = vsub.f32 %v1632, %v1705
        %v1755 = vsub.f32 %v1634, %v1707
        %v1756 = vsub.f32 %v1637, %v1709
        %v1757 = vsub.f32 %v1639, %v1711
        %v1758 = vsub.f32 %v1642, %v1713
        %v1759 = vsub.f32 %v1644, %v1715
        %v1760 = vsub.f32 %v1647, %v1717
        %v1761 = vsub.f32 %v1649, %v1719
        %v1762 = vsub.f32 %v1652, %v1721
        %v1763 = vsub.f32 %v1654, %v1723
        %v1764 = vsub.f32 %v1657, %v1725
        %v1765 = vsub.f32 %v1659, %v1727
        %v1766 = vsub.f32 %v1662, %v1729
        %v1767 = vsub.f32 %v1664, %v1731
        %v1768 = vsub.f32 %v1667, %v1733
        %v1769 = vsub.f32 %v1669, %v1735
        %v1770 = vsub.f32 %v1672, %v1737
        %v1771 = vsub.f32 %v1674, %v1739
        %v1772 = vmul.f32 %v1740, 1.442695
        %v1773 = vpow.pop %v1772
        %v1774 = vmul.f32 %v1741, 1.442695
        %v1775 = vpow.pop %v1774
        %v1776 = vmul.f32 %v1742, 1.442695
        %v1777 = vpow.pop %v1776
        %v1778 = vmul.f32 %v1743, 1.442695
        %v1779 = vpow.pop %v1778
        %v1780 = vmul.f32 %v1744, 1.442695
        %v1781 = vpow.pop %v1780
        %v1782 = vmul.f32 %v1745, 1.442695
        %v1783 = vpow.pop %v1782
        %v1784 = vmul.f32 %v1746, 1.442695
        %v1785 = vpow.pop %v1784
        %v1786 = vmul.f32 %v1747, 1.442695
        %v1787 = vpow.pop %v1786
        %v1788 = vmul.f32 %v1748, 1.442695
        %v1789 = vpow.pop %v1788
        %v1790 = vmul.f32 %v1749, 1.442695
        %v1791 = vpow.pop %v1790
        %v1792 = vmul.f32 %v1750, 1.442695
        %v1793 = vpow.pop %v1792
        %v1794 = vmul.f32 %v1751, 1.442695
        %v1795 = vpow.pop %v1794
        %v1796 = vmul.f32 %v1752, 1.442695
        %v1797 = vpow.pop %v1796
        %v1798 = vmul.f32 %v1753, 1.442695
        %v1799 = vpow.pop %v1798
        %v1800 = vmul.f32 %v1754, 1.442695
        %v1801 = vpow.pop %v1800
        %v1802 = vmul.f32 %v1755, 1.442695
        %v1803 = vpow.pop %v1802
        %v1804 = vmul.f32 %v1756, 1.442695
        %v1805 = vpow.pop %v1804
        %v1806 = vmul.f32 %v1757, 1.442695
        %v1807 = vpow.pop %v1806
        %v1808 = vmul.f32 %v1758, 1.442695
        %v1809 = vpow.pop %v1808
        %v1810 = vmul.f32 %v1759, 1.442695
        %v1811 = vpow.pop %v1810
        %v1812 = vmul.f32 %v1760, 1.442695
        %v1813 = vpow.pop %v1812
        %v1814 = vmul.f32 %v1761, 1.442695
        %v1815 = vpow.pop %v1814
        %v1816 = vmul.f32 %v1762, 1.442695
        %v1817 = vpow.pop %v1816
        %v1818 = vmul.f32 %v1763, 1.442695
        %v1819 = vpow.pop %v1818
        %v1820 = vmul.f32 %v1764, 1.442695
        %v1821 = vpow.pop %v1820
        %v1822 = vmul.f32 %v1765, 1.442695
        %v1823 = vpow.pop %v1822
        %v1824 = vmul.f32 %v1766, 1.442695
        %v1825 = vpow.pop %v1824
        %v1826 = vmul.f32 %v1767, 1.442695
        %v1827 = vpow.pop %v1826
        %v1828 = vmul.f32 %v1768, 1.442695
        %v1829 = vpow.pop %v1828
        %v1830 = vmul.f32 %v1769, 1.442695
        %v1831 = vpow.pop %v1830
        %v1832 = vmul.f32 %v1770, 1.442695
        %v1833 = vpow.pop %v1832
        %v1834 = vmul.f32 %v1771, 1.442695
        %v1835 = vpow.pop %v1834
        %1836 = vadd.xlane.f32.xlu0 %v1773
        %v1837 = vpop.xlane.xlu0 %1836
        %1838 = vadd.xlane.f32.xlu0 %v1775
        %v1839 = vpop.xlane.xlu0 %1838
        %1840 = vadd.xlane.f32.xlu0 %v1777
        %v1841 = vpop.xlane.xlu0 %1840
        %1842 = vadd.xlane.f32.xlu0 %v1779
        %v1843 = vpop.xlane.xlu0 %1842
        %1844 = vadd.xlane.f32.xlu0 %v1781
        %v1845 = vpop.xlane.xlu0 %1844
        %1846 = vadd.xlane.f32.xlu0 %v1783
        %v1847 = vpop.xlane.xlu0 %1846
        %1848 = vadd.xlane.f32.xlu0 %v1785
        %v1849 = vpop.xlane.xlu0 %1848
        %1850 = vadd.xlane.f32.xlu0 %v1787
        %v1851 = vpop.xlane.xlu0 %1850
        %1852 = vadd.xlane.f32.xlu0 %v1789
        %v1853 = vpop.xlane.xlu0 %1852
        %1854 = vadd.xlane.f32.xlu0 %v1791
        %v1855 = vpop.xlane.xlu0 %1854
        %1856 = vadd.xlane.f32.xlu0 %v1793
        %v1857 = vpop.xlane.xlu0 %1856
        %1858 = vadd.xlane.f32.xlu0 %v1795
        %v1859 = vpop.xlane.xlu0 %1858
        %1860 = vadd.xlane.f32.xlu0 %v1797
        %v1861 = vpop.xlane.xlu0 %1860
        %1862 = vadd.xlane.f32.xlu0 %v1799
        %v1863 = vpop.xlane.xlu0 %1862
        %1864 = vadd.xlane.f32.xlu0 %v1801
        %v1865 = vpop.xlane.xlu0 %1864
        %1866 = vadd.xlane.f32.xlu0 %v1803
        %v1867 = vpop.xlane.xlu0 %1866
        %1868 = vadd.xlane.f32.xlu0 %v1805
        %v1869 = vpop.xlane.xlu0 %1868
        %1870 = vadd.xlane.f32.xlu0 %v1807
        %v1871 = vpop.xlane.xlu0 %1870
        %1872 = vadd.xlane.f32.xlu0 %v1809
        %v1873 = vpop.xlane.xlu0 %1872
        %1874 = vadd.xlane.f32.xlu0 %v1811
        %v1875 = vpop.xlane.xlu0 %1874
        %1876 = vadd.xlane.f32.xlu0 %v1813
        %v1877 = vpop.xlane.xlu0 %1876
        %1878 = vadd.xlane.f32.xlu0 %v1815
        %v1879 = vpop.xlane.xlu0 %1878
        %1880 = vadd.xlane.f32.xlu0 %v1817
        %v1881 = vpop.xlane.xlu0 %1880
        %1882 = vadd.xlane.f32.xlu0 %v1819
        %v1883 = vpop.xlane.xlu0 %1882
        %1884 = vadd.xlane.f32.xlu0 %v1821
        %v1885 = vpop.xlane.xlu0 %1884
        %1886 = vadd.xlane.f32.xlu0 %v1823
        %v1887 = vpop.xlane.xlu0 %1886
        %1888 = vadd.xlane.f32.xlu0 %v1825
        %v1889 = vpop.xlane.xlu0 %1888
        %1890 = vadd.xlane.f32.xlu0 %v1827
        %v1891 = vpop.xlane.xlu0 %1890
        %1892 = vadd.xlane.f32.xlu0 %v1829
        %v1893 = vpop.xlane.xlu0 %1892
        %1894 = vadd.xlane.f32.xlu0 %v1831
        %v1895 = vpop.xlane.xlu0 %1894
        %1896 = vadd.xlane.f32.xlu0 %v1833
        %v1897 = vpop.xlane.xlu0 %1896
        %1898 = vadd.xlane.f32.xlu0 %v1835
        %v1899 = vpop.xlane.xlu0 %1898
        %v1900 = vrcp.pop %v1837
        %v1901 = vrcp.pop %v1839
        %v1902 = vrcp.pop %v1841
        %v1903 = vrcp.pop %v1843
        %v1904 = vrcp.pop %v1845
        %v1905 = vrcp.pop %v1847
        %v1906 = vrcp.pop %v1849
        %v1907 = vrcp.pop %v1851
        %v1908 = vrcp.pop %v1853
        %v1909 = vrcp.pop %v1855
        %v1910 = vrcp.pop %v1857
        %v1911 = vrcp.pop %v1859
        %v1912 = vrcp.pop %v1861
        %v1913 = vrcp.pop %v1863
        %v1914 = vrcp.pop %v1865
        %v1915 = vrcp.pop %v1867
        %v1916 = vrcp.pop %v1869
        %v1917 = vrcp.pop %v1871
        %v1918 = vrcp.pop %v1873
        %v1919 = vrcp.pop %v1875
        %v1920 = vrcp.pop %v1877
        %v1921 = vrcp.pop %v1879
        %v1922 = vrcp.pop %v1881
        %v1923 = vrcp.pop %v1883
        %v1924 = vrcp.pop %v1885
        %v1925 = vrcp.pop %v1887
        %v1926 = vrcp.pop %v1889
        %v1927 = vrcp.pop %v1891
        %v1928 = vrcp.pop %v1893
        %v1929 = vrcp.pop %v1895
        %v1930 = vrcp.pop %v1897
        %v1931 = vrcp.pop %v1899
        %v1932 = vmul.f32 %v1773, %v1900
        %v1933 = vmul.f32 %v1775, %v1901
        %v1934 = vmul.f32 %v1777, %v1902
        %v1935 = vmul.f32 %v1779, %v1903
        %v1936 = vmul.f32 %v1781, %v1904
        %v1937 = vmul.f32 %v1783, %v1905
        %v1938 = vmul.f32 %v1785, %v1906
        %v1939 = vmul.f32 %v1787, %v1907
        %v1940 = vmul.f32 %v1789, %v1908
        %v1941 = vmul.f32 %v1791, %v1909
        %v1942 = vmul.f32 %v1793, %v1910
        %v1943 = vmul.f32 %v1795, %v1911
        %v1944 = vmul.f32 %v1797, %v1912
        %v1945 = vmul.f32 %v1799, %v1913
        %v1946 = vmul.f32 %v1801, %v1914
        %v1947 = vmul.f32 %v1803, %v1915
        %v1948 = vmul.f32 %v1805, %v1916
        %v1949 = vmul.f32 %v1807, %v1917
        %v1950 = vmul.f32 %v1809, %v1918
        %v1951 = vmul.f32 %v1811, %v1919
        %v1952 = vmul.f32 %v1813, %v1920
        %v1953 = vmul.f32 %v1815, %v1921
        %v1954 = vmul.f32 %v1817, %v1922
        %v1955 = vmul.f32 %v1819, %v1923
        %v1956 = vmul.f32 %v1821, %v1924
        %v1957 = vmul.f32 %v1823, %v1925
        %v1958 = vmul.f32 %v1825, %v1926
        %v1959 = vmul.f32 %v1827, %v1927
        %v1960 = vmul.f32 %v1829, %v1928
        %v1961 = vmul.f32 %v1831, %v1929
        %v1962 = vmul.f32 %v1833, %v1930
        %v1963 = vmul.f32 %v1835, %v1931
        %v1964 = vpack.c.bf16 %v1933, %v1932
        %v1965 = vpack.c.bf16 %v1935, %v1934
        %v1966 = vpack.c.bf16 %v1937, %v1936
        %v1967 = vpack.c.bf16 %v1939, %v1938
        %v1968 = vpack.c.bf16 %v1941, %v1940
        %v1969 = vpack.c.bf16 %v1943, %v1942
        %v1970 = vpack.c.bf16 %v1945, %v1944
        %v1971 = vpack.c.bf16 %v1947, %v1946
        %v1972 = vpack.c.bf16 %v1949, %v1948
        %v1973 = vpack.c.bf16 %v1951, %v1950
        %v1974 = vpack.c.bf16 %v1953, %v1952
        %v1975 = vpack.c.bf16 %v1955, %v1954
        %v1976 = vpack.c.bf16 %v1957, %v1956
        %v1977 = vpack.c.bf16 %v1959, %v1958
        %v1978 = vpack.c.bf16 %v1961, %v1960
        %v1979 = vpack.c.bf16 %v1963, %v1962
        %v1996 = vunpack.c.l.b16 %v1378
        %v1997 = vunpack.c.l.b16 %v1379
        %v1998 = vunpack.c.l.b16 %v1380
        %v1999 = vunpack.c.l.b16 %v1381
        %v2000 = vunpack.c.l.b16 %v1382
        %v2001 = vunpack.c.l.b16 %v1383
        %v2002 = vunpack.c.l.b16 %v1384
        %v2003 = vunpack.c.l.b16 %v1385
        %v2004 = vunpack.c.l.b16 %v1386
        %v2005 = vunpack.c.l.b16 %v1387
        %v2006 = vunpack.c.l.b16 %v1388
        %v2007 = vunpack.c.l.b16 %v1389
        %v2008 = vunpack.c.l.b16 %v1390
        %v2009 = vunpack.c.l.b16 %v1391
        %v2010 = vunpack.c.l.b16 %v1392
        %v2011 = vunpack.c.l.b16 %v1393
        %v2012 = vpack.c.b16 %v1997, %v1996
        %v2013 = vpack.c.b16 %v1999, %v1998
        %v2014 = vpack.c.b16 %v2001, %v2000
        %v2015 = vpack.c.b16 %v2003, %v2002
        %v2016 = vpack.c.b16 %v2005, %v2004
        %v2017 = vpack.c.b16 %v2007, %v2006
        %v2018 = vpack.c.b16 %v2009, %v2008
        %v2019 = vpack.c.b16 %v2011, %v2010
        %2028 = vmatpush.bf16.msra.mxu0 %v2019
        %2029 = vmatpush.bf16.msra.mxu0 %v2018
        %2030 = vmatpush.bf16.msra.mxu0 %v2017
        %2031 = vmatpush.bf16.msra.mxu0 %v2016
        %2032 = vmatpush.bf16.msra.mxu0 %v2015
        %2033 = vmatpush.bf16.msra.mxu0 %v2014
        %2034 = vmatpush.bf16.msra.mxu0 %v2013
        %2035 = vmatpush.bf16.msra.mxu0 %v2012
        %2036 = vmatmul.bf16.gmra.mxu0 %v1964
        %v2037 = vpop.f32.mrf.mxu0
        %v2038 = vadd.f32 0.0, %v2037
        %v2039 = vpop.f32.mrf.mxu0
        %v2040 = vadd.f32 0.0, %v2039
        %2041 = vmatmul.bf16.gmra.mxu0 %v1965
        %v2042 = vpop.f32.mrf.mxu0
        %v2043 = vadd.f32 0.0, %v2042
        %v2044 = vpop.f32.mrf.mxu0
        %v2045 = vadd.f32 0.0, %v2044
        %2046 = vmatmul.bf16.gmra.mxu0 %v1966
        %v2047 = vpop.f32.mrf.mxu0
        %v2048 = vadd.f32 0.0, %v2047
        %v2049 = vpop.f32.mrf.mxu0
        %v2050 = vadd.f32 0.0, %v2049
        %2051 = vmatmul.bf16.gmra.mxu0 %v1967
        %v2052 = vpop.f32.mrf.mxu0
        %v2053 = vadd.f32 0.0, %v2052
        %v2054 = vpop.f32.mrf.mxu0
        %v2055 = vadd.f32 0.0, %v2054
        %2056 = vmatmul.bf16.gmra.mxu0 %v1968
        %v2057 = vpop.f32.mrf.mxu0
        %v2058 = vadd.f32 0.0, %v2057
        %v2059 = vpop.f32.mrf.mxu0
        %v2060 = vadd.f32 0.0, %v2059
        %2061 = vmatmul.bf16.gmra.mxu0 %v1969
        %v2062 = vpop.f32.mrf.mxu0
        %v2063 = vadd.f32 0.0, %v2062
        %v2064 = vpop.f32.mrf.mxu0
        %v2065 = vadd.f32 0.0, %v2064
        %2066 = vmatmul.bf16.gmra.mxu0 %v1970
        %v2067 = vpop.f32.mrf.mxu0
        %v2068 = vadd.f32 0.0, %v2067
        %v2069 = vpop.f32.mrf.mxu0
        %v2070 = vadd.f32 0.0, %v2069
        %2071 = vmatmul.bf16.gmra.mxu0 %v1971
        %v2072 = vpop.f32.mrf.mxu0
        %v2073 = vadd.f32 0.0, %v2072
        %v2074 = vpop.f32.mrf.mxu0
        %v2075 = vadd.f32 0.0, %v2074
        %2076 = vmatmul.bf16.gmra.mxu0 %v1972
        %v2077 = vpop.f32.mrf.mxu0
        %v2078 = vadd.f32 0.0, %v2077
        %v2079 = vpop.f32.mrf.mxu0
        %v2080 = vadd.f32 0.0, %v2079
        %2081 = vmatmul.bf16.gmra.mxu0 %v1973
        %v2082 = vpop.f32.mrf.mxu0
        %v2083 = vadd.f32 0.0, %v2082
        %v2084 = vpop.f32.mrf.mxu0
        %v2085 = vadd.f32 0.0, %v2084
        %2086 = vmatmul.bf16.gmra.mxu0 %v1974
        %v2087 = vpop.f32.mrf.mxu0
        %v2088 = vadd.f32 0.0, %v2087
        %v2089 = vpop.f32.mrf.mxu0
        %v2090 = vadd.f32 0.0, %v2089
        %2091 = vmatmul.bf16.gmra.mxu0 %v1975
        %v2092 = vpop.f32.mrf.mxu0
        %v2093 = vadd.f32 0.0, %v2092
        %v2094 = vpop.f32.mrf.mxu0
        %v2095 = vadd.f32 0.0, %v2094
        %2096 = vmatmul.bf16.gmra.mxu0 %v1976
        %v2097 = vpop.f32.mrf.mxu0
        %v2098 = vadd.f32 0.0, %v2097
        %v2099 = vpop.f32.mrf.mxu0
        %v2100 = vadd.f32 0.0, %v2099
        %2101 = vmatmul.bf16.gmra.mxu0 %v1977
        %v2102 = vpop.f32.mrf.mxu0
        %v2103 = vadd.f32 0.0, %v2102
        %v2104 = vpop.f32.mrf.mxu0
        %v2105 = vadd.f32 0.0, %v2104
        %2106 = vmatmul.bf16.gmra.mxu0 %v1978
        %v2107 = vpop.f32.mrf.mxu0
        %v2108 = vadd.f32 0.0, %v2107
        %v2109 = vpop.f32.mrf.mxu0
        %v2110 = vadd.f32 0.0, %v2109
        %2111 = vmatmul.bf16.gmra.mxu0 %v1979
        %v2112 = vpop.f32.mrf.mxu0
        %v2113 = vadd.f32 0.0, %v2112
        %v2114 = vpop.f32.mrf.mxu0
        %v2115 = vadd.f32 0.0, %v2114
        %2116 = vdwg.mxu0
        %v2117 = vpack.c.bf16 %v2038, %v2038
        %v2118 = vpack.c.bf16 %v2040, %v2040
        %v2119 = vpack.c.bf16 %v2043, %v2043
        %v2120 = vpack.c.bf16 %v2045, %v2045
        %v2121 = vpack.c.bf16 %v2048, %v2048
        %v2122 = vpack.c.bf16 %v2050, %v2050
        %v2123 = vpack.c.bf16 %v2053, %v2053
        %v2124 = vpack.c.bf16 %v2055, %v2055
        %v2125 = vpack.c.bf16 %v2058, %v2058
        %v2126 = vpack.c.bf16 %v2060, %v2060
        %v2127 = vpack.c.bf16 %v2063, %v2063
        %v2128 = vpack.c.bf16 %v2065, %v2065
        %v2129 = vpack.c.bf16 %v2068, %v2068
        %v2130 = vpack.c.bf16 %v2070, %v2070
        %v2131 = vpack.c.bf16 %v2073, %v2073
        %v2132 = vpack.c.bf16 %v2075, %v2075
        %v2133 = vpack.c.bf16 %v2078, %v2078
        %v2134 = vpack.c.bf16 %v2080, %v2080
        %v2135 = vpack.c.bf16 %v2083, %v2083
        %v2136 = vpack.c.bf16 %v2085, %v2085
        %v2137 = vpack.c.bf16 %v2088, %v2088
        %v2138 = vpack.c.bf16 %v2090, %v2090
        %v2139 = vpack.c.bf16 %v2093, %v2093
        %v2140 = vpack.c.bf16 %v2095, %v2095
        %v2141 = vpack.c.bf16 %v2098, %v2098
        %v2142 = vpack.c.bf16 %v2100, %v2100
        %v2143 = vpack.c.bf16 %v2103, %v2103
        %v2144 = vpack.c.bf16 %v2105, %v2105
        %v2145 = vpack.c.bf16 %v2108, %v2108
        %v2146 = vpack.c.bf16 %v2110, %v2110
        %v2147 = vpack.c.bf16 %v2113, %v2113
        %v2148 = vpack.c.bf16 %v2115, %v2115
        %vm2149 = vcmask 257024
        %2150 = vst.msk [vmem:[#allocation4] sm:$0xf] %vm2149, %v2117
        %2151 = vst.msk [vmem:[#allocation4 + $0x4] sm:$0xf] %vm2149, %v2118
        %2152 = vst.msk [vmem:[#allocation4 + $0x8] sm:$0xf] %vm2149, %v2119
        %2153 = vst.msk [vmem:[#allocation4 + $0xc] sm:$0xf] %vm2149, %v2120
        %2154 = vst.msk [vmem:[#allocation4 + $0x10] sm:$0xf] %vm2149, %v2121
        %2155 = vst.msk [vmem:[#allocation4 + $0x14] sm:$0xf] %vm2149, %v2122
        %2156 = vst.msk [vmem:[#allocation4 + $0x18] sm:$0xf] %vm2149, %v2123
        %2157 = vst.msk [vmem:[#allocation4 + $0x1c] sm:$0xf] %vm2149, %v2124
        %2158 = vst.msk [vmem:[#allocation4 + $0x20] sm:$0xf] %vm2149, %v2125
        %2159 = vst.msk [vmem:[#allocation4 + $0x24] sm:$0xf] %vm2149, %v2126
        %2160 = vst.msk [vmem:[#allocation4 + $0x28] sm:$0xf] %vm2149, %v2127
        %2161 = vst.msk [vmem:[#allocation4 + $0x2c] sm:$0xf] %vm2149, %v2128
        %2162 = vst.msk [vmem:[#allocation4 + $0x30] sm:$0xf] %vm2149, %v2129
        %2163 = vst.msk [vmem:[#allocation4 + $0x34] sm:$0xf] %vm2149, %v2130
        %2164 = vst.msk [vmem:[#allocation4 + $0x38] sm:$0xf] %vm2149, %v2131
        %2165 = vst.msk [vmem:[#allocation4 + $0x3c] sm:$0xf] %vm2149, %v2132
        %2166 = vst.msk [vmem:[#allocation4 + $0x40] sm:$0xf] %vm2149, %v2133
        %2167 = vst.msk [vmem:[#allocation4 + $0x44] sm:$0xf] %vm2149, %v2134
        %2168 = vst.msk [vmem:[#allocation4 + $0x48] sm:$0xf] %vm2149, %v2135
        %2169 = vst.msk [vmem:[#allocation4 + $0x4c] sm:$0xf] %vm2149, %v2136
        %2170 = vst.msk [vmem:[#allocation4 + $0x50] sm:$0xf] %vm2149, %v2137
        %2171 = vst.msk [vmem:[#allocation4 + $0x54] sm:$0xf] %vm2149, %v2138
        %2172 = vst.msk [vmem:[#allocation4 + $0x58] sm:$0xf] %vm2149, %v2139
        %2173 = vst.msk [vmem:[#allocation4 + $0x5c] sm:$0xf] %vm2149, %v2140
        %2174 = vst.msk [vmem:[#allocation4 + $0x60] sm:$0xf] %vm2149, %v2141
        %2175 = vst.msk [vmem:[#allocation4 + $0x64] sm:$0xf] %vm2149, %v2142
        %2176 = vst.msk [vmem:[#allocation4 + $0x68] sm:$0xf] %vm2149, %v2143
        %2177 = vst.msk [vmem:[#allocation4 + $0x6c] sm:$0xf] %vm2149, %v2144
        %2178 = vst.msk [vmem:[#allocation4 + $0x70] sm:$0xf] %vm2149, %v2145
        %2179 = vst.msk [vmem:[#allocation4 + $0x74] sm:$0xf] %vm2149, %v2146
        %2180 = vst.msk [vmem:[#allocation4 + $0x78] sm:$0xf] %vm2149, %v2147
        %2181 = vst.msk [vmem:[#allocation4 + $0x7c] sm:$0xf] %vm2149, %v2148
        %v2182 = vld [vmem:[#allocation2] sm:$0xf]
        %v2183 = vld [vmem:[#allocation2 + $0x4] sm:$0xf]
        %v2184 = vld [vmem:[#allocation2 + $0x8] sm:$0xf]
        %v2185 = vld [vmem:[#allocation2 + $0xc] sm:$0xf]
        %v2186 = vld [vmem:[#allocation2 + $0x10] sm:$0xf]
        %v2187 = vld [vmem:[#allocation2 + $0x14] sm:$0xf]
        %v2188 = vld [vmem:[#allocation2 + $0x18] sm:$0xf]
        %v2189 = vld [vmem:[#allocation2 + $0x1c] sm:$0xf]
        %v2190 = vld [vmem:[#allocation2 + $0x20] sm:$0xf]
        %v2191 = vld [vmem:[#allocation2 + $0x24] sm:$0xf]
        %v2192 = vld [vmem:[#allocation2 + $0x28] sm:$0xf]
        %v2193 = vld [vmem:[#allocation2 + $0x2c] sm:$0xf]
        %v2194 = vld [vmem:[#allocation2 + $0x30] sm:$0xf]
        %v2195 = vld [vmem:[#allocation2 + $0x34] sm:$0xf]
        %v2196 = vld [vmem:[#allocation2 + $0x38] sm:$0xf]
        %v2197 = vld [vmem:[#allocation2 + $0x3c] sm:$0xf]
        %v2198 = vld [vmem:[#allocation3] sm:$0xf]
        %v2199 = vld [vmem:[#allocation3 + $0x4] sm:$0xf]
        %v2200 = vld [vmem:[#allocation3 + $0x8] sm:$0xf]
        %v2201 = vld [vmem:[#allocation3 + $0xc] sm:$0xf]
        %v2202 = vld [vmem:[#allocation3 + $0x10] sm:$0xf]
        %v2203 = vld [vmem:[#allocation3 + $0x14] sm:$0xf]
        %v2204 = vld [vmem:[#allocation3 + $0x18] sm:$0xf]
        %v2205 = vld [vmem:[#allocation3 + $0x1c] sm:$0xf]
        %v2206 = vld [vmem:[#allocation3 + $0x20] sm:$0xf]
        %v2207 = vld [vmem:[#allocation3 + $0x24] sm:$0xf]
        %v2208 = vld [vmem:[#allocation3 + $0x28] sm:$0xf]
        %v2209 = vld [vmem:[#allocation3 + $0x2c] sm:$0xf]
        %v2210 = vld [vmem:[#allocation3 + $0x30] sm:$0xf]
        %v2211 = vld [vmem:[#allocation3 + $0x34] sm:$0xf]
        %v2212 = vld [vmem:[#allocation3 + $0x38] sm:$0xf]
        %v2213 = vld [vmem:[#allocation3 + $0x3c] sm:$0xf]
        %2214 = vrot.lane.b32.xlu0 %v1458, 96
        %v2215 = vpop.permute.xlu0 %2214
        %2216 = vrot.lane.b32.xlu0 %v1459, 96
        %v2217 = vpop.permute.xlu0 %2216
        %2218 = vrot.lane.b32.xlu0 %v1460, 96
        %v2219 = vpop.permute.xlu0 %2218
        %2220 = vrot.lane.b32.xlu0 %v1461, 96
        %v2221 = vpop.permute.xlu0 %2220
        %2222 = vrot.lane.b32.xlu0 %v1462, 96
        %v2223 = vpop.permute.xlu0 %2222
        %2224 = vrot.lane.b32.xlu0 %v1463, 96
        %v2225 = vpop.permute.xlu0 %2224
        %2226 = vrot.lane.b32.xlu0 %v1464, 96
        %v2227 = vpop.permute.xlu0 %2226
        %2228 = vrot.lane.b32.xlu0 %v1465, 96
        %v2229 = vpop.permute.xlu0 %2228
        %2230 = vrot.lane.b32.xlu0 %v1466, 96
        %v2231 = vpop.permute.xlu0 %2230
        %2232 = vrot.lane.b32.xlu0 %v1467, 96
        %v2233 = vpop.permute.xlu0 %2232
        %2234 = vrot.lane.b32.xlu0 %v1468, 96
        %v2235 = vpop.permute.xlu0 %2234
        %2236 = vrot.lane.b32.xlu0 %v1469, 96
        %v2237 = vpop.permute.xlu0 %2236
        %2238 = vrot.lane.b32.xlu0 %v1470, 96
        %v2239 = vpop.permute.xlu0 %2238
        %2240 = vrot.lane.b32.xlu0 %v1471, 96
        %v2241 = vpop.permute.xlu0 %2240
        %2242 = vrot.lane.b32.xlu0 %v1472, 96
        %v2243 = vpop.permute.xlu0 %2242
        %2244 = vrot.lane.b32.xlu0 %v1473, 96
        %v2245 = vpop.permute.xlu0 %2244
        %v2262 = vunpack.c.l.b16 %v2182
        %v2263 = vunpack.c.l.b16 %v2183
        %v2264 = vunpack.c.l.b16 %v2184
        %v2265 = vunpack.c.l.b16 %v2185
        %v2266 = vunpack.c.l.b16 %v2186
        %v2267 = vunpack.c.l.b16 %v2187
        %v2268 = vunpack.c.l.b16 %v2188
        %v2269 = vunpack.c.l.b16 %v2189
        %v2270 = vunpack.c.l.b16 %v2190
        %v2271 = vunpack.c.l.b16 %v2191
        %v2272 = vunpack.c.l.b16 %v2192
        %v2273 = vunpack.c.l.b16 %v2193
        %v2274 = vunpack.c.l.b16 %v2194
        %v2275 = vunpack.c.l.b16 %v2195
        %v2276 = vunpack.c.l.b16 %v2196
        %v2277 = vunpack.c.l.b16 %v2197
        %v2278 = vpack.c.b16 %v2263, %v2262
        %v2279 = vpack.c.b16 %v2265, %v2264
        %v2280 = vpack.c.b16 %v2267, %v2266
        %v2281 = vpack.c.b16 %v2269, %v2268
        %v2282 = vpack.c.b16 %v2271, %v2270
        %v2283 = vpack.c.b16 %v2273, %v2272
        %v2284 = vpack.c.b16 %v2275, %v2274
        %v2285 = vpack.c.b16 %v2277, %v2276
        %2286 = vrot.lane.b32.xlu0 %v2278, 96
        %v2287 = vpop.permute.xlu0 %2286
        %2288 = vrot.lane.b32.xlu0 %v2279, 96
        %v2289 = vpop.permute.xlu0 %2288
        %2290 = vrot.lane.b32.xlu0 %v2280, 96
        %v2291 = vpop.permute.xlu0 %2290
        %2292 = vrot.lane.b32.xlu0 %v2281, 96
        %v2293 = vpop.permute.xlu0 %2292
        %2294 = vrot.lane.b32.xlu0 %v2282, 96
        %v2295 = vpop.permute.xlu0 %2294
        %2296 = vrot.lane.b32.xlu0 %v2283, 96
        %v2297 = vpop.permute.xlu0 %2296
        %2298 = vrot.lane.b32.xlu0 %v2284, 96
        %v2299 = vpop.permute.xlu0 %2298
        %2300 = vrot.lane.b32.xlu0 %v2285, 96
        %v2301 = vpop.permute.xlu0 %2300
        %v2303 = vsel %vm1514, %v2215, 0
        %v2306 = vsel %vm1514, %v2217, 0
        %v2309 = vsel %vm1514, %v2219, 0
        %v2312 = vsel %vm1514, %v2221, 0
        %v2315 = vsel %vm1514, %v2223, 0
        %v2318 = vsel %vm1514, %v2225, 0
        %v2321 = vsel %vm1514, %v2227, 0
        %v2324 = vsel %vm1514, %v2229, 0
        %v2327 = vsel %vm1514, %v2231, 0
        %v2330 = vsel %vm1514, %v2233, 0
        %v2333 = vsel %vm1514, %v2235, 0
        %v2336 = vsel %vm1514, %v2237, 0
        %v2339 = vsel %vm1514, %v2239, 0
        %v2342 = vsel %vm1514, %v2241, 0
        %v2345 = vsel %vm1514, %v2243, 0
        %v2348 = vsel %vm1514, %v2245, 0
        %v2351 = vsel %vm1514, %v2287, 0
        %v2354 = vsel %vm1514, %v2289, 0
        %v2357 = vsel %vm1514, %v2291, 0
        %v2360 = vsel %vm1514, %v2293, 0
        %v2363 = vsel %vm1514, %v2295, 0
        %v2366 = vsel %vm1514, %v2297, 0
        %v2369 = vsel %vm1514, %v2299, 0
        %v2372 = vsel %vm1514, %v2301, 0
        %2374 = vmatpush.bf16.xpose.msra.mxu0 %v2372
        %2375 = vmatpush.bf16.xpose.msra.mxu0 %v2369
        %2376 = vmatpush.bf16.xpose.msra.mxu0 %v2366
        %2377 = vmatpush.bf16.xpose.msra.mxu0 %v2363
        %2378 = vmatpush.bf16.xpose.msra.mxu0 %v2360
        %2379 = vmatpush.bf16.xpose.msra.mxu0 %v2357
        %2380 = vmatpush.bf16.xpose.msra.mxu0 %v2354
        %2381 = vmatpush.bf16.xpose.msra.mxu0 %v2351
        %2382 = vmatmul.bf16.gmra.mxu0 %v2303
        %v2383 = vpop.f32.mrf.mxu0
        %v2384 = vadd.f32 0.0, %v2383
        %v2385 = vpop.f32.mrf.mxu0
        %v2386 = vadd.f32 0.0, %v2385
        %2387 = vmatmul.bf16.gmra.mxu0 %v2306
        %v2388 = vpop.f32.mrf.mxu0
        %v2389 = vadd.f32 0.0, %v2388
        %v2390 = vpop.f32.mrf.mxu0
        %v2391 = vadd.f32 0.0, %v2390
        %2392 = vmatmul.bf16.gmra.mxu0 %v2309
        %v2393 = vpop.f32.mrf.mxu0
        %v2394 = vadd.f32 0.0, %v2393
        %v2395 = vpop.f32.mrf.mxu0
        %v2396 = vadd.f32 0.0, %v2395
        %2397 = vmatmul.bf16.gmra.mxu0 %v2312
        %v2398 = vpop.f32.mrf.mxu0
        %v2399 = vadd.f32 0.0, %v2398
        %v2400 = vpop.f32.mrf.mxu0
        %v2401 = vadd.f32 0.0, %v2400
        %2402 = vmatmul.bf16.gmra.mxu0 %v2315
        %v2403 = vpop.f32.mrf.mxu0
        %v2404 = vadd.f32 0.0, %v2403
        %v2405 = vpop.f32.mrf.mxu0
        %v2406 = vadd.f32 0.0, %v2405
        %2407 = vmatmul.bf16.gmra.mxu0 %v2318
        %v2408 = vpop.f32.mrf.mxu0
        %v2409 = vadd.f32 0.0, %v2408
        %v2410 = vpop.f32.mrf.mxu0
        %v2411 = vadd.f32 0.0, %v2410
        %2412 = vmatmul.bf16.gmra.mxu0 %v2321
        %v2413 = vpop.f32.mrf.mxu0
        %v2414 = vadd.f32 0.0, %v2413
        %v2415 = vpop.f32.mrf.mxu0
        %v2416 = vadd.f32 0.0, %v2415
        %2417 = vmatmul.bf16.gmra.mxu0 %v2324
        %v2418 = vpop.f32.mrf.mxu0
        %v2419 = vadd.f32 0.0, %v2418
        %v2420 = vpop.f32.mrf.mxu0
        %v2421 = vadd.f32 0.0, %v2420
        %2422 = vmatmul.bf16.gmra.mxu0 %v2327
        %v2423 = vpop.f32.mrf.mxu0
        %v2424 = vadd.f32 0.0, %v2423
        %v2425 = vpop.f32.mrf.mxu0
        %v2426 = vadd.f32 0.0, %v2425
        %2427 = vmatmul.bf16.gmra.mxu0 %v2330
        %v2428 = vpop.f32.mrf.mxu0
        %v2429 = vadd.f32 0.0, %v2428
        %v2430 = vpop.f32.mrf.mxu0
        %v2431 = vadd.f32 0.0, %v2430
        %2432 = vmatmul.bf16.gmra.mxu0 %v2333
        %v2433 = vpop.f32.mrf.mxu0
        %v2434 = vadd.f32 0.0, %v2433
        %v2435 = vpop.f32.mrf.mxu0
        %v2436 = vadd.f32 0.0, %v2435
        %2437 = vmatmul.bf16.gmra.mxu0 %v2336
        %v2438 = vpop.f32.mrf.mxu0
        %v2439 = vadd.f32 0.0, %v2438
        %v2440 = vpop.f32.mrf.mxu0
        %v2441 = vadd.f32 0.0, %v2440
        %2442 = vmatmul.bf16.gmra.mxu0 %v2339
        %v2443 = vpop.f32.mrf.mxu0
        %v2444 = vadd.f32 0.0, %v2443
        %v2445 = vpop.f32.mrf.mxu0
        %v2446 = vadd.f32 0.0, %v2445
        %2447 = vmatmul.bf16.gmra.mxu0 %v2342
        %v2448 = vpop.f32.mrf.mxu0
        %v2449 = vadd.f32 0.0, %v2448
        %v2450 = vpop.f32.mrf.mxu0
        %v2451 = vadd.f32 0.0, %v2450
        %2452 = vmatmul.bf16.gmra.mxu0 %v2345
        %v2453 = vpop.f32.mrf.mxu0
        %v2454 = vadd.f32 0.0, %v2453
        %v2455 = vpop.f32.mrf.mxu0
        %v2456 = vadd.f32 0.0, %v2455
        %2457 = vmatmul.bf16.gmra.mxu0 %v2348
        %v2458 = vpop.f32.mrf.mxu0
        %v2459 = vadd.f32 0.0, %v2458
        %v2460 = vpop.f32.mrf.mxu0
        %v2461 = vadd.f32 0.0, %v2460
        %2462 = vdwg.mxu0
        %2463 = vmax.xlane.f32.xlu0 %v2384
        %v2464 = vpop.xlane.xlu0 %2463
        %2465 = vmax.xlane.f32.xlu0 %v2386
        %v2466 = vpop.xlane.xlu0 %2465
        %2467 = vmax.xlane.f32.xlu0 %v2389
        %v2468 = vpop.xlane.xlu0 %2467
        %2469 = vmax.xlane.f32.xlu0 %v2391
        %v2470 = vpop.xlane.xlu0 %2469
        %2471 = vmax.xlane.f32.xlu0 %v2394
        %v2472 = vpop.xlane.xlu0 %2471
        %2473 = vmax.xlane.f32.xlu0 %v2396
        %v2474 = vpop.xlane.xlu0 %2473
        %2475 = vmax.xlane.f32.xlu0 %v2399
        %v2476 = vpop.xlane.xlu0 %2475
        %2477 = vmax.xlane.f32.xlu0 %v2401
        %v2478 = vpop.xlane.xlu0 %2477
        %2479 = vmax.xlane.f32.xlu0 %v2404
        %v2480 = vpop.xlane.xlu0 %2479
        %2481 = vmax.xlane.f32.xlu0 %v2406
        %v2482 = vpop.xlane.xlu0 %2481
        %2483 = vmax.xlane.f32.xlu0 %v2409
        %v2484 = vpop.xlane.xlu0 %2483
        %2485 = vmax.xlane.f32.xlu0 %v2411
        %v2486 = vpop.xlane.xlu0 %2485
        %2487 = vmax.xlane.f32.xlu0 %v2414
        %v2488 = vpop.xlane.xlu0 %2487
        %2489 = vmax.xlane.f32.xlu0 %v2416
        %v2490 = vpop.xlane.xlu0 %2489
        %2491 = vmax.xlane.f32.xlu0 %v2419
        %v2492 = vpop.xlane.xlu0 %2491
        %2493 = vmax.xlane.f32.xlu0 %v2421
        %v2494 = vpop.xlane.xlu0 %2493
        %2495 = vmax.xlane.f32.xlu0 %v2424
        %v2496 = vpop.xlane.xlu0 %2495
        %2497 = vmax.xlane.f32.xlu0 %v2426
        %v2498 = vpop.xlane.xlu0 %2497
        %2499 = vmax.xlane.f32.xlu0 %v2429
        %v2500 = vpop.xlane.xlu0 %2499
        %2501 = vmax.xlane.f32.xlu0 %v2431
        %v2502 = vpop.xlane.xlu0 %2501
        %2503 = vmax.xlane.f32.xlu0 %v2434
        %v2504 = vpop.xlane.xlu0 %2503
        %2505 = vmax.xlane.f32.xlu0 %v2436
        %v2506 = vpop.xlane.xlu0 %2505
        %2507 = vmax.xlane.f32.xlu0 %v2439
        %v2508 = vpop.xlane.xlu0 %2507
        %2509 = vmax.xlane.f32.xlu0 %v2441
        %v2510 = vpop.xlane.xlu0 %2509
        %2511 = vmax.xlane.f32.xlu0 %v2444
        %v2512 = vpop.xlane.xlu0 %2511
        %2513 = vmax.xlane.f32.xlu0 %v2446
        %v2514 = vpop.xlane.xlu0 %2513
        %2515 = vmax.xlane.f32.xlu0 %v2449
        %v2516 = vpop.xlane.xlu0 %2515
        %2517 = vmax.xlane.f32.xlu0 %v2451
        %v2518 = vpop.xlane.xlu0 %2517
        %2519 = vmax.xlane.f32.xlu0 %v2454
        %v2520 = vpop.xlane.xlu0 %2519
        %2521 = vmax.xlane.f32.xlu0 %v2456
        %v2522 = vpop.xlane.xlu0 %2521
        %2523 = vmax.xlane.f32.xlu0 %v2459
        %v2524 = vpop.xlane.xlu0 %2523
        %2525 = vmax.xlane.f32.xlu0 %v2461
        %v2526 = vpop.xlane.xlu0 %2525
        %v2527 = vsub.f32 %v2384, %v2464
        %v2528 = vsub.f32 %v2386, %v2466
        %v2529 = vsub.f32 %v2389, %v2468
        %v2530 = vsub.f32 %v2391, %v2470
        %v2531 = vsub.f32 %v2394, %v2472
        %v2532 = vsub.f32 %v2396, %v2474
        %v2533 = vsub.f32 %v2399, %v2476
        %v2534 = vsub.f32 %v2401, %v2478
        %v2535 = vsub.f32 %v2404, %v2480
        %v2536 = vsub.f32 %v2406, %v2482
        %v2537 = vsub.f32 %v2409, %v2484
        %v2538 = vsub.f32 %v2411, %v2486
        %v2539 = vsub.f32 %v2414, %v2488
        %v2540 = vsub.f32 %v2416, %v2490
        %v2541 = vsub.f32 %v2419, %v2492
        %v2542 = vsub.f32 %v2421, %v2494
        %v2543 = vsub.f32 %v2424, %v2496
        %v2544 = vsub.f32 %v2426, %v2498
        %v2545 = vsub.f32 %v2429, %v2500
        %v2546 = vsub.f32 %v2431, %v2502
        %v2547 = vsub.f32 %v2434, %v2504
        %v2548 = vsub.f32 %v2436, %v2506
        %v2549 = vsub.f32 %v2439, %v2508
        %v2550 = vsub.f32 %v2441, %v2510
        %v2551 = vsub.f32 %v2444, %v2512
        %v2552 = vsub.f32 %v2446, %v2514
        %v2553 = vsub.f32 %v2449, %v2516
        %v2554 = vsub.f32 %v2451, %v2518
        %v2555 = vsub.f32 %v2454, %v2520
        %v2556 = vsub.f32 %v2456, %v2522
        %v2557 = vsub.f32 %v2459, %v2524
        %v2558 = vsub.f32 %v2461, %v2526
        %v2559 = vmul.f32 %v2527, 1.442695
        %v2560 = vpow.pop %v2559
        %v2561 = vmul.f32 %v2528, 1.442695
        %v2562 = vpow.pop %v2561
        %v2563 = vmul.f32 %v2529, 1.442695
        %v2564 = vpow.pop %v2563
        %v2565 = vmul.f32 %v2530, 1.442695
        %v2566 = vpow.pop %v2565
        %v2567 = vmul.f32 %v2531, 1.442695
        %v2568 = vpow.pop %v2567
        %v2569 = vmul.f32 %v2532, 1.442695
        %v2570 = vpow.pop %v2569
        %v2571 = vmul.f32 %v2533, 1.442695
        %v2572 = vpow.pop %v2571
        %v2573 = vmul.f32 %v2534, 1.442695
        %v2574 = vpow.pop %v2573
        %v2575 = vmul.f32 %v2535, 1.442695
        %v2576 = vpow.pop %v2575
        %v2577 = vmul.f32 %v2536, 1.442695
        %v2578 = vpow.pop %v2577
        %v2579 = vmul.f32 %v2537, 1.442695
        %v2580 = vpow.pop %v2579
        %v2581 = vmul.f32 %v2538, 1.442695
        %v2582 = vpow.pop %v2581
        %v2583 = vmul.f32 %v2539, 1.442695
        %v2584 = vpow.pop %v2583
        %v2585 = vmul.f32 %v2540, 1.442695
        %v2586 = vpow.pop %v2585
        %v2587 = vmul.f32 %v2541, 1.442695
        %v2588 = vpow.pop %v2587
        %v2589 = vmul.f32 %v2542, 1.442695
        %v2590 = vpow.pop %v2589
        %v2591 = vmul.f32 %v2543, 1.442695
        %v2592 = vpow.pop %v2591
        %v2593 = vmul.f32 %v2544, 1.442695
        %v2594 = vpow.pop %v2593
        %v2595 = vmul.f32 %v2545, 1.442695
        %v2596 = vpow.pop %v2595
        %v2597 = vmul.f32 %v2546, 1.442695
        %v2598 = vpow.pop %v2597
        %v2599 = vmul.f32 %v2547, 1.442695
        %v2600 = vpow.pop %v2599
        %v2601 = vmul.f32 %v2548, 1.442695
        %v2602 = vpow.pop %v2601
        %v2603 = vmul.f32 %v2549, 1.442695
        %v2604 = vpow.pop %v2603
        %v2605 = vmul.f32 %v2550, 1.442695
        %v2606 = vpow.pop %v2605
        %v2607 = vmul.f32 %v2551, 1.442695
        %v2608 = vpow.pop %v2607
        %v2609 = vmul.f32 %v2552, 1.442695
        %v2610 = vpow.pop %v2609
        %v2611 = vmul.f32 %v2553, 1.442695
        %v2612 = vpow.pop %v2611
        %v2613 = vmul.f32 %v2554, 1.442695
        %v2614 = vpow.pop %v2613
        %v2615 = vmul.f32 %v2555, 1.442695
        %v2616 = vpow.pop %v2615
        %v2617 = vmul.f32 %v2556, 1.442695
        %v2618 = vpow.pop %v2617
        %v2619 = vmul.f32 %v2557, 1.442695
        %v2620 = vpow.pop %v2619
        %v2621 = vmul.f32 %v2558, 1.442695
        %v2622 = vpow.pop %v2621
        %2623 = vadd.xlane.f32.xlu0 %v2560
        %v2624 = vpop.xlane.xlu0 %2623
        %2625 = vadd.xlane.f32.xlu0 %v2562
        %v2626 = vpop.xlane.xlu0 %2625
        %2627 = vadd.xlane.f32.xlu0 %v2564
        %v2628 = vpop.xlane.xlu0 %2627
        %2629 = vadd.xlane.f32.xlu0 %v2566
        %v2630 = vpop.xlane.xlu0 %2629
        %2631 = vadd.xlane.f32.xlu0 %v2568
        %v2632 = vpop.xlane.xlu0 %2631
        %2633 = vadd.xlane.f32.xlu0 %v2570
        %v2634 = vpop.xlane.xlu0 %2633
        %2635 = vadd.xlane.f32.xlu0 %v2572
        %v2636 = vpop.xlane.xlu0 %2635
        %2637 = vadd.xlane.f32.xlu0 %v2574
        %v2638 = vpop.xlane.xlu0 %2637
        %2639 = vadd.xlane.f32.xlu0 %v2576
        %v2640 = vpop.xlane.xlu0 %2639
        %2641 = vadd.xlane.f32.xlu0 %v2578
        %v2642 = vpop.xlane.xlu0 %2641
        %2643 = vadd.xlane.f32.xlu0 %v2580
        %v2644 = vpop.xlane.xlu0 %2643
        %2645 = vadd.xlane.f32.xlu0 %v2582
        %v2646 = vpop.xlane.xlu0 %2645
        %2647 = vadd.xlane.f32.xlu0 %v2584
        %v2648 = vpop.xlane.xlu0 %2647
        %2649 = vadd.xlane.f32.xlu0 %v2586
        %v2650 = vpop.xlane.xlu0 %2649
        %2651 = vadd.xlane.f32.xlu0 %v2588
        %v2652 = vpop.xlane.xlu0 %2651
        %2653 = vadd.xlane.f32.xlu0 %v2590
        %v2654 = vpop.xlane.xlu0 %2653
        %2655 = vadd.xlane.f32.xlu0 %v2592
        %v2656 = vpop.xlane.xlu0 %2655
        %2657 = vadd.xlane.f32.xlu0 %v2594
        %v2658 = vpop.xlane.xlu0 %2657
        %2659 = vadd.xlane.f32.xlu0 %v2596
        %v2660 = vpop.xlane.xlu0 %2659
        %2661 = vadd.xlane.f32.xlu0 %v2598
        %v2662 = vpop.xlane.xlu0 %2661
        %2663 = vadd.xlane.f32.xlu0 %v2600
        %v2664 = vpop.xlane.xlu0 %2663
        %2665 = vadd.xlane.f32.xlu0 %v2602
        %v2666 = vpop.xlane.xlu0 %2665
        %2667 = vadd.xlane.f32.xlu0 %v2604
        %v2668 = vpop.xlane.xlu0 %2667
        %2669 = vadd.xlane.f32.xlu0 %v2606
        %v2670 = vpop.xlane.xlu0 %2669
        %2671 = vadd.xlane.f32.xlu0 %v2608
        %v2672 = vpop.xlane.xlu0 %2671
        %2673 = vadd.xlane.f32.xlu0 %v2610
        %v2674 = vpop.xlane.xlu0 %2673
        %2675 = vadd.xlane.f32.xlu0 %v2612
        %v2676 = vpop.xlane.xlu0 %2675
        %2677 = vadd.xlane.f32.xlu0 %v2614
        %v2678 = vpop.xlane.xlu0 %2677
        %2679 = vadd.xlane.f32.xlu0 %v2616
        %v2680 = vpop.xlane.xlu0 %2679
        %2681 = vadd.xlane.f32.xlu0 %v2618
        %v2682 = vpop.xlane.xlu0 %2681
        %2683 = vadd.xlane.f32.xlu0 %v2620
        %v2684 = vpop.xlane.xlu0 %2683
        %2685 = vadd.xlane.f32.xlu0 %v2622
        %v2686 = vpop.xlane.xlu0 %2685
        %v2687 = vrcp.pop %v2624
        %v2688 = vrcp.pop %v2626
        %v2689 = vrcp.pop %v2628
        %v2690 = vrcp.pop %v2630
        %v2691 = vrcp.pop %v2632
        %v2692 = vrcp.pop %v2634
        %v2693 = vrcp.pop %v2636
        %v2694 = vrcp.pop %v2638
        %v2695 = vrcp.pop %v2640
        %v2696 = vrcp.pop %v2642
        %v2697 = vrcp.pop %v2644
        %v2698 = vrcp.pop %v2646
        %v2699 = vrcp.pop %v2648
        %v2700 = vrcp.pop %v2650
        %v2701 = vrcp.pop %v2652
        %v2702 = vrcp.pop %v2654
        %v2703 = vrcp.pop %v2656
        %v2704 = vrcp.pop %v2658
        %v2705 = vrcp.pop %v2660
        %v2706 = vrcp.pop %v2662
        %v2707 = vrcp.pop %v2664
        %v2708 = vrcp.pop %v2666
        %v2709 = vrcp.pop %v2668
        %v2710 = vrcp.pop %v2670
        %v2711 = vrcp.pop %v2672
        %v2712 = vrcp.pop %v2674
        %v2713 = vrcp.pop %v2676
        %v2714 = vrcp.pop %v2678
        %v2715 = vrcp.pop %v2680
        %v2716 = vrcp.pop %v2682
        %v2717 = vrcp.pop %v2684
        %v2718 = vrcp.pop %v2686
        %v2719 = vmul.f32 %v2560, %v2687
        %v2720 = vmul.f32 %v2562, %v2688
        %v2721 = vmul.f32 %v2564, %v2689
        %v2722 = vmul.f32 %v2566, %v2690
        %v2723 = vmul.f32 %v2568, %v2691
        %v2724 = vmul.f32 %v2570, %v2692
        %v2725 = vmul.f32 %v2572, %v2693
        %v2726 = vmul.f32 %v2574, %v2694
        %v2727 = vmul.f32 %v2576, %v2695
        %v2728 = vmul.f32 %v2578, %v2696
        %v2729 = vmul.f32 %v2580, %v2697
        %v2730 = vmul.f32 %v2582, %v2698
        %v2731 = vmul.f32 %v2584, %v2699
        %v2732 = vmul.f32 %v2586, %v2700
        %v2733 = vmul.f32 %v2588, %v2701
        %v2734 = vmul.f32 %v2590, %v2702
        %v2735 = vmul.f32 %v2592, %v2703
        %v2736 = vmul.f32 %v2594, %v2704
        %v2737 = vmul.f32 %v2596, %v2705
        %v2738 = vmul.f32 %v2598, %v2706
        %v2739 = vmul.f32 %v2600, %v2707
        %v2740 = vmul.f32 %v2602, %v2708
        %v2741 = vmul.f32 %v2604, %v2709
        %v2742 = vmul.f32 %v2606, %v2710
        %v2743 = vmul.f32 %v2608, %v2711
        %v2744 = vmul.f32 %v2610, %v2712
        %v2745 = vmul.f32 %v2612, %v2713
        %v2746 = vmul.f32 %v2614, %v2714
        %v2747 = vmul.f32 %v2616, %v2715
        %v2748 = vmul.f32 %v2618, %v2716
        %v2749 = vmul.f32 %v2620, %v2717
        %v2750 = vmul.f32 %v2622, %v2718
        %v2751 = vmax.f32 %v1932, %v2719
        %v2752 = vmax.f32 %v1933, %v2720
        %v2753 = vmax.f32 %v1934, %v2721
        %v2754 = vmax.f32 %v1935, %v2722
        %v2755 = vmax.f32 %v1936, %v2723
        %v2756 = vmax.f32 %v1937, %v2724
        %v2757 = vmax.f32 %v1938, %v2725
        %v2758 = vmax.f32 %v1939, %v2726
        %v2759 = vmax.f32 %v1940, %v2727
        %v2760 = vmax.f32 %v1941, %v2728
        %v2761 = vmax.f32 %v1942, %v2729
        %v2762 = vmax.f32 %v1943, %v2730
        %v2763 = vmax.f32 %v1944, %v2731
        %v2764 = vmax.f32 %v1945, %v2732
        %v2765 = vmax.f32 %v1946, %v2733
        %v2766 = vmax.f32 %v1947, %v2734
        %v2767 = vmax.f32 %v1948, %v2735
        %v2768 = vmax.f32 %v1949, %v2736
        %v2769 = vmax.f32 %v1950, %v2737
        %v2770 = vmax.f32 %v1951, %v2738
        %v2771 = vmax.f32 %v1952, %v2739
        %v2772 = vmax.f32 %v1953, %v2740
        %v2773 = vmax.f32 %v1954, %v2741
        %v2774 = vmax.f32 %v1955, %v2742
        %v2775 = vmax.f32 %v1956, %v2743
        %v2776 = vmax.f32 %v1957, %v2744
        %v2777 = vmax.f32 %v1958, %v2745
        %v2778 = vmax.f32 %v1959, %v2746
        %v2779 = vmax.f32 %v1960, %v2747
        %v2780 = vmax.f32 %v1961, %v2748
        %v2781 = vmax.f32 %v1962, %v2749
        %v2782 = vmax.f32 %v1963, %v2750
        %v2783 = vpack.c.bf16 %v2720, %v2719
        %v2784 = vpack.c.bf16 %v2722, %v2721
        %v2785 = vpack.c.bf16 %v2724, %v2723
        %v2786 = vpack.c.bf16 %v2726, %v2725
        %v2787 = vpack.c.bf16 %v2728, %v2727
        %v2788 = vpack.c.bf16 %v2730, %v2729
        %v2789 = vpack.c.bf16 %v2732, %v2731
        %v2790 = vpack.c.bf16 %v2734, %v2733
        %v2791 = vpack.c.bf16 %v2736, %v2735
        %v2792 = vpack.c.bf16 %v2738, %v2737
        %v2793 = vpack.c.bf16 %v2740, %v2739
        %v2794 = vpack.c.bf16 %v2742, %v2741
        %v2795 = vpack.c.bf16 %v2744, %v2743
        %v2796 = vpack.c.bf16 %v2746, %v2745
        %v2797 = vpack.c.bf16 %v2748, %v2747
        %v2798 = vpack.c.bf16 %v2750, %v2749
        %v2815 = vunpack.c.l.b16 %v2198
        %v2816 = vunpack.c.l.b16 %v2199
        %v2817 = vunpack.c.l.b16 %v2200
        %v2818 = vunpack.c.l.b16 %v2201
        %v2819 = vunpack.c.l.b16 %v2202
        %v2820 = vunpack.c.l.b16 %v2203
        %v2821 = vunpack.c.l.b16 %v2204
        %v2822 = vunpack.c.l.b16 %v2205
        %v2823 = vunpack.c.l.b16 %v2206
        %v2824 = vunpack.c.l.b16 %v2207
        %v2825 = vunpack.c.l.b16 %v2208
        %v2826 = vunpack.c.l.b16 %v2209
        %v2827 = vunpack.c.l.b16 %v2210
        %v2828 = vunpack.c.l.b16 %v2211
        %v2829 = vunpack.c.l.b16 %v2212
        %v2830 = vunpack.c.l.b16 %v2213
        %v2831 = vpack.c.b16 %v2816, %v2815
        %v2832 = vpack.c.b16 %v2818, %v2817
        %v2833 = vpack.c.b16 %v2820, %v2819
        %v2834 = vpack.c.b16 %v2822, %v2821
        %v2835 = vpack.c.b16 %v2824, %v2823
        %v2836 = vpack.c.b16 %v2826, %v2825
        %v2837 = vpack.c.b16 %v2828, %v2827
        %v2838 = vpack.c.b16 %v2830, %v2829
        %2839 = vrot.lane.b32.xlu0 %v2831, 96
        %v2840 = vpop.permute.xlu0 %2839
        %2841 = vrot.lane.b32.xlu0 %v2832, 96
        %v2842 = vpop.permute.xlu0 %2841
        %2843 = vrot.lane.b32.xlu0 %v2833, 96
        %v2844 = vpop.permute.xlu0 %2843
        %2845 = vrot.lane.b32.xlu0 %v2834, 96
        %v2846 = vpop.permute.xlu0 %2845
        %2847 = vrot.lane.b32.xlu0 %v2835, 96
        %v2848 = vpop.permute.xlu0 %2847
        %2849 = vrot.lane.b32.xlu0 %v2836, 96
        %v2850 = vpop.permute.xlu0 %2849
        %2851 = vrot.lane.b32.xlu0 %v2837, 96
        %v2852 = vpop.permute.xlu0 %2851
        %2853 = vrot.lane.b32.xlu0 %v2838, 96
        %v2854 = vpop.permute.xlu0 %2853
        %2863 = vmatpush.bf16.msra.mxu0 %v2854
        %2864 = vmatpush.bf16.msra.mxu0 %v2852
        %2865 = vmatpush.bf16.msra.mxu0 %v2850
        %2866 = vmatpush.bf16.msra.mxu0 %v2848
        %2867 = vmatpush.bf16.msra.mxu0 %v2846
        %2868 = vmatpush.bf16.msra.mxu0 %v2844
        %2869 = vmatpush.bf16.msra.mxu0 %v2842
        %2870 = vmatpush.bf16.msra.mxu0 %v2840
        %2871 = vmatmul.bf16.gmra.mxu0 %v2783
        %v2872 = vpop.f32.mrf.mxu0
        %v2873 = vadd.f32 0.0, %v2872
        %v2874 = vpop.f32.mrf.mxu0
        %v2875 = vadd.f32 0.0, %v2874
        %2876 = vmatmul.bf16.gmra.mxu0 %v2784
        %v2877 = vpop.f32.mrf.mxu0
        %v2878 = vadd.f32 0.0, %v2877
        %v2879 = vpop.f32.mrf.mxu0
        %v2880 = vadd.f32 0.0, %v2879
        %2881 = vmatmul.bf16.gmra.mxu0 %v2785
        %v2882 = vpop.f32.mrf.mxu0
        %v2883 = vadd.f32 0.0, %v2882
        %v2884 = vpop.f32.mrf.mxu0
        %v2885 = vadd.f32 0.0, %v2884
        %2886 = vmatmul.bf16.gmra.mxu0 %v2786
        %v2887 = vpop.f32.mrf.mxu0
        %v2888 = vadd.f32 0.0, %v2887
        %v2889 = vpop.f32.mrf.mxu0
        %v2890 = vadd.f32 0.0, %v2889
        %2891 = vmatmul.bf16.gmra.mxu0 %v2787
        %v2892 = vpop.f32.mrf.mxu0
        %v2893 = vadd.f32 0.0, %v2892
        %v2894 = vpop.f32.mrf.mxu0
        %v2895 = vadd.f32 0.0, %v2894
        %2896 = vmatmul.bf16.gmra.mxu0 %v2788
        %v2897 = vpop.f32.mrf.mxu0
        %v2898 = vadd.f32 0.0, %v2897
        %v2899 = vpop.f32.mrf.mxu0
        %v2900 = vadd.f32 0.0, %v2899
        %2901 = vmatmul.bf16.gmra.mxu0 %v2789
        %v2902 = vpop.f32.mrf.mxu0
        %v2903 = vadd.f32 0.0, %v2902
        %v2904 = vpop.f32.mrf.mxu0
        %v2905 = vadd.f32 0.0, %v2904
        %2906 = vmatmul.bf16.gmra.mxu0 %v2790
        %v2907 = vpop.f32.mrf.mxu0
        %v2908 = vadd.f32 0.0, %v2907
        %v2909 = vpop.f32.mrf.mxu0
        %v2910 = vadd.f32 0.0, %v2909
        %2911 = vmatmul.bf16.gmra.mxu0 %v2791
        %v2912 = vpop.f32.mrf.mxu0
        %v2913 = vadd.f32 0.0, %v2912
        %v2914 = vpop.f32.mrf.mxu0
        %v2915 = vadd.f32 0.0, %v2914
        %2916 = vmatmul.bf16.gmra.mxu0 %v2792
        %v2917 = vpop.f32.mrf.mxu0
        %v2918 = vadd.f32 0.0, %v2917
        %v2919 = vpop.f32.mrf.mxu0
        %v2920 = vadd.f32 0.0, %v2919
        %2921 = vmatmul.bf16.gmra.mxu0 %v2793
        %v2922 = vpop.f32.mrf.mxu0
        %v2923 = vadd.f32 0.0, %v2922
        %v2924 = vpop.f32.mrf.mxu0
        %v2925 = vadd.f32 0.0, %v2924
        %2926 = vmatmul.bf16.gmra.mxu0 %v2794
        %v2927 = vpop.f32.mrf.mxu0
        %v2928 = vadd.f32 0.0, %v2927
        %v2929 = vpop.f32.mrf.mxu0
        %v2930 = vadd.f32 0.0, %v2929
        %2931 = vmatmul.bf16.gmra.mxu0 %v2795
        %v2932 = vpop.f32.mrf.mxu0
        %v2933 = vadd.f32 0.0, %v2932
        %v2934 = vpop.f32.mrf.mxu0
        %v2935 = vadd.f32 0.0, %v2934
        %2936 = vmatmul.bf16.gmra.mxu0 %v2796
        %v2937 = vpop.f32.mrf.mxu0
        %v2938 = vadd.f32 0.0, %v2937
        %v2939 = vpop.f32.mrf.mxu0
        %v2940 = vadd.f32 0.0, %v2939
        %2941 = vmatmul.bf16.gmra.mxu0 %v2797
        %v2942 = vpop.f32.mrf.mxu0
        %v2943 = vadd.f32 0.0, %v2942
        %v2944 = vpop.f32.mrf.mxu0
        %v2945 = vadd.f32 0.0, %v2944
        %2946 = vmatmul.bf16.gmra.mxu0 %v2798
        %v2947 = vpop.f32.mrf.mxu0
        %v2948 = vadd.f32 0.0, %v2947
        %v2949 = vpop.f32.mrf.mxu0
        %v2950 = vadd.f32 0.0, %v2949
        %2951 = vdwg.mxu0
        %v2952 = vpack.c.bf16 %v2873, %v2873
        %v2953 = vpack.c.bf16 %v2875, %v2875
        %v2954 = vpack.c.bf16 %v2878, %v2878
        %v2955 = vpack.c.bf16 %v2880, %v2880
        %v2956 = vpack.c.bf16 %v2883, %v2883
        %v2957 = vpack.c.bf16 %v2885, %v2885
        %v2958 = vpack.c.bf16 %v2888, %v2888
        %v2959 = vpack.c.bf16 %v2890, %v2890
        %v2960 = vpack.c.bf16 %v2893, %v2893
        %v2961 = vpack.c.bf16 %v2895, %v2895
        %v2962 = vpack.c.bf16 %v2898, %v2898
        %v2963 = vpack.c.bf16 %v2900, %v2900
        %v2964 = vpack.c.bf16 %v2903, %v2903
        %v2965 = vpack.c.bf16 %v2905, %v2905
        %v2966 = vpack.c.bf16 %v2908, %v2908
        %v2967 = vpack.c.bf16 %v2910, %v2910
        %v2968 = vpack.c.bf16 %v2913, %v2913
        %v2969 = vpack.c.bf16 %v2915, %v2915
        %v2970 = vpack.c.bf16 %v2918, %v2918
        %v2971 = vpack.c.bf16 %v2920, %v2920
        %v2972 = vpack.c.bf16 %v2923, %v2923
        %v2973 = vpack.c.bf16 %v2925, %v2925
        %v2974 = vpack.c.bf16 %v2928, %v2928
        %v2975 = vpack.c.bf16 %v2930, %v2930
        %v2976 = vpack.c.bf16 %v2933, %v2933
        %v2977 = vpack.c.bf16 %v2935, %v2935
        %v2978 = vpack.c.bf16 %v2938, %v2938
        %v2979 = vpack.c.bf16 %v2940, %v2940
        %v2980 = vpack.c.bf16 %v2943, %v2943
        %v2981 = vpack.c.bf16 %v2945, %v2945
        %v2982 = vpack.c.bf16 %v2948, %v2948
        %v2983 = vpack.c.bf16 %v2950, %v2950
        %3016 = vrot.lane.b32.xlu0 %v2952, 32
        %v3017 = vpop.permute.xlu0 %3016
        %3018 = vrot.lane.b32.xlu0 %v2953, 32
        %v3019 = vpop.permute.xlu0 %3018
        %3020 = vrot.lane.b32.xlu0 %v2954, 32
        %v3021 = vpop.permute.xlu0 %3020
        %3022 = vrot.lane.b32.xlu0 %v2955, 32
        %v3023 = vpop.permute.xlu0 %3022
        %3024 = vrot.lane.b32.xlu0 %v2956, 32
        %v3025 = vpop.permute.xlu0 %3024
        %3026 = vrot.lane.b32.xlu0 %v2957, 32
        %v3027 = vpop.permute.xlu0 %3026
        %3028 = vrot.lane.b32.xlu0 %v2958, 32
        %v3029 = vpop.permute.xlu0 %3028
        %3030 = vrot.lane.b32.xlu0 %v2959, 32
        %v3031 = vpop.permute.xlu0 %3030
        %3032 = vrot.lane.b32.xlu0 %v2960, 32
        %v3033 = vpop.permute.xlu0 %3032
        %3034 = vrot.lane.b32.xlu0 %v2961, 32
        %v3035 = vpop.permute.xlu0 %3034
        %3036 = vrot.lane.b32.xlu0 %v2962, 32
        %v3037 = vpop.permute.xlu0 %3036
        %3038 = vrot.lane.b32.xlu0 %v2963, 32
        %v3039 = vpop.permute.xlu0 %3038
        %3040 = vrot.lane.b32.xlu0 %v2964, 32
        %v3041 = vpop.permute.xlu0 %3040
        %3042 = vrot.lane.b32.xlu0 %v2965, 32
        %v3043 = vpop.permute.xlu0 %3042
        %3044 = vrot.lane.b32.xlu0 %v2966, 32
        %v3045 = vpop.permute.xlu0 %3044
        %3046 = vrot.lane.b32.xlu0 %v2967, 32
        %v3047 = vpop.permute.xlu0 %3046
        %3048 = vrot.lane.b32.xlu0 %v2968, 32
        %v3049 = vpop.permute.xlu0 %3048
        %3050 = vrot.lane.b32.xlu0 %v2969, 32
        %v3051 = vpop.permute.xlu0 %3050
        %3052 = vrot.lane.b32.xlu0 %v2970, 32
        %v3053 = vpop.permute.xlu0 %3052
        %3054 = vrot.lane.b32.xlu0 %v2971, 32
        %v3055 = vpop.permute.xlu0 %3054
        %3056 = vrot.lane.b32.xlu0 %v2972, 32
        %v3057 = vpop.permute.xlu0 %3056
        %3058 = vrot.lane.b32.xlu0 %v2973, 32
        %v3059 = vpop.permute.xlu0 %3058
        %3060 = vrot.lane.b32.xlu0 %v2974, 32
        %v3061 = vpop.permute.xlu0 %3060
        %3062 = vrot.lane.b32.xlu0 %v2975, 32
        %v3063 = vpop.permute.xlu0 %3062
        %3064 = vrot.lane.b32.xlu0 %v2976, 32
        %v3065 = vpop.permute.xlu0 %3064
        %3066 = vrot.lane.b32.xlu0 %v2977, 32
        %v3067 = vpop.permute.xlu0 %3066
        %3068 = vrot.lane.b32.xlu0 %v2978, 32
        %v3069 = vpop.permute.xlu0 %3068
        %3070 = vrot.lane.b32.xlu0 %v2979, 32
        %v3071 = vpop.permute.xlu0 %3070
        %3072 = vrot.lane.b32.xlu0 %v2980, 32
        %v3073 = vpop.permute.xlu0 %3072
        %3074 = vrot.lane.b32.xlu0 %v2981, 32
        %v3075 = vpop.permute.xlu0 %3074
        %3076 = vrot.lane.b32.xlu0 %v2982, 32
        %v3077 = vpop.permute.xlu0 %3076
        %3078 = vrot.lane.b32.xlu0 %v2983, 32
        %v3079 = vpop.permute.xlu0 %3078
        %vm3112 = vcmask 519424
        %3113 = vst.msk [vmem:[#allocation4] sm:$0xf] %vm3112, %v3017
        %3114 = vst.msk [vmem:[#allocation4 + $0x4] sm:$0xf] %vm3112, %v3019
        %3115 = vst.msk [vmem:[#allocation4 + $0x8] sm:$0xf] %vm3112, %v3021
        %3116 = vst.msk [vmem:[#allocation4 + $0xc] sm:$0xf] %vm3112, %v3023
        %3117 = vst.msk [vmem:[#allocation4 + $0x10] sm:$0xf] %vm3112, %v3025
        %3118 = vst.msk [vmem:[#allocation4 + $0x14] sm:$0xf] %vm3112, %v3027
        %3119 = vst.msk [vmem:[#allocation4 + $0x18] sm:$0xf] %vm3112, %v3029
        %3120 = vst.msk [vmem:[#allocation4 + $0x1c] sm:$0xf] %vm3112, %v3031
        %3121 = vst.msk [vmem:[#allocation4 + $0x20] sm:$0xf] %vm3112, %v3033
        %3122 = vst.msk [vmem:[#allocation4 + $0x24] sm:$0xf] %vm3112, %v3035
        %3123 = vst.msk [vmem:[#allocation4 + $0x28] sm:$0xf] %vm3112, %v3037
        %3124 = vst.msk [vmem:[#allocation4 + $0x2c] sm:$0xf] %vm3112, %v3039
        %3125 = vst.msk [vmem:[#allocation4 + $0x30] sm:$0xf] %vm3112, %v3041
        %3126 = vst.msk [vmem:[#allocation4 + $0x34] sm:$0xf] %vm3112, %v3043
        %3127 = vst.msk [vmem:[#allocation4 + $0x38] sm:$0xf] %vm3112, %v3045
        %3128 = vst.msk [vmem:[#allocation4 + $0x3c] sm:$0xf] %vm3112, %v3047
        %3129 = vst.msk [vmem:[#allocation4 + $0x40] sm:$0xf] %vm3112, %v3049
        %3130 = vst.msk [vmem:[#allocation4 + $0x44] sm:$0xf] %vm3112, %v3051
        %3131 = vst.msk [vmem:[#allocation4 + $0x48] sm:$0xf] %vm3112, %v3053
        %3132 = vst.msk [vmem:[#allocation4 + $0x4c] sm:$0xf] %vm3112, %v3055
        %3133 = vst.msk [vmem:[#allocation4 + $0x50] sm:$0xf] %vm3112, %v3057
        %3134 = vst.msk [vmem:[#allocation4 + $0x54] sm:$0xf] %vm3112, %v3059
        %3135 = vst.msk [vmem:[#allocation4 + $0x58] sm:$0xf] %vm3112, %v3061
        %3136 = vst.msk [vmem:[#allocation4 + $0x5c] sm:$0xf] %vm3112, %v3063
        %3137 = vst.msk [vmem:[#allocation4 + $0x60] sm:$0xf] %vm3112, %v3065
        %3138 = vst.msk [vmem:[#allocation4 + $0x64] sm:$0xf] %vm3112, %v3067
        %3139 = vst.msk [vmem:[#allocation4 + $0x68] sm:$0xf] %vm3112, %v3069
        %3140 = vst.msk [vmem:[#allocation4 + $0x6c] sm:$0xf] %vm3112, %v3071
        %3141 = vst.msk [vmem:[#allocation4 + $0x70] sm:$0xf] %vm3112, %v3073
        %3142 = vst.msk [vmem:[#allocation4 + $0x74] sm:$0xf] %vm3112, %v3075
        %3143 = vst.msk [vmem:[#allocation4 + $0x78] sm:$0xf] %vm3112, %v3077
        %3144 = vst.msk [vmem:[#allocation4 + $0x7c] sm:$0xf] %vm3112, %v3079
        %v3145 = vld [vmem:[#allocation2] sm:$0xf]
        %v3146 = vld [vmem:[#allocation2 + $0x4] sm:$0xf]
        %v3147 = vld [vmem:[#allocation2 + $0x8] sm:$0xf]
        %v3148 = vld [vmem:[#allocation2 + $0xc] sm:$0xf]
        %v3149 = vld [vmem:[#allocation2 + $0x10] sm:$0xf]
        %v3150 = vld [vmem:[#allocation2 + $0x14] sm:$0xf]
        %v3151 = vld [vmem:[#allocation2 + $0x18] sm:$0xf]
        %v3152 = vld [vmem:[#allocation2 + $0x1c] sm:$0xf]
        %v3153 = vld [vmem:[#allocation2 + $0x20] sm:$0xf]
        %v3154 = vld [vmem:[#allocation2 + $0x24] sm:$0xf]
        %v3155 = vld [vmem:[#allocation2 + $0x28] sm:$0xf]
        %v3156 = vld [vmem:[#allocation2 + $0x2c] sm:$0xf]
        %v3157 = vld [vmem:[#allocation2 + $0x30] sm:$0xf]
        %v3158 = vld [vmem:[#allocation2 + $0x34] sm:$0xf]
        %v3159 = vld [vmem:[#allocation2 + $0x38] sm:$0xf]
        %v3160 = vld [vmem:[#allocation2 + $0x3c] sm:$0xf]
        %v3161 = vld [vmem:[#allocation3] sm:$0xf]
        %v3162 = vld [vmem:[#allocation3 + $0x4] sm:$0xf]
        %v3163 = vld [vmem:[#allocation3 + $0x8] sm:$0xf]
        %v3164 = vld [vmem:[#allocation3 + $0xc] sm:$0xf]
        %v3165 = vld [vmem:[#allocation3 + $0x10] sm:$0xf]
        %v3166 = vld [vmem:[#allocation3 + $0x14] sm:$0xf]
        %v3167 = vld [vmem:[#allocation3 + $0x18] sm:$0xf]
        %v3168 = vld [vmem:[#allocation3 + $0x1c] sm:$0xf]
        %v3169 = vld [vmem:[#allocation3 + $0x20] sm:$0xf]
        %v3170 = vld [vmem:[#allocation3 + $0x24] sm:$0xf]
        %v3171 = vld [vmem:[#allocation3 + $0x28] sm:$0xf]
        %v3172 = vld [vmem:[#allocation3 + $0x2c] sm:$0xf]
        %v3173 = vld [vmem:[#allocation3 + $0x30] sm:$0xf]
        %v3174 = vld [vmem:[#allocation3 + $0x34] sm:$0xf]
        %v3175 = vld [vmem:[#allocation3 + $0x38] sm:$0xf]
        %v3176 = vld [vmem:[#allocation3 + $0x3c] sm:$0xf]
        %3177 = vrot.lane.b32.xlu0 %v1458, 64
        %v3178 = vpop.permute.xlu0 %3177
        %3179 = vrot.lane.b32.xlu0 %v1459, 64
        %v3180 = vpop.permute.xlu0 %3179
        %3181 = vrot.lane.b32.xlu0 %v1460, 64
        %v3182 = vpop.permute.xlu0 %3181
        %3183 = vrot.lane.b32.xlu0 %v1461, 64
        %v3184 = vpop.permute.xlu0 %3183
        %3185 = vrot.lane.b32.xlu0 %v1462, 64
        %v3186 = vpop.permute.xlu0 %3185
        %3187 = vrot.lane.b32.xlu0 %v1463, 64
        %v3188 = vpop.permute.xlu0 %3187
        %3189 = vrot.lane.b32.xlu0 %v1464, 64
        %v3190 = vpop.permute.xlu0 %3189
        %3191 = vrot.lane.b32.xlu0 %v1465, 64
        %v3192 = vpop.permute.xlu0 %3191
        %3193 = vrot.lane.b32.xlu0 %v1466, 64
        %v3194 = vpop.permute.xlu0 %3193
        %3195 = vrot.lane.b32.xlu0 %v1467, 64
        %v3196 = vpop.permute.xlu0 %3195
        %3197 = vrot.lane.b32.xlu0 %v1468, 64
        %v3198 = vpop.permute.xlu0 %3197
        %3199 = vrot.lane.b32.xlu0 %v1469, 64
        %v3200 = vpop.permute.xlu0 %3199
        %3201 = vrot.lane.b32.xlu0 %v1470, 64
        %v3202 = vpop.permute.xlu0 %3201
        %3203 = vrot.lane.b32.xlu0 %v1471, 64
        %v3204 = vpop.permute.xlu0 %3203
        %3205 = vrot.lane.b32.xlu0 %v1472, 64
        %v3206 = vpop.permute.xlu0 %3205
        %3207 = vrot.lane.b32.xlu0 %v1473, 64
        %v3208 = vpop.permute.xlu0 %3207
        %v3225 = vunpack.c.l.b16 %v3145
        %v3226 = vunpack.c.l.b16 %v3146
        %v3227 = vunpack.c.l.b16 %v3147
        %v3228 = vunpack.c.l.b16 %v3148
        %v3229 = vunpack.c.l.b16 %v3149
        %v3230 = vunpack.c.l.b16 %v3150
        %v3231 = vunpack.c.l.b16 %v3151
        %v3232 = vunpack.c.l.b16 %v3152
        %v3233 = vunpack.c.l.b16 %v3153
        %v3234 = vunpack.c.l.b16 %v3154
        %v3235 = vunpack.c.l.b16 %v3155
        %v3236 = vunpack.c.l.b16 %v3156
        %v3237 = vunpack.c.l.b16 %v3157
        %v3238 = vunpack.c.l.b16 %v3158
        %v3239 = vunpack.c.l.b16 %v3159
        %v3240 = vunpack.c.l.b16 %v3160
        %v3241 = vpack.c.b16 %v3226, %v3225
        %v3242 = vpack.c.b16 %v3228, %v3227
        %v3243 = vpack.c.b16 %v3230, %v3229
        %v3244 = vpack.c.b16 %v3232, %v3231
        %v3245 = vpack.c.b16 %v3234, %v3233
        %v3246 = vpack.c.b16 %v3236, %v3235
        %v3247 = vpack.c.b16 %v3238, %v3237
        %v3248 = vpack.c.b16 %v3240, %v3239
        %3249 = vrot.lane.b32.xlu0 %v3241, 64
        %v3250 = vpop.permute.xlu0 %3249
        %3251 = vrot.lane.b32.xlu0 %v3242, 64
        %v3252 = vpop.permute.xlu0 %3251
        %3253 = vrot.lane.b32.xlu0 %v3243, 64
        %v3254 = vpop.permute.xlu0 %3253
        %3255 = vrot.lane.b32.xlu0 %v3244, 64
        %v3256 = vpop.permute.xlu0 %3255
        %3257 = vrot.lane.b32.xlu0 %v3245, 64
        %v3258 = vpop.permute.xlu0 %3257
        %3259 = vrot.lane.b32.xlu0 %v3246, 64
        %v3260 = vpop.permute.xlu0 %3259
        %3261 = vrot.lane.b32.xlu0 %v3247, 64
        %v3262 = vpop.permute.xlu0 %3261
        %3263 = vrot.lane.b32.xlu0 %v3248, 64
        %v3264 = vpop.permute.xlu0 %3263
        %v3266 = vsel %vm1514, %v3178, 0
        %v3269 = vsel %vm1514, %v3180, 0
        %v3272 = vsel %vm1514, %v3182, 0
        %v3275 = vsel %vm1514, %v3184, 0
        %v3278 = vsel %vm1514, %v3186, 0
        %v3281 = vsel %vm1514, %v3188, 0
        %v3284 = vsel %vm1514, %v3190, 0
        %v3287 = vsel %vm1514, %v3192, 0
        %v3290 = vsel %vm1514, %v3194, 0
        %v3293 = vsel %vm1514, %v3196, 0
        %v3296 = vsel %vm1514, %v3198, 0
        %v3299 = vsel %vm1514, %v3200, 0
        %v3302 = vsel %vm1514, %v3202, 0
        %v3305 = vsel %vm1514, %v3204, 0
        %v3308 = vsel %vm1514, %v3206, 0
        %v3311 = vsel %vm1514, %v3208, 0
        %v3314 = vsel %vm1514, %v3250, 0
        %v3317 = vsel %vm1514, %v3252, 0
        %v3320 = vsel %vm1514, %v3254, 0
        %v3323 = vsel %vm1514, %v3256, 0
        %v3326 = vsel %vm1514, %v3258, 0
        %v3329 = vsel %vm1514, %v3260, 0
        %v3332 = vsel %vm1514, %v3262, 0
        %v3335 = vsel %vm1514, %v3264, 0
        %3337 = vmatpush.bf16.xpose.msra.mxu0 %v3335
        %3338 = vmatpush.bf16.xpose.msra.mxu0 %v3332
        %3339 = vmatpush.bf16.xpose.msra.mxu0 %v3329
        %3340 = vmatpush.bf16.xpose.msra.mxu0 %v3326
        %3341 = vmatpush.bf16.xpose.msra.mxu0 %v3323
        %3342 = vmatpush.bf16.xpose.msra.mxu0 %v3320
        %3343 = vmatpush.bf16.xpose.msra.mxu0 %v3317
        %3344 = vmatpush.bf16.xpose.msra.mxu0 %v3314
        %3345 = vmatmul.bf16.gmra.mxu0 %v3266
        %v3346 = vpop.f32.mrf.mxu0
        %v3347 = vadd.f32 0.0, %v3346
        %v3348 = vpop.f32.mrf.mxu0
        %v3349 = vadd.f32 0.0, %v3348
        %3350 = vmatmul.bf16.gmra.mxu0 %v3269
        %v3351 = vpop.f32.mrf.mxu0
        %v3352 = vadd.f32 0.0, %v3351
        %v3353 = vpop.f32.mrf.mxu0
        %v3354 = vadd.f32 0.0, %v3353
        %3355 = vmatmul.bf16.gmra.mxu0 %v3272
        %v3356 = vpop.f32.mrf.mxu0
        %v3357 = vadd.f32 0.0, %v3356
        %v3358 = vpop.f32.mrf.mxu0
        %v3359 = vadd.f32 0.0, %v3358
        %3360 = vmatmul.bf16.gmra.mxu0 %v3275
        %v3361 = vpop.f32.mrf.mxu0
        %v3362 = vadd.f32 0.0, %v3361
        %v3363 = vpop.f32.mrf.mxu0
        %v3364 = vadd.f32 0.0, %v3363
        %3365 = vmatmul.bf16.gmra.mxu0 %v3278
        %v3366 = vpop.f32.mrf.mxu0
        %v3367 = vadd.f32 0.0, %v3366
        %v3368 = vpop.f32.mrf.mxu0
        %v3369 = vadd.f32 0.0, %v3368
        %3370 = vmatmul.bf16.gmra.mxu0 %v3281
        %v3371 = vpop.f32.mrf.mxu0
        %v3372 = vadd.f32 0.0, %v3371
        %v3373 = vpop.f32.mrf.mxu0
        %v3374 = vadd.f32 0.0, %v3373
        %3375 = vmatmul.bf16.gmra.mxu0 %v3284
        %v3376 = vpop.f32.mrf.mxu0
        %v3377 = vadd.f32 0.0, %v3376
        %v3378 = vpop.f32.mrf.mxu0
        %v3379 = vadd.f32 0.0, %v3378
        %3380 = vmatmul.bf16.gmra.mxu0 %v3287
        %v3381 = vpop.f32.mrf.mxu0
        %v3382 = vadd.f32 0.0, %v3381
        %v3383 = vpop.f32.mrf.mxu0
        %v3384 = vadd.f32 0.0, %v3383
        %3385 = vmatmul.bf16.gmra.mxu0 %v3290
        %v3386 = vpop.f32.mrf.mxu0
        %v3387 = vadd.f32 0.0, %v3386
        %v3388 = vpop.f32.mrf.mxu0
        %v3389 = vadd.f32 0.0, %v3388
        %3390 = vmatmul.bf16.gmra.mxu0 %v3293
        %v3391 = vpop.f32.mrf.mxu0
        %v3392 = vadd.f32 0.0, %v3391
        %v3393 = vpop.f32.mrf.mxu0
        %v3394 = vadd.f32 0.0, %v3393
        %3395 = vmatmul.bf16.gmra.mxu0 %v3296
        %v3396 = vpop.f32.mrf.mxu0
        %v3397 = vadd.f32 0.0, %v3396
        %v3398 = vpop.f32.mrf.mxu0
        %v3399 = vadd.f32 0.0, %v3398
        %3400 = vmatmul.bf16.gmra.mxu0 %v3299
        %v3401 = vpop.f32.mrf.mxu0
        %v3402 = vadd.f32 0.0, %v3401
        %v3403 = vpop.f32.mrf.mxu0
        %v3404 = vadd.f32 0.0, %v3403
        %3405 = vmatmul.bf16.gmra.mxu0 %v3302
        %v3406 = vpop.f32.mrf.mxu0
        %v3407 = vadd.f32 0.0, %v3406
        %v3408 = vpop.f32.mrf.mxu0
        %v3409 = vadd.f32 0.0, %v3408
        %3410 = vmatmul.bf16.gmra.mxu0 %v3305
        %v3411 = vpop.f32.mrf.mxu0
        %v3412 = vadd.f32 0.0, %v3411
        %v3413 = vpop.f32.mrf.mxu0
        %v3414 = vadd.f32 0.0, %v3413
        %3415 = vmatmul.bf16.gmra.mxu0 %v3308
        %v3416 = vpop.f32.mrf.mxu0
        %v3417 = vadd.f32 0.0, %v3416
        %v3418 = vpop.f32.mrf.mxu0
        %v3419 = vadd.f32 0.0, %v3418
        %3420 = vmatmul.bf16.gmra.mxu0 %v3311
        %v3421 = vpop.f32.mrf.mxu0
        %v3422 = vadd.f32 0.0, %v3421
        %v3423 = vpop.f32.mrf.mxu0
        %v3424 = vadd.f32 0.0, %v3423
        %3425 = vdwg.mxu0
        %3426 = vmax.xlane.f32.xlu0 %v3347
        %v3427 = vpop.xlane.xlu0 %3426
        %3428 = vmax.xlane.f32.xlu0 %v3349
        %v3429 = vpop.xlane.xlu0 %3428
        %3430 = vmax.xlane.f32.xlu0 %v3352
        %v3431 = vpop.xlane.xlu0 %3430
        %3432 = vmax.xlane.f32.xlu0 %v3354
        %v3433 = vpop.xlane.xlu0 %3432
        %3434 = vmax.xlane.f32.xlu0 %v3357
        %v3435 = vpop.xlane.xlu0 %3434
        %3436 = vmax.xlane.f32.xlu0 %v3359
        %v3437 = vpop.xlane.xlu0 %3436
        %3438 = vmax.xlane.f32.xlu0 %v3362
        %v3439 = vpop.xlane.xlu0 %3438
        %3440 = vmax.xlane.f32.xlu0 %v3364
        %v3441 = vpop.xlane.xlu0 %3440
        %3442 = vmax.xlane.f32.xlu0 %v3367
        %v3443 = vpop.xlane.xlu0 %3442
        %3444 = vmax.xlane.f32.xlu0 %v3369
        %v3445 = vpop.xlane.xlu0 %3444
        %3446 = vmax.xlane.f32.xlu0 %v3372
        %v3447 = vpop.xlane.xlu0 %3446
        %3448 = vmax.xlane.f32.xlu0 %v3374
        %v3449 = vpop.xlane.xlu0 %3448
        %3450 = vmax.xlane.f32.xlu0 %v3377
        %v3451 = vpop.xlane.xlu0 %3450
        %3452 = vmax.xlane.f32.xlu0 %v3379
        %v3453 = vpop.xlane.xlu0 %3452
        %3454 = vmax.xlane.f32.xlu0 %v3382
        %v3455 = vpop.xlane.xlu0 %3454
        %3456 = vmax.xlane.f32.xlu0 %v3384
        %v3457 = vpop.xlane.xlu0 %3456
        %3458 = vmax.xlane.f32.xlu0 %v3387
        %v3459 = vpop.xlane.xlu0 %3458
        %3460 = vmax.xlane.f32.xlu0 %v3389
        %v3461 = vpop.xlane.xlu0 %3460
        %3462 = vmax.xlane.f32.xlu0 %v3392
        %v3463 = vpop.xlane.xlu0 %3462
        %3464 = vmax.xlane.f32.xlu0 %v3394
        %v3465 = vpop.xlane.xlu0 %3464
        %3466 = vmax.xlane.f32.xlu0 %v3397
        %v3467 = vpop.xlane.xlu0 %3466
        %3468 = vmax.xlane.f32.xlu0 %v3399
        %v3469 = vpop.xlane.xlu0 %3468
        %3470 = vmax.xlane.f32.xlu0 %v3402
        %v3471 = vpop.xlane.xlu0 %3470
        %3472 = vmax.xlane.f32.xlu0 %v3404
        %v3473 = vpop.xlane.xlu0 %3472
        %3474 = vmax.xlane.f32.xlu0 %v3407
        %v3475 = vpop.xlane.xlu0 %3474
        %3476 = vmax.xlane.f32.xlu0 %v3409
        %v3477 = vpop.xlane.xlu0 %3476
        %3478 = vmax.xlane.f32.xlu0 %v3412
        %v3479 = vpop.xlane.xlu0 %3478
        %3480 = vmax.xlane.f32.xlu0 %v3414
        %v3481 = vpop.xlane.xlu0 %3480
        %3482 = vmax.xlane.f32.xlu0 %v3417
        %v3483 = vpop.xlane.xlu0 %3482
        %3484 = vmax.xlane.f32.xlu0 %v3419
        %v3485 = vpop.xlane.xlu0 %3484
        %3486 = vmax.xlane.f32.xlu0 %v3422
        %v3487 = vpop.xlane.xlu0 %3486
        %3488 = vmax.xlane.f32.xlu0 %v3424
        %v3489 = vpop.xlane.xlu0 %3488
        %v3490 = vsub.f32 %v3347, %v3427
        %v3491 = vsub.f32 %v3349, %v3429
        %v3492 = vsub.f32 %v3352, %v3431
        %v3493 = vsub.f32 %v3354, %v3433
        %v3494 = vsub.f32 %v3357, %v3435
        %v3495 = vsub.f32 %v3359, %v3437
        %v3496 = vsub.f32 %v3362, %v3439
        %v3497 = vsub.f32 %v3364, %v3441
        %v3498 = vsub.f32 %v3367, %v3443
        %v3499 = vsub.f32 %v3369, %v3445
        %v3500 = vsub.f32 %v3372, %v3447
        %v3501 = vsub.f32 %v3374, %v3449
        %v3502 = vsub.f32 %v3377, %v3451
        %v3503 = vsub.f32 %v3379, %v3453
        %v3504 = vsub.f32 %v3382, %v3455
        %v3505 = vsub.f32 %v3384, %v3457
        %v3506 = vsub.f32 %v3387, %v3459
        %v3507 = vsub.f32 %v3389, %v3461
        %v3508 = vsub.f32 %v3392, %v3463
        %v3509 = vsub.f32 %v3394, %v3465
        %v3510 = vsub.f32 %v3397, %v3467
        %v3511 = vsub.f32 %v3399, %v3469
        %v3512 = vsub.f32 %v3402, %v3471
        %v3513 = vsub.f32 %v3404, %v3473
        %v3514 = vsub.f32 %v3407, %v3475
        %v3515 = vsub.f32 %v3409, %v3477
        %v3516 = vsub.f32 %v3412, %v3479
        %v3517 = vsub.f32 %v3414, %v3481
        %v3518 = vsub.f32 %v3417, %v3483
        %v3519 = vsub.f32 %v3419, %v3485
        %v3520 = vsub.f32 %v3422, %v3487
        %v3521 = vsub.f32 %v3424, %v3489
        %v3522 = vmul.f32 %v3490, 1.442695
        %v3523 = vpow.pop %v3522
        %v3524 = vmul.f32 %v3491, 1.442695
        %v3525 = vpow.pop %v3524
        %v3526 = vmul.f32 %v3492, 1.442695
        %v3527 = vpow.pop %v3526
        %v3528 = vmul.f32 %v3493, 1.442695
        %v3529 = vpow.pop %v3528
        %v3530 = vmul.f32 %v3494, 1.442695
        %v3531 = vpow.pop %v3530
        %v3532 = vmul.f32 %v3495, 1.442695
        %v3533 = vpow.pop %v3532
        %v3534 = vmul.f32 %v3496, 1.442695
        %v3535 = vpow.pop %v3534
        %v3536 = vmul.f32 %v3497, 1.442695
        %v3537 = vpow.pop %v3536
        %v3538 = vmul.f32 %v3498, 1.442695
        %v3539 = vpow.pop %v3538
        %v3540 = vmul.f32 %v3499, 1.442695
        %v3541 = vpow.pop %v3540
        %v3542 = vmul.f32 %v3500, 1.442695
        %v3543 = vpow.pop %v3542
        %v3544 = vmul.f32 %v3501, 1.442695
        %v3545 = vpow.pop %v3544
        %v3546 = vmul.f32 %v3502, 1.442695
        %v3547 = vpow.pop %v3546
        %v3548 = vmul.f32 %v3503, 1.442695
        %v3549 = vpow.pop %v3548
        %v3550 = vmul.f32 %v3504, 1.442695
        %v3551 = vpow.pop %v3550
        %v3552 = vmul.f32 %v3505, 1.442695
        %v3553 = vpow.pop %v3552
        %v3554 = vmul.f32 %v3506, 1.442695
        %v3555 = vpow.pop %v3554
        %v3556 = vmul.f32 %v3507, 1.442695
        %v3557 = vpow.pop %v3556
        %v3558 = vmul.f32 %v3508, 1.442695
        %v3559 = vpow.pop %v3558
        %v3560 = vmul.f32 %v3509, 1.442695
        %v3561 = vpow.pop %v3560
        %v3562 = vmul.f32 %v3510, 1.442695
        %v3563 = vpow.pop %v3562
        %v3564 = vmul.f32 %v3511, 1.442695
        %v3565 = vpow.pop %v3564
        %v3566 = vmul.f32 %v3512, 1.442695
        %v3567 = vpow.pop %v3566
        %v3568 = vmul.f32 %v3513, 1.442695
        %v3569 = vpow.pop %v3568
        %v3570 = vmul.f32 %v3514, 1.442695
        %v3571 = vpow.pop %v3570
        %v3572 = vmul.f32 %v3515, 1.442695
        %v3573 = vpow.pop %v3572
        %v3574 = vmul.f32 %v3516, 1.442695
        %v3575 = vpow.pop %v3574
        %v3576 = vmul.f32 %v3517, 1.442695
        %v3577 = vpow.pop %v3576
        %v3578 = vmul.f32 %v3518, 1.442695
        %v3579 = vpow.pop %v3578
        %v3580 = vmul.f32 %v3519, 1.442695
        %v3581 = vpow.pop %v3580
        %v3582 = vmul.f32 %v3520, 1.442695
        %v3583 = vpow.pop %v3582
        %v3584 = vmul.f32 %v3521, 1.442695
        %v3585 = vpow.pop %v3584
        %3586 = vadd.xlane.f32.xlu0 %v3523
        %v3587 = vpop.xlane.xlu0 %3586
        %3588 = vadd.xlane.f32.xlu0 %v3525
        %v3589 = vpop.xlane.xlu0 %3588
        %3590 = vadd.xlane.f32.xlu0 %v3527
        %v3591 = vpop.xlane.xlu0 %3590
        %3592 = vadd.xlane.f32.xlu0 %v3529
        %v3593 = vpop.xlane.xlu0 %3592
        %3594 = vadd.xlane.f32.xlu0 %v3531
        %v3595 = vpop.xlane.xlu0 %3594
        %3596 = vadd.xlane.f32.xlu0 %v3533
        %v3597 = vpop.xlane.xlu0 %3596
        %3598 = vadd.xlane.f32.xlu0 %v3535
        %v3599 = vpop.xlane.xlu0 %3598
        %3600 = vadd.xlane.f32.xlu0 %v3537
        %v3601 = vpop.xlane.xlu0 %3600
        %3602 = vadd.xlane.f32.xlu0 %v3539
        %v3603 = vpop.xlane.xlu0 %3602
        %3604 = vadd.xlane.f32.xlu0 %v3541
        %v3605 = vpop.xlane.xlu0 %3604
        %3606 = vadd.xlane.f32.xlu0 %v3543
        %v3607 = vpop.xlane.xlu0 %3606
        %3608 = vadd.xlane.f32.xlu0 %v3545
        %v3609 = vpop.xlane.xlu0 %3608
        %3610 = vadd.xlane.f32.xlu0 %v3547
        %v3611 = vpop.xlane.xlu0 %3610
        %3612 = vadd.xlane.f32.xlu0 %v3549
        %v3613 = vpop.xlane.xlu0 %3612
        %3614 = vadd.xlane.f32.xlu0 %v3551
        %v3615 = vpop.xlane.xlu0 %3614
        %3616 = vadd.xlane.f32.xlu0 %v3553
        %v3617 = vpop.xlane.xlu0 %3616
        %3618 = vadd.xlane.f32.xlu0 %v3555
        %v3619 = vpop.xlane.xlu0 %3618
        %3620 = vadd.xlane.f32.xlu0 %v3557
        %v3621 = vpop.xlane.xlu0 %3620
        %3622 = vadd.xlane.f32.xlu0 %v3559
        %v3623 = vpop.xlane.xlu0 %3622
        %3624 = vadd.xlane.f32.xlu0 %v3561
        %v3625 = vpop.xlane.xlu0 %3624
        %3626 = vadd.xlane.f32.xlu0 %v3563
        %v3627 = vpop.xlane.xlu0 %3626
        %3628 = vadd.xlane.f32.xlu0 %v3565
        %v3629 = vpop.xlane.xlu0 %3628
        %3630 = vadd.xlane.f32.xlu0 %v3567
        %v3631 = vpop.xlane.xlu0 %3630
        %3632 = vadd.xlane.f32.xlu0 %v3569
        %v3633 = vpop.xlane.xlu0 %3632
        %3634 = vadd.xlane.f32.xlu0 %v3571
        %v3635 = vpop.xlane.xlu0 %3634
        %3636 = vadd.xlane.f32.xlu0 %v3573
        %v3637 = vpop.xlane.xlu0 %3636
        %3638 = vadd.xlane.f32.xlu0 %v3575
        %v3639 = vpop.xlane.xlu0 %3638
        %3640 = vadd.xlane.f32.xlu0 %v3577
        %v3641 = vpop.xlane.xlu0 %3640
        %3642 = vadd.xlane.f32.xlu0 %v3579
        %v3643 = vpop.xlane.xlu0 %3642
        %3644 = vadd.xlane.f32.xlu0 %v3581
        %v3645 = vpop.xlane.xlu0 %3644
        %3646 = vadd.xlane.f32.xlu0 %v3583
        %v3647 = vpop.xlane.xlu0 %3646
        %3648 = vadd.xlane.f32.xlu0 %v3585
        %v3649 = vpop.xlane.xlu0 %3648
        %v3650 = vrcp.pop %v3587
        %v3651 = vrcp.pop %v3589
        %v3652 = vrcp.pop %v3591
        %v3653 = vrcp.pop %v3593
        %v3654 = vrcp.pop %v3595
        %v3655 = vrcp.pop %v3597
        %v3656 = vrcp.pop %v3599
        %v3657 = vrcp.pop %v3601
        %v3658 = vrcp.pop %v3603
        %v3659 = vrcp.pop %v3605
        %v3660 = vrcp.pop %v3607
        %v3661 = vrcp.pop %v3609
        %v3662 = vrcp.pop %v3611
        %v3663 = vrcp.pop %v3613
        %v3664 = vrcp.pop %v3615
        %v3665 = vrcp.pop %v3617
        %v3666 = vrcp.pop %v3619
        %v3667 = vrcp.pop %v3621
        %v3668 = vrcp.pop %v3623
        %v3669 = vrcp.pop %v3625
        %v3670 = vrcp.pop %v3627
        %v3671 = vrcp.pop %v3629
        %v3672 = vrcp.pop %v3631
        %v3673 = vrcp.pop %v3633
        %v3674 = vrcp.pop %v3635
        %v3675 = vrcp.pop %v3637
        %v3676 = vrcp.pop %v3639
        %v3677 = vrcp.pop %v3641
        %v3678 = vrcp.pop %v3643
        %v3679 = vrcp.pop %v3645
        %v3680 = vrcp.pop %v3647
        %v3681 = vrcp.pop %v3649
        %v3682 = vmul.f32 %v3523, %v3650
        %v3683 = vmul.f32 %v3525, %v3651
        %v3684 = vmul.f32 %v3527, %v3652
        %v3685 = vmul.f32 %v3529, %v3653
        %v3686 = vmul.f32 %v3531, %v3654
        %v3687 = vmul.f32 %v3533, %v3655
        %v3688 = vmul.f32 %v3535, %v3656
        %v3689 = vmul.f32 %v3537, %v3657
        %v3690 = vmul.f32 %v3539, %v3658
        %v3691 = vmul.f32 %v3541, %v3659
        %v3692 = vmul.f32 %v3543, %v3660
        %v3693 = vmul.f32 %v3545, %v3661
        %v3694 = vmul.f32 %v3547, %v3662
        %v3695 = vmul.f32 %v3549, %v3663
        %v3696 = vmul.f32 %v3551, %v3664
        %v3697 = vmul.f32 %v3553, %v3665
        %v3698 = vmul.f32 %v3555, %v3666
        %v3699 = vmul.f32 %v3557, %v3667
        %v3700 = vmul.f32 %v3559, %v3668
        %v3701 = vmul.f32 %v3561, %v3669
        %v3702 = vmul.f32 %v3563, %v3670
        %v3703 = vmul.f32 %v3565, %v3671
        %v3704 = vmul.f32 %v3567, %v3672
        %v3705 = vmul.f32 %v3569, %v3673
        %v3706 = vmul.f32 %v3571, %v3674
        %v3707 = vmul.f32 %v3573, %v3675
        %v3708 = vmul.f32 %v3575, %v3676
        %v3709 = vmul.f32 %v3577, %v3677
        %v3710 = vmul.f32 %v3579, %v3678
        %v3711 = vmul.f32 %v3581, %v3679
        %v3712 = vmul.f32 %v3583, %v3680
        %v3713 = vmul.f32 %v3585, %v3681
        %v3714 = vmax.f32 %v2751, %v3682
        %v3715 = vmax.f32 %v2752, %v3683
        %v3716 = vmax.f32 %v2753, %v3684
        %v3717 = vmax.f32 %v2754, %v3685
        %v3718 = vmax.f32 %v2755, %v3686
        %v3719 = vmax.f32 %v2756, %v3687
        %v3720 = vmax.f32 %v2757, %v3688
        %v3721 = vmax.f32 %v2758, %v3689
        %v3722 = vmax.f32 %v2759, %v3690
        %v3723 = vmax.f32 %v2760, %v3691
        %v3724 = vmax.f32 %v2761, %v3692
        %v3725 = vmax.f32 %v2762, %v3693
        %v3726 = vmax.f32 %v2763, %v3694
        %v3727 = vmax.f32 %v2764, %v3695
        %v3728 = vmax.f32 %v2765, %v3696
        %v3729 = vmax.f32 %v2766, %v3697
        %v3730 = vmax.f32 %v2767, %v3698
        %v3731 = vmax.f32 %v2768, %v3699
        %v3732 = vmax.f32 %v2769, %v3700
        %v3733 = vmax.f32 %v2770, %v3701
        %v3734 = vmax.f32 %v2771, %v3702
        %v3735 = vmax.f32 %v2772, %v3703
        %v3736 = vmax.f32 %v2773, %v3704
        %v3737 = vmax.f32 %v2774, %v3705
        %v3738 = vmax.f32 %v2775, %v3706
        %v3739 = vmax.f32 %v2776, %v3707
        %v3740 = vmax.f32 %v2777, %v3708
        %v3741 = vmax.f32 %v2778, %v3709
        %v3742 = vmax.f32 %v2779, %v3710
        %v3743 = vmax.f32 %v2780, %v3711
        %v3744 = vmax.f32 %v2781, %v3712
        %v3745 = vmax.f32 %v2782, %v3713
        %v3746 = vpack.c.bf16 %v3683, %v3682
        %v3747 = vpack.c.bf16 %v3685, %v3684
        %v3748 = vpack.c.bf16 %v3687, %v3686
        %v3749 = vpack.c.bf16 %v3689, %v3688
        %v3750 = vpack.c.bf16 %v3691, %v3690
        %v3751 = vpack.c.bf16 %v3693, %v3692
        %v3752 = vpack.c.bf16 %v3695, %v3694
        %v3753 = vpack.c.bf16 %v3697, %v3696
        %v3754 = vpack.c.bf16 %v3699, %v3698
        %v3755 = vpack.c.bf16 %v3701, %v3700
        %v3756 = vpack.c.bf16 %v3703, %v3702
        %v3757 = vpack.c.bf16 %v3705, %v3704
        %v3758 = vpack.c.bf16 %v3707, %v3706
        %v3759 = vpack.c.bf16 %v3709, %v3708
        %v3760 = vpack.c.bf16 %v3711, %v3710
        %v3761 = vpack.c.bf16 %v3713, %v3712
        %v3778 = vunpack.c.l.b16 %v3161
        %v3779 = vunpack.c.l.b16 %v3162
        %v3780 = vunpack.c.l.b16 %v3163
        %v3781 = vunpack.c.l.b16 %v3164
        %v3782 = vunpack.c.l.b16 %v3165
        %v3783 = vunpack.c.l.b16 %v3166
        %v3784 = vunpack.c.l.b16 %v3167
        %v3785 = vunpack.c.l.b16 %v3168
        %v3786 = vunpack.c.l.b16 %v3169
        %v3787 = vunpack.c.l.b16 %v3170
        %v3788 = vunpack.c.l.b16 %v3171
        %v3789 = vunpack.c.l.b16 %v3172
        %v3790 = vunpack.c.l.b16 %v3173
        %v3791 = vunpack.c.l.b16 %v3174
        %v3792 = vunpack.c.l.b16 %v3175
        %v3793 = vunpack.c.l.b16 %v3176
        %v3794 = vpack.c.b16 %v3779, %v3778
        %v3795 = vpack.c.b16 %v3781, %v3780
        %v3796 = vpack.c.b16 %v3783, %v3782
        %v3797 = vpack.c.b16 %v3785, %v3784
        %v3798 = vpack.c.b16 %v3787, %v3786
        %v3799 = vpack.c.b16 %v3789, %v3788
        %v3800 = vpack.c.b16 %v3791, %v3790
        %v3801 = vpack.c.b16 %v3793, %v3792
        %3802 = vrot.lane.b32.xlu0 %v3794, 64
        %v3803 = vpop.permute.xlu0 %3802
        %3804 = vrot.lane.b32.xlu0 %v3795, 64
        %v3805 = vpop.permute.xlu0 %3804
        %3806 = vrot.lane.b32.xlu0 %v3796, 64
        %v3807 = vpop.permute.xlu0 %3806
        %3808 = vrot.lane.b32.xlu0 %v3797, 64
        %v3809 = vpop.permute.xlu0 %3808
        %3810 = vrot.lane.b32.xlu0 %v3798, 64
        %v3811 = vpop.permute.xlu0 %3810
        %3812 = vrot.lane.b32.xlu0 %v3799, 64
        %v3813 = vpop.permute.xlu0 %3812
        %3814 = vrot.lane.b32.xlu0 %v3800, 64
        %v3815 = vpop.permute.xlu0 %3814
        %3816 = vrot.lane.b32.xlu0 %v3801, 64
        %v3817 = vpop.permute.xlu0 %3816
        %3826 = vmatpush.bf16.msra.mxu0 %v3817
        %3827 = vmatpush.bf16.msra.mxu0 %v3815
        %3828 = vmatpush.bf16.msra.mxu0 %v3813
        %3829 = vmatpush.bf16.msra.mxu0 %v3811
        %3830 = vmatpush.bf16.msra.mxu0 %v3809
        %3831 = vmatpush.bf16.msra.mxu0 %v3807
        %3832 = vmatpush.bf16.msra.mxu0 %v3805
        %3833 = vmatpush.bf16.msra.mxu0 %v3803
        %3834 = vmatmul.bf16.gmra.mxu0 %v3746
        %v3835 = vpop.f32.mrf.mxu0
        %v3836 = vadd.f32 0.0, %v3835
        %v3837 = vpop.f32.mrf.mxu0
        %v3838 = vadd.f32 0.0, %v3837
        %3839 = vmatmul.bf16.gmra.mxu0 %v3747
        %v3840 = vpop.f32.mrf.mxu0
        %v3841 = vadd.f32 0.0, %v3840
        %v3842 = vpop.f32.mrf.mxu0
        %v3843 = vadd.f32 0.0, %v3842
        %3844 = vmatmul.bf16.gmra.mxu0 %v3748
        %v3845 = vpop.f32.mrf.mxu0
        %v3846 = vadd.f32 0.0, %v3845
        %v3847 = vpop.f32.mrf.mxu0
        %v3848 = vadd.f32 0.0, %v3847
        %3849 = vmatmul.bf16.gmra.mxu0 %v3749
        %v3850 = vpop.f32.mrf.mxu0
        %v3851 = vadd.f32 0.0, %v3850
        %v3852 = vpop.f32.mrf.mxu0
        %v3853 = vadd.f32 0.0, %v3852
        %3854 = vmatmul.bf16.gmra.mxu0 %v3750
        %v3855 = vpop.f32.mrf.mxu0
        %v3856 = vadd.f32 0.0, %v3855
        %v3857 = vpop.f32.mrf.mxu0
        %v3858 = vadd.f32 0.0, %v3857
        %3859 = vmatmul.bf16.gmra.mxu0 %v3751
        %v3860 = vpop.f32.mrf.mxu0
        %v3861 = vadd.f32 0.0, %v3860
        %v3862 = vpop.f32.mrf.mxu0
        %v3863 = vadd.f32 0.0, %v3862
        %3864 = vmatmul.bf16.gmra.mxu0 %v3752
        %v3865 = vpop.f32.mrf.mxu0
        %v3866 = vadd.f32 0.0, %v3865
        %v3867 = vpop.f32.mrf.mxu0
        %v3868 = vadd.f32 0.0, %v3867
        %3869 = vmatmul.bf16.gmra.mxu0 %v3753
        %v3870 = vpop.f32.mrf.mxu0
        %v3871 = vadd.f32 0.0, %v3870
        %v3872 = vpop.f32.mrf.mxu0
        %v3873 = vadd.f32 0.0, %v3872
        %3874 = vmatmul.bf16.gmra.mxu0 %v3754
        %v3875 = vpop.f32.mrf.mxu0
        %v3876 = vadd.f32 0.0, %v3875
        %v3877 = vpop.f32.mrf.mxu0
        %v3878 = vadd.f32 0.0, %v3877
        %3879 = vmatmul.bf16.gmra.mxu0 %v3755
        %v3880 = vpop.f32.mrf.mxu0
        %v3881 = vadd.f32 0.0, %v3880
        %v3882 = vpop.f32.mrf.mxu0
        %v3883 = vadd.f32 0.0, %v3882
        %3884 = vmatmul.bf16.gmra.mxu0 %v3756
        %v3885 = vpop.f32.mrf.mxu0
        %v3886 = vadd.f32 0.0, %v3885
        %v3887 = vpop.f32.mrf.mxu0
        %v3888 = vadd.f32 0.0, %v3887
        %3889 = vmatmul.bf16.gmra.mxu0 %v3757
        %v3890 = vpop.f32.mrf.mxu0
        %v3891 = vadd.f32 0.0, %v3890
        %v3892 = vpop.f32.mrf.mxu0
        %v3893 = vadd.f32 0.0, %v3892
        %3894 = vmatmul.bf16.gmra.mxu0 %v3758
        %v3895 = vpop.f32.mrf.mxu0
        %v3896 = vadd.f32 0.0, %v3895
        %v3897 = vpop.f32.mrf.mxu0
        %v3898 = vadd.f32 0.0, %v3897
        %3899 = vmatmul.bf16.gmra.mxu0 %v3759
        %v3900 = vpop.f32.mrf.mxu0
        %v3901 = vadd.f32 0.0, %v3900
        %v3902 = vpop.f32.mrf.mxu0
        %v3903 = vadd.f32 0.0, %v3902
        %3904 = vmatmul.bf16.gmra.mxu0 %v3760
        %v3905 = vpop.f32.mrf.mxu0
        %v3906 = vadd.f32 0.0, %v3905
        %v3907 = vpop.f32.mrf.mxu0
        %v3908 = vadd.f32 0.0, %v3907
        %3909 = vmatmul.bf16.gmra.mxu0 %v3761
        %v3910 = vpop.f32.mrf.mxu0
        %v3911 = vadd.f32 0.0, %v3910
        %v3912 = vpop.f32.mrf.mxu0
        %v3913 = vadd.f32 0.0, %v3912
        %3914 = vdwg.mxu0
        %v3915 = vpack.c.bf16 %v3836, %v3836
        %v3916 = vpack.c.bf16 %v3838, %v3838
        %v3917 = vpack.c.bf16 %v3841, %v3841
        %v3918 = vpack.c.bf16 %v3843, %v3843
        %v3919 = vpack.c.bf16 %v3846, %v3846
        %v3920 = vpack.c.bf16 %v3848, %v3848
        %v3921 = vpack.c.bf16 %v3851, %v3851
        %v3922 = vpack.c.bf16 %v3853, %v3853
        %v3923 = vpack.c.bf16 %v3856, %v3856
        %v3924 = vpack.c.bf16 %v3858, %v3858
        %v3925 = vpack.c.bf16 %v3861, %v3861
        %v3926 = vpack.c.bf16 %v3863, %v3863
        %v3927 = vpack.c.bf16 %v3866, %v3866
        %v3928 = vpack.c.bf16 %v3868, %v3868
        %v3929 = vpack.c.bf16 %v3871, %v3871
        %v3930 = vpack.c.bf16 %v3873, %v3873
        %v3931 = vpack.c.bf16 %v3876, %v3876
        %v3932 = vpack.c.bf16 %v3878, %v3878
        %v3933 = vpack.c.bf16 %v3881, %v3881
        %v3934 = vpack.c.bf16 %v3883, %v3883
        %v3935 = vpack.c.bf16 %v3886, %v3886
        %v3936 = vpack.c.bf16 %v3888, %v3888
        %v3937 = vpack.c.bf16 %v3891, %v3891
        %v3938 = vpack.c.bf16 %v3893, %v3893
        %v3939 = vpack.c.bf16 %v3896, %v3896
        %v3940 = vpack.c.bf16 %v3898, %v3898
        %v3941 = vpack.c.bf16 %v3901, %v3901
        %v3942 = vpack.c.bf16 %v3903, %v3903
        %v3943 = vpack.c.bf16 %v3906, %v3906
        %v3944 = vpack.c.bf16 %v3908, %v3908
        %v3945 = vpack.c.bf16 %v3911, %v3911
        %v3946 = vpack.c.bf16 %v3913, %v3913
        %3979 = vrot.lane.b32.xlu0 %v3915, 64
        %v3980 = vpop.permute.xlu0 %3979
        %3981 = vrot.lane.b32.xlu0 %v3916, 64
        %v3982 = vpop.permute.xlu0 %3981
        %3983 = vrot.lane.b32.xlu0 %v3917, 64
        %v3984 = vpop.permute.xlu0 %3983
        %3985 = vrot.lane.b32.xlu0 %v3918, 64
        %v3986 = vpop.permute.xlu0 %3985
        %3987 = vrot.lane.b32.xlu0 %v3919, 64
        %v3988 = vpop.permute.xlu0 %3987
        %3989 = vrot.lane.b32.xlu0 %v3920, 64
        %v3990 = vpop.permute.xlu0 %3989
        %3991 = vrot.lane.b32.xlu0 %v3921, 64
        %v3992 = vpop.permute.xlu0 %3991
        %3993 = vrot.lane.b32.xlu0 %v3922, 64
        %v3994 = vpop.permute.xlu0 %3993
        %3995 = vrot.lane.b32.xlu0 %v3923, 64
        %v3996 = vpop.permute.xlu0 %3995
        %3997 = vrot.lane.b32.xlu0 %v3924, 64
        %v3998 = vpop.permute.xlu0 %3997
        %3999 = vrot.lane.b32.xlu0 %v3925, 64
        %v4000 = vpop.permute.xlu0 %3999
        %4001 = vrot.lane.b32.xlu0 %v3926, 64
        %v4002 = vpop.permute.xlu0 %4001
        %4003 = vrot.lane.b32.xlu0 %v3927, 64
        %v4004 = vpop.permute.xlu0 %4003
        %4005 = vrot.lane.b32.xlu0 %v3928, 64
        %v4006 = vpop.permute.xlu0 %4005
        %4007 = vrot.lane.b32.xlu0 %v3929, 64
        %v4008 = vpop.permute.xlu0 %4007
        %4009 = vrot.lane.b32.xlu0 %v3930, 64
        %v4010 = vpop.permute.xlu0 %4009
        %4011 = vrot.lane.b32.xlu0 %v3931, 64
        %v4012 = vpop.permute.xlu0 %4011
        %4013 = vrot.lane.b32.xlu0 %v3932, 64
        %v4014 = vpop.permute.xlu0 %4013
        %4015 = vrot.lane.b32.xlu0 %v3933, 64
        %v4016 = vpop.permute.xlu0 %4015
        %4017 = vrot.lane.b32.xlu0 %v3934, 64
        %v4018 = vpop.permute.xlu0 %4017
        %4019 = vrot.lane.b32.xlu0 %v3935, 64
        %v4020 = vpop.permute.xlu0 %4019
        %4021 = vrot.lane.b32.xlu0 %v3936, 64
        %v4022 = vpop.permute.xlu0 %4021
        %4023 = vrot.lane.b32.xlu0 %v3937, 64
        %v4024 = vpop.permute.xlu0 %4023
        %4025 = vrot.lane.b32.xlu0 %v3938, 64
        %v4026 = vpop.permute.xlu0 %4025
        %4027 = vrot.lane.b32.xlu0 %v3939, 64
        %v4028 = vpop.permute.xlu0 %4027
        %4029 = vrot.lane.b32.xlu0 %v3940, 64
        %v4030 = vpop.permute.xlu0 %4029
        %4031 = vrot.lane.b32.xlu0 %v3941, 64
        %v4032 = vpop.permute.xlu0 %4031
        %4033 = vrot.lane.b32.xlu0 %v3942, 64
        %v4034 = vpop.permute.xlu0 %4033
        %4035 = vrot.lane.b32.xlu0 %v3943, 64
        %v4036 = vpop.permute.xlu0 %4035
        %4037 = vrot.lane.b32.xlu0 %v3944, 64
        %v4038 = vpop.permute.xlu0 %4037
        %4039 = vrot.lane.b32.xlu0 %v3945, 64
        %v4040 = vpop.permute.xlu0 %4039
        %4041 = vrot.lane.b32.xlu0 %v3946, 64
        %v4042 = vpop.permute.xlu0 %4041
        %vm4075 = vcmask 781824
        %4076 = vst.msk [vmem:[#allocation4] sm:$0xf] %vm4075, %v3980
        %4077 = vst.msk [vmem:[#allocation4 + $0x4] sm:$0xf] %vm4075, %v3982
        %4078 = vst.msk [vmem:[#allocation4 + $0x8] sm:$0xf] %vm4075, %v3984
        %4079 = vst.msk [vmem:[#allocation4 + $0xc] sm:$0xf] %vm4075, %v3986
        %4080 = vst.msk [vmem:[#allocation4 + $0x10] sm:$0xf] %vm4075, %v3988
        %4081 = vst.msk [vmem:[#allocation4 + $0x14] sm:$0xf] %vm4075, %v3990
        %4082 = vst.msk [vmem:[#allocation4 + $0x18] sm:$0xf] %vm4075, %v3992
        %4083 = vst.msk [vmem:[#allocation4 + $0x1c] sm:$0xf] %vm4075, %v3994
        %4084 = vst.msk [vmem:[#allocation4 + $0x20] sm:$0xf] %vm4075, %v3996
        %4085 = vst.msk [vmem:[#allocation4 + $0x24] sm:$0xf] %vm4075, %v3998
        %4086 = vst.msk [vmem:[#allocation4 + $0x28] sm:$0xf] %vm4075, %v4000
        %4087 = vst.msk [vmem:[#allocation4 + $0x2c] sm:$0xf] %vm4075, %v4002
        %4088 = vst.msk [vmem:[#allocation4 + $0x30] sm:$0xf] %vm4075, %v4004
        %4089 = vst.msk [vmem:[#allocation4 + $0x34] sm:$0xf] %vm4075, %v4006
        %4090 = vst.msk [vmem:[#allocation4 + $0x38] sm:$0xf] %vm4075, %v4008
        %4091 = vst.msk [vmem:[#allocation4 + $0x3c] sm:$0xf] %vm4075, %v4010
        %4092 = vst.msk [vmem:[#allocation4 + $0x40] sm:$0xf] %vm4075, %v4012
        %4093 = vst.msk [vmem:[#allocation4 + $0x44] sm:$0xf] %vm4075, %v4014
        %4094 = vst.msk [vmem:[#allocation4 + $0x48] sm:$0xf] %vm4075, %v4016
        %4095 = vst.msk [vmem:[#allocation4 + $0x4c] sm:$0xf] %vm4075, %v4018
        %4096 = vst.msk [vmem:[#allocation4 + $0x50] sm:$0xf] %vm4075, %v4020
        %4097 = vst.msk [vmem:[#allocation4 + $0x54] sm:$0xf] %vm4075, %v4022
        %4098 = vst.msk [vmem:[#allocation4 + $0x58] sm:$0xf] %vm4075, %v4024
        %4099 = vst.msk [vmem:[#allocation4 + $0x5c] sm:$0xf] %vm4075, %v4026
        %4100 = vst.msk [vmem:[#allocation4 + $0x60] sm:$0xf] %vm4075, %v4028
        %4101 = vst.msk [vmem:[#allocation4 + $0x64] sm:$0xf] %vm4075, %v4030
        %4102 = vst.msk [vmem:[#allocation4 + $0x68] sm:$0xf] %vm4075, %v4032
        %4103 = vst.msk [vmem:[#allocation4 + $0x6c] sm:$0xf] %vm4075, %v4034
        %4104 = vst.msk [vmem:[#allocation4 + $0x70] sm:$0xf] %vm4075, %v4036
        %4105 = vst.msk [vmem:[#allocation4 + $0x74] sm:$0xf] %vm4075, %v4038
        %4106 = vst.msk [vmem:[#allocation4 + $0x78] sm:$0xf] %vm4075, %v4040
        %4107 = vst.msk [vmem:[#allocation4 + $0x7c] sm:$0xf] %vm4075, %v4042
        %v4108 = vld [vmem:[#allocation2] sm:$0xf]
        %v4109 = vld [vmem:[#allocation2 + $0x4] sm:$0xf]
        %v4110 = vld [vmem:[#allocation2 + $0x8] sm:$0xf]
        %v4111 = vld [vmem:[#allocation2 + $0xc] sm:$0xf]
        %v4112 = vld [vmem:[#allocation2 + $0x10] sm:$0xf]
        %v4113 = vld [vmem:[#allocation2 + $0x14] sm:$0xf]
        %v4114 = vld [vmem:[#allocation2 + $0x18] sm:$0xf]
        %v4115 = vld [vmem:[#allocation2 + $0x1c] sm:$0xf]
        %v4116 = vld [vmem:[#allocation2 + $0x20] sm:$0xf]
        %v4117 = vld [vmem:[#allocation2 + $0x24] sm:$0xf]
        %v4118 = vld [vmem:[#allocation2 + $0x28] sm:$0xf]
        %v4119 = vld [vmem:[#allocation2 + $0x2c] sm:$0xf]
        %v4120 = vld [vmem:[#allocation2 + $0x30] sm:$0xf]
        %v4121 = vld [vmem:[#allocation2 + $0x34] sm:$0xf]
        %v4122 = vld [vmem:[#allocation2 + $0x38] sm:$0xf]
        %v4123 = vld [vmem:[#allocation2 + $0x3c] sm:$0xf]
        %v4124 = vld [vmem:[#allocation3] sm:$0xf]
        %v4125 = vld [vmem:[#allocation3 + $0x4] sm:$0xf]
        %v4126 = vld [vmem:[#allocation3 + $0x8] sm:$0xf]
        %v4127 = vld [vmem:[#allocation3 + $0xc] sm:$0xf]
        %v4128 = vld [vmem:[#allocation3 + $0x10] sm:$0xf]
        %v4129 = vld [vmem:[#allocation3 + $0x14] sm:$0xf]
        %v4130 = vld [vmem:[#allocation3 + $0x18] sm:$0xf]
        %v4131 = vld [vmem:[#allocation3 + $0x1c] sm:$0xf]
        %v4132 = vld [vmem:[#allocation3 + $0x20] sm:$0xf]
        %v4133 = vld [vmem:[#allocation3 + $0x24] sm:$0xf]
        %v4134 = vld [vmem:[#allocation3 + $0x28] sm:$0xf]
        %v4135 = vld [vmem:[#allocation3 + $0x2c] sm:$0xf]
        %v4136 = vld [vmem:[#allocation3 + $0x30] sm:$0xf]
        %v4137 = vld [vmem:[#allocation3 + $0x34] sm:$0xf]
        %v4138 = vld [vmem:[#allocation3 + $0x38] sm:$0xf]
        %v4139 = vld [vmem:[#allocation3 + $0x3c] sm:$0xf]
        %4140 = vrot.lane.b32.xlu0 %v1458, 32
        %v4141 = vpop.permute.xlu0 %4140
        %4142 = vrot.lane.b32.xlu0 %v1459, 32
        %v4143 = vpop.permute.xlu0 %4142
        %4144 = vrot.lane.b32.xlu0 %v1460, 32
        %v4145 = vpop.permute.xlu0 %4144
        %4146 = vrot.lane.b32.xlu0 %v1461, 32
        %v4147 = vpop.permute.xlu0 %4146
        %4148 = vrot.lane.b32.xlu0 %v1462, 32
        %v4149 = vpop.permute.xlu0 %4148
        %4150 = vrot.lane.b32.xlu0 %v1463, 32
        %v4151 = vpop.permute.xlu0 %4150
        %4152 = vrot.lane.b32.xlu0 %v1464, 32
        %v4153 = vpop.permute.xlu0 %4152
        %4154 = vrot.lane.b32.xlu0 %v1465, 32
        %v4155 = vpop.permute.xlu0 %4154
        %4156 = vrot.lane.b32.xlu0 %v1466, 32
        %v4157 = vpop.permute.xlu0 %4156
        %4158 = vrot.lane.b32.xlu0 %v1467, 32
        %v4159 = vpop.permute.xlu0 %4158
        %4160 = vrot.lane.b32.xlu0 %v1468, 32
        %v4161 = vpop.permute.xlu0 %4160
        %4162 = vrot.lane.b32.xlu0 %v1469, 32
        %v4163 = vpop.permute.xlu0 %4162
        %4164 = vrot.lane.b32.xlu0 %v1470, 32
        %v4165 = vpop.permute.xlu0 %4164
        %4166 = vrot.lane.b32.xlu0 %v1471, 32
        %v4167 = vpop.permute.xlu0 %4166
        %4168 = vrot.lane.b32.xlu0 %v1472, 32
        %v4169 = vpop.permute.xlu0 %4168
        %4170 = vrot.lane.b32.xlu0 %v1473, 32
        %v4171 = vpop.permute.xlu0 %4170
        %v4188 = vunpack.c.l.b16 %v4108
        %v4189 = vunpack.c.l.b16 %v4109
        %v4190 = vunpack.c.l.b16 %v4110
        %v4191 = vunpack.c.l.b16 %v4111
        %v4192 = vunpack.c.l.b16 %v4112
        %v4193 = vunpack.c.l.b16 %v4113
        %v4194 = vunpack.c.l.b16 %v4114
        %v4195 = vunpack.c.l.b16 %v4115
        %v4196 = vunpack.c.l.b16 %v4116
        %v4197 = vunpack.c.l.b16 %v4117
        %v4198 = vunpack.c.l.b16 %v4118
        %v4199 = vunpack.c.l.b16 %v4119
        %v4200 = vunpack.c.l.b16 %v4120
        %v4201 = vunpack.c.l.b16 %v4121
        %v4202 = vunpack.c.l.b16 %v4122
        %v4203 = vunpack.c.l.b16 %v4123
        %v4204 = vpack.c.b16 %v4189, %v4188
        %v4205 = vpack.c.b16 %v4191, %v4190
        %v4206 = vpack.c.b16 %v4193, %v4192
        %v4207 = vpack.c.b16 %v4195, %v4194
        %v4208 = vpack.c.b16 %v4197, %v4196
        %v4209 = vpack.c.b16 %v4199, %v4198
        %v4210 = vpack.c.b16 %v4201, %v4200
        %v4211 = vpack.c.b16 %v4203, %v4202
        %4212 = vrot.lane.b32.xlu0 %v4204, 32
        %v4213 = vpop.permute.xlu0 %4212
        %4214 = vrot.lane.b32.xlu0 %v4205, 32
        %v4215 = vpop.permute.xlu0 %4214
        %4216 = vrot.lane.b32.xlu0 %v4206, 32
        %v4217 = vpop.permute.xlu0 %4216
        %4218 = vrot.lane.b32.xlu0 %v4207, 32
        %v4219 = vpop.permute.xlu0 %4218
        %4220 = vrot.lane.b32.xlu0 %v4208, 32
        %v4221 = vpop.permute.xlu0 %4220
        %4222 = vrot.lane.b32.xlu0 %v4209, 32
        %v4223 = vpop.permute.xlu0 %4222
        %4224 = vrot.lane.b32.xlu0 %v4210, 32
        %v4225 = vpop.permute.xlu0 %4224
        %4226 = vrot.lane.b32.xlu0 %v4211, 32
        %v4227 = vpop.permute.xlu0 %4226
        %v4229 = vsel %vm1514, %v4141, 0
        %v4232 = vsel %vm1514, %v4143, 0
        %v4235 = vsel %vm1514, %v4145, 0
        %v4238 = vsel %vm1514, %v4147, 0
        %v4241 = vsel %vm1514, %v4149, 0
        %v4244 = vsel %vm1514, %v4151, 0
        %v4247 = vsel %vm1514, %v4153, 0
        %v4250 = vsel %vm1514, %v4155, 0
        %v4253 = vsel %vm1514, %v4157, 0
        %v4256 = vsel %vm1514, %v4159, 0
        %v4259 = vsel %vm1514, %v4161, 0
        %v4262 = vsel %vm1514, %v4163, 0
        %v4265 = vsel %vm1514, %v4165, 0
        %v4268 = vsel %vm1514, %v4167, 0
        %v4271 = vsel %vm1514, %v4169, 0
        %v4274 = vsel %vm1514, %v4171, 0
        %v4277 = vsel %vm1514, %v4213, 0
        %v4280 = vsel %vm1514, %v4215, 0
        %v4283 = vsel %vm1514, %v4217, 0
        %v4286 = vsel %vm1514, %v4219, 0
        %v4289 = vsel %vm1514, %v4221, 0
        %v4292 = vsel %vm1514, %v4223, 0
        %v4295 = vsel %vm1514, %v4225, 0
        %v4298 = vsel %vm1514, %v4227, 0
        %4300 = vmatpush.bf16.xpose.msra.mxu0 %v4298
        %4301 = vmatpush.bf16.xpose.msra.mxu0 %v4295
        %4302 = vmatpush.bf16.xpose.msra.mxu0 %v4292
        %4303 = vmatpush.bf16.xpose.msra.mxu0 %v4289
        %4304 = vmatpush.bf16.xpose.msra.mxu0 %v4286
        %4305 = vmatpush.bf16.xpose.msra.mxu0 %v4283
        %4306 = vmatpush.bf16.xpose.msra.mxu0 %v4280
        %4307 = vmatpush.bf16.xpose.msra.mxu0 %v4277
        %4308 = vmatmul.bf16.gmra.mxu0 %v4229
        %v4309 = vpop.f32.mrf.mxu0
        %v4310 = vadd.f32 0.0, %v4309
        %v4311 = vpop.f32.mrf.mxu0
        %v4312 = vadd.f32 0.0, %v4311
        %4313 = vmatmul.bf16.gmra.mxu0 %v4232
        %v4314 = vpop.f32.mrf.mxu0
        %v4315 = vadd.f32 0.0, %v4314
        %v4316 = vpop.f32.mrf.mxu0
        %v4317 = vadd.f32 0.0, %v4316
        %4318 = vmatmul.bf16.gmra.mxu0 %v4235
        %v4319 = vpop.f32.mrf.mxu0
        %v4320 = vadd.f32 0.0, %v4319
        %v4321 = vpop.f32.mrf.mxu0
        %v4322 = vadd.f32 0.0, %v4321
        %4323 = vmatmul.bf16.gmra.mxu0 %v4238
        %v4324 = vpop.f32.mrf.mxu0
        %v4325 = vadd.f32 0.0, %v4324
        %v4326 = vpop.f32.mrf.mxu0
        %v4327 = vadd.f32 0.0, %v4326
        %4328 = vmatmul.bf16.gmra.mxu0 %v4241
        %v4329 = vpop.f32.mrf.mxu0
        %v4330 = vadd.f32 0.0, %v4329
        %v4331 = vpop.f32.mrf.mxu0
        %v4332 = vadd.f32 0.0, %v4331
        %4333 = vmatmul.bf16.gmra.mxu0 %v4244
        %v4334 = vpop.f32.mrf.mxu0
        %v4335 = vadd.f32 0.0, %v4334
        %v4336 = vpop.f32.mrf.mxu0
        %v4337 = vadd.f32 0.0, %v4336
        %4338 = vmatmul.bf16.gmra.mxu0 %v4247
        %v4339 = vpop.f32.mrf.mxu0
        %v4340 = vadd.f32 0.0, %v4339
        %v4341 = vpop.f32.mrf.mxu0
        %v4342 = vadd.f32 0.0, %v4341
        %4343 = vmatmul.bf16.gmra.mxu0 %v4250
        %v4344 = vpop.f32.mrf.mxu0
        %v4345 = vadd.f32 0.0, %v4344
        %v4346 = vpop.f32.mrf.mxu0
        %v4347 = vadd.f32 0.0, %v4346
        %4348 = vmatmul.bf16.gmra.mxu0 %v4253
        %v4349 = vpop.f32.mrf.mxu0
        %v4350 = vadd.f32 0.0, %v4349
        %v4351 = vpop.f32.mrf.mxu0
        %v4352 = vadd.f32 0.0, %v4351
        %4353 = vmatmul.bf16.gmra.mxu0 %v4256
        %v4354 = vpop.f32.mrf.mxu0
        %v4355 = vadd.f32 0.0, %v4354
        %v4356 = vpop.f32.mrf.mxu0
        %v4357 = vadd.f32 0.0, %v4356
        %4358 = vmatmul.bf16.gmra.mxu0 %v4259
        %v4359 = vpop.f32.mrf.mxu0
        %v4360 = vadd.f32 0.0, %v4359
        %v4361 = vpop.f32.mrf.mxu0
        %v4362 = vadd.f32 0.0, %v4361
        %4363 = vmatmul.bf16.gmra.mxu0 %v4262
        %v4364 = vpop.f32.mrf.mxu0
        %v4365 = vadd.f32 0.0, %v4364
        %v4366 = vpop.f32.mrf.mxu0
        %v4367 = vadd.f32 0.0, %v4366
        %4368 = vmatmul.bf16.gmra.mxu0 %v4265
        %v4369 = vpop.f32.mrf.mxu0
        %v4370 = vadd.f32 0.0, %v4369
        %v4371 = vpop.f32.mrf.mxu0
        %v4372 = vadd.f32 0.0, %v4371
        %4373 = vmatmul.bf16.gmra.mxu0 %v4268
        %v4374 = vpop.f32.mrf.mxu0
        %v4375 = vadd.f32 0.0, %v4374
        %v4376 = vpop.f32.mrf.mxu0
        %v4377 = vadd.f32 0.0, %v4376
        %4378 = vmatmul.bf16.gmra.mxu0 %v4271
        %v4379 = vpop.f32.mrf.mxu0
        %v4380 = vadd.f32 0.0, %v4379
        %v4381 = vpop.f32.mrf.mxu0
        %v4382 = vadd.f32 0.0, %v4381
        %4383 = vmatmul.bf16.gmra.mxu0 %v4274
        %v4384 = vpop.f32.mrf.mxu0
        %v4385 = vadd.f32 0.0, %v4384
        %v4386 = vpop.f32.mrf.mxu0
        %v4387 = vadd.f32 0.0, %v4386
        %4388 = vdwg.mxu0
        %4389 = vmax.xlane.f32.xlu0 %v4310
        %v4390 = vpop.xlane.xlu0 %4389
        %4391 = vmax.xlane.f32.xlu0 %v4312
        %v4392 = vpop.xlane.xlu0 %4391
        %4393 = vmax.xlane.f32.xlu0 %v4315
        %v4394 = vpop.xlane.xlu0 %4393
        %4395 = vmax.xlane.f32.xlu0 %v4317
        %v4396 = vpop.xlane.xlu0 %4395
        %4397 = vmax.xlane.f32.xlu0 %v4320
        %v4398 = vpop.xlane.xlu0 %4397
        %4399 = vmax.xlane.f32.xlu0 %v4322
        %v4400 = vpop.xlane.xlu0 %4399
        %4401 = vmax.xlane.f32.xlu0 %v4325
        %v4402 = vpop.xlane.xlu0 %4401
        %4403 = vmax.xlane.f32.xlu0 %v4327
        %v4404 = vpop.xlane.xlu0 %4403
        %4405 = vmax.xlane.f32.xlu0 %v4330
        %v4406 = vpop.xlane.xlu0 %4405
        %4407 = vmax.xlane.f32.xlu0 %v4332
        %v4408 = vpop.xlane.xlu0 %4407
        %4409 = vmax.xlane.f32.xlu0 %v4335
        %v4410 = vpop.xlane.xlu0 %4409
        %4411 = vmax.xlane.f32.xlu0 %v4337
        %v4412 = vpop.xlane.xlu0 %4411
        %4413 = vmax.xlane.f32.xlu0 %v4340
        %v4414 = vpop.xlane.xlu0 %4413
        %4415 = vmax.xlane.f32.xlu0 %v4342
        %v4416 = vpop.xlane.xlu0 %4415
        %4417 = vmax.xlane.f32.xlu0 %v4345
        %v4418 = vpop.xlane.xlu0 %4417
        %4419 = vmax.xlane.f32.xlu0 %v4347
        %v4420 = vpop.xlane.xlu0 %4419
        %4421 = vmax.xlane.f32.xlu0 %v4350
        %v4422 = vpop.xlane.xlu0 %4421
        %4423 = vmax.xlane.f32.xlu0 %v4352
        %v4424 = vpop.xlane.xlu0 %4423
        %4425 = vmax.xlane.f32.xlu0 %v4355
        %v4426 = vpop.xlane.xlu0 %4425
        %4427 = vmax.xlane.f32.xlu0 %v4357
        %v4428 = vpop.xlane.xlu0 %4427
        %4429 = vmax.xlane.f32.xlu0 %v4360
        %v4430 = vpop.xlane.xlu0 %4429
        %4431 = vmax.xlane.f32.xlu0 %v4362
        %v4432 = vpop.xlane.xlu0 %4431
        %4433 = vmax.xlane.f32.xlu0 %v4365
        %v4434 = vpop.xlane.xlu0 %4433
        %4435 = vmax.xlane.f32.xlu0 %v4367
        %v4436 = vpop.xlane.xlu0 %4435
        %4437 = vmax.xlane.f32.xlu0 %v4370
        %v4438 = vpop.xlane.xlu0 %4437
        %4439 = vmax.xlane.f32.xlu0 %v4372
        %v4440 = vpop.xlane.xlu0 %4439
        %4441 = vmax.xlane.f32.xlu0 %v4375
        %v4442 = vpop.xlane.xlu0 %4441
        %4443 = vmax.xlane.f32.xlu0 %v4377
        %v4444 = vpop.xlane.xlu0 %4443
        %4445 = vmax.xlane.f32.xlu0 %v4380
        %v4446 = vpop.xlane.xlu0 %4445
        %4447 = vmax.xlane.f32.xlu0 %v4382
        %v4448 = vpop.xlane.xlu0 %4447
        %4449 = vmax.xlane.f32.xlu0 %v4385
        %v4450 = vpop.xlane.xlu0 %4449
        %4451 = vmax.xlane.f32.xlu0 %v4387
        %v4452 = vpop.xlane.xlu0 %4451
        %v4453 = vsub.f32 %v4310, %v4390
        %v4454 = vsub.f32 %v4312, %v4392
        %v4455 = vsub.f32 %v4315, %v4394
        %v4456 = vsub.f32 %v4317, %v4396
        %v4457 = vsub.f32 %v4320, %v4398
        %v4458 = vsub.f32 %v4322, %v4400
        %v4459 = vsub.f32 %v4325, %v4402
        %v4460 = vsub.f32 %v4327, %v4404
        %v4461 = vsub.f32 %v4330, %v4406
        %v4462 = vsub.f32 %v4332, %v4408
        %v4463 = vsub.f32 %v4335, %v4410
        %v4464 = vsub.f32 %v4337, %v4412
        %v4465 = vsub.f32 %v4340, %v4414
        %v4466 = vsub.f32 %v4342, %v4416
        %v4467 = vsub.f32 %v4345, %v4418
        %v4468 = vsub.f32 %v4347, %v4420
        %v4469 = vsub.f32 %v4350, %v4422
        %v4470 = vsub.f32 %v4352, %v4424
        %v4471 = vsub.f32 %v4355, %v4426
        %v4472 = vsub.f32 %v4357, %v4428
        %v4473 = vsub.f32 %v4360, %v4430
        %v4474 = vsub.f32 %v4362, %v4432
        %v4475 = vsub.f32 %v4365, %v4434
        %v4476 = vsub.f32 %v4367, %v4436
        %v4477 = vsub.f32 %v4370, %v4438
        %v4478 = vsub.f32 %v4372, %v4440
        %v4479 = vsub.f32 %v4375, %v4442
        %v4480 = vsub.f32 %v4377, %v4444
        %v4481 = vsub.f32 %v4380, %v4446
        %v4482 = vsub.f32 %v4382, %v4448
        %v4483 = vsub.f32 %v4385, %v4450
        %v4484 = vsub.f32 %v4387, %v4452
        %v4485 = vmul.f32 %v4453, 1.442695
        %v4486 = vpow.pop %v4485
        %v4487 = vmul.f32 %v4454, 1.442695
        %v4488 = vpow.pop %v4487
        %v4489 = vmul.f32 %v4455, 1.442695
        %v4490 = vpow.pop %v4489
        %v4491 = vmul.f32 %v4456, 1.442695
        %v4492 = vpow.pop %v4491
        %v4493 = vmul.f32 %v4457, 1.442695
        %v4494 = vpow.pop %v4493
        %v4495 = vmul.f32 %v4458, 1.442695
        %v4496 = vpow.pop %v4495
        %v4497 = vmul.f32 %v4459, 1.442695
        %v4498 = vpow.pop %v4497
        %v4499 = vmul.f32 %v4460, 1.442695
        %v4500 = vpow.pop %v4499
        %v4501 = vmul.f32 %v4461, 1.442695
        %v4502 = vpow.pop %v4501
        %v4503 = vmul.f32 %v4462, 1.442695
        %v4504 = vpow.pop %v4503
        %v4505 = vmul.f32 %v4463, 1.442695
        %v4506 = vpow.pop %v4505
        %v4507 = vmul.f32 %v4464, 1.442695
        %v4508 = vpow.pop %v4507
        %v4509 = vmul.f32 %v4465, 1.442695
        %v4510 = vpow.pop %v4509
        %v4511 = vmul.f32 %v4466, 1.442695
        %v4512 = vpow.pop %v4511
        %v4513 = vmul.f32 %v4467, 1.442695
        %v4514 = vpow.pop %v4513
        %v4515 = vmul.f32 %v4468, 1.442695
        %v4516 = vpow.pop %v4515
        %v4517 = vmul.f32 %v4469, 1.442695
        %v4518 = vpow.pop %v4517
        %v4519 = vmul.f32 %v4470, 1.442695
        %v4520 = vpow.pop %v4519
        %v4521 = vmul.f32 %v4471, 1.442695
        %v4522 = vpow.pop %v4521
        %v4523 = vmul.f32 %v4472, 1.442695
        %v4524 = vpow.pop %v4523
        %v4525 = vmul.f32 %v4473, 1.442695
        %v4526 = vpow.pop %v4525
        %v4527 = vmul.f32 %v4474, 1.442695
        %v4528 = vpow.pop %v4527
        %v4529 = vmul.f32 %v4475, 1.442695
        %v4530 = vpow.pop %v4529
        %v4531 = vmul.f32 %v4476, 1.442695
        %v4532 = vpow.pop %v4531
        %v4533 = vmul.f32 %v4477, 1.442695
        %v4534 = vpow.pop %v4533
        %v4535 = vmul.f32 %v4478, 1.442695
        %v4536 = vpow.pop %v4535
        %v4537 = vmul.f32 %v4479, 1.442695
        %v4538 = vpow.pop %v4537
        %v4539 = vmul.f32 %v4480, 1.442695
        %v4540 = vpow.pop %v4539
        %v4541 = vmul.f32 %v4481, 1.442695
        %v4542 = vpow.pop %v4541
        %v4543 = vmul.f32 %v4482, 1.442695
        %v4544 = vpow.pop %v4543
        %v4545 = vmul.f32 %v4483, 1.442695
        %v4546 = vpow.pop %v4545
        %v4547 = vmul.f32 %v4484, 1.442695
        %v4548 = vpow.pop %v4547
        %4549 = vadd.xlane.f32.xlu0 %v4486
        %v4550 = vpop.xlane.xlu0 %4549
        %4551 = vadd.xlane.f32.xlu0 %v4488
        %v4552 = vpop.xlane.xlu0 %4551
        %4553 = vadd.xlane.f32.xlu0 %v4490
        %v4554 = vpop.xlane.xlu0 %4553
        %4555 = vadd.xlane.f32.xlu0 %v4492
        %v4556 = vpop.xlane.xlu0 %4555
        %4557 = vadd.xlane.f32.xlu0 %v4494
        %v4558 = vpop.xlane.xlu0 %4557
        %4559 = vadd.xlane.f32.xlu0 %v4496
        %v4560 = vpop.xlane.xlu0 %4559
        %4561 = vadd.xlane.f32.xlu0 %v4498
        %v4562 = vpop.xlane.xlu0 %4561
        %4563 = vadd.xlane.f32.xlu0 %v4500
        %v4564 = vpop.xlane.xlu0 %4563
        %4565 = vadd.xlane.f32.xlu0 %v4502
        %v4566 = vpop.xlane.xlu0 %4565
        %4567 = vadd.xlane.f32.xlu0 %v4504
        %v4568 = vpop.xlane.xlu0 %4567
        %4569 = vadd.xlane.f32.xlu0 %v4506
        %v4570 = vpop.xlane.xlu0 %4569
        %4571 = vadd.xlane.f32.xlu0 %v4508
        %v4572 = vpop.xlane.xlu0 %4571
        %4573 = vadd.xlane.f32.xlu0 %v4510
        %v4574 = vpop.xlane.xlu0 %4573
        %4575 = vadd.xlane.f32.xlu0 %v4512
        %v4576 = vpop.xlane.xlu0 %4575
        %4577 = vadd.xlane.f32.xlu0 %v4514
        %v4578 = vpop.xlane.xlu0 %4577
        %4579 = vadd.xlane.f32.xlu0 %v4516
        %v4580 = vpop.xlane.xlu0 %4579
        %4581 = vadd.xlane.f32.xlu0 %v4518
        %v4582 = vpop.xlane.xlu0 %4581
        %4583 = vadd.xlane.f32.xlu0 %v4520
        %v4584 = vpop.xlane.xlu0 %4583
        %4585 = vadd.xlane.f32.xlu0 %v4522
        %v4586 = vpop.xlane.xlu0 %4585
        %4587 = vadd.xlane.f32.xlu0 %v4524
        %v4588 = vpop.xlane.xlu0 %4587
        %4589 = vadd.xlane.f32.xlu0 %v4526
        %v4590 = vpop.xlane.xlu0 %4589
        %4591 = vadd.xlane.f32.xlu0 %v4528
        %v4592 = vpop.xlane.xlu0 %4591
        %4593 = vadd.xlane.f32.xlu0 %v4530
        %v4594 = vpop.xlane.xlu0 %4593
        %4595 = vadd.xlane.f32.xlu0 %v4532
        %v4596 = vpop.xlane.xlu0 %4595
        %4597 = vadd.xlane.f32.xlu0 %v4534
        %v4598 = vpop.xlane.xlu0 %4597
        %4599 = vadd.xlane.f32.xlu0 %v4536
        %v4600 = vpop.xlane.xlu0 %4599
        %4601 = vadd.xlane.f32.xlu0 %v4538
        %v4602 = vpop.xlane.xlu0 %4601
        %4603 = vadd.xlane.f32.xlu0 %v4540
        %v4604 = vpop.xlane.xlu0 %4603
        %4605 = vadd.xlane.f32.xlu0 %v4542
        %v4606 = vpop.xlane.xlu0 %4605
        %4607 = vadd.xlane.f32.xlu0 %v4544
        %v4608 = vpop.xlane.xlu0 %4607
        %4609 = vadd.xlane.f32.xlu0 %v4546
        %v4610 = vpop.xlane.xlu0 %4609
        %4611 = vadd.xlane.f32.xlu0 %v4548
        %v4612 = vpop.xlane.xlu0 %4611
        %v4613 = vrcp.pop %v4550
        %v4614 = vrcp.pop %v4552
        %v4615 = vrcp.pop %v4554
        %v4616 = vrcp.pop %v4556
        %v4617 = vrcp.pop %v4558
        %v4618 = vrcp.pop %v4560
        %v4619 = vrcp.pop %v4562
        %v4620 = vrcp.pop %v4564
        %v4621 = vrcp.pop %v4566
        %v4622 = vrcp.pop %v4568
        %v4623 = vrcp.pop %v4570
        %v4624 = vrcp.pop %v4572
        %v4625 = vrcp.pop %v4574
        %v4626 = vrcp.pop %v4576
        %v4627 = vrcp.pop %v4578
        %v4628 = vrcp.pop %v4580
        %v4629 = vrcp.pop %v4582
        %v4630 = vrcp.pop %v4584
        %v4631 = vrcp.pop %v4586
        %v4632 = vrcp.pop %v4588
        %v4633 = vrcp.pop %v4590
        %v4634 = vrcp.pop %v4592
        %v4635 = vrcp.pop %v4594
        %v4636 = vrcp.pop %v4596
        %v4637 = vrcp.pop %v4598
        %v4638 = vrcp.pop %v4600
        %v4639 = vrcp.pop %v4602
        %v4640 = vrcp.pop %v4604
        %v4641 = vrcp.pop %v4606
        %v4642 = vrcp.pop %v4608
        %v4643 = vrcp.pop %v4610
        %v4644 = vrcp.pop %v4612
        %v4645 = vmul.f32 %v4486, %v4613
        %v4646 = vmul.f32 %v4488, %v4614
        %v4647 = vmul.f32 %v4490, %v4615
        %v4648 = vmul.f32 %v4492, %v4616
        %v4649 = vmul.f32 %v4494, %v4617
        %v4650 = vmul.f32 %v4496, %v4618
        %v4651 = vmul.f32 %v4498, %v4619
        %v4652 = vmul.f32 %v4500, %v4620
        %v4653 = vmul.f32 %v4502, %v4621
        %v4654 = vmul.f32 %v4504, %v4622
        %v4655 = vmul.f32 %v4506, %v4623
        %v4656 = vmul.f32 %v4508, %v4624
        %v4657 = vmul.f32 %v4510, %v4625
        %v4658 = vmul.f32 %v4512, %v4626
        %v4659 = vmul.f32 %v4514, %v4627
        %v4660 = vmul.f32 %v4516, %v4628
        %v4661 = vmul.f32 %v4518, %v4629
        %v4662 = vmul.f32 %v4520, %v4630
        %v4663 = vmul.f32 %v4522, %v4631
        %v4664 = vmul.f32 %v4524, %v4632
        %v4665 = vmul.f32 %v4526, %v4633
        %v4666 = vmul.f32 %v4528, %v4634
        %v4667 = vmul.f32 %v4530, %v4635
        %v4668 = vmul.f32 %v4532, %v4636
        %v4669 = vmul.f32 %v4534, %v4637
        %v4670 = vmul.f32 %v4536, %v4638
        %v4671 = vmul.f32 %v4538, %v4639
        %v4672 = vmul.f32 %v4540, %v4640
        %v4673 = vmul.f32 %v4542, %v4641
        %v4674 = vmul.f32 %v4544, %v4642
        %v4675 = vmul.f32 %v4546, %v4643
        %v4676 = vmul.f32 %v4548, %v4644
        %v4677 = vmax.f32 %v3714, %v4645
        %v4678 = vmax.f32 %v3715, %v4646
        %v4679 = vmax.f32 %v3716, %v4647
        %v4680 = vmax.f32 %v3717, %v4648
        %v4681 = vmax.f32 %v3718, %v4649
        %v4682 = vmax.f32 %v3719, %v4650
        %v4683 = vmax.f32 %v3720, %v4651
        %v4684 = vmax.f32 %v3721, %v4652
        %v4685 = vmax.f32 %v3722, %v4653
        %v4686 = vmax.f32 %v3723, %v4654
        %v4687 = vmax.f32 %v3724, %v4655
        %v4688 = vmax.f32 %v3725, %v4656
        %v4689 = vmax.f32 %v3726, %v4657
        %v4690 = vmax.f32 %v3727, %v4658
        %v4691 = vmax.f32 %v3728, %v4659
        %v4692 = vmax.f32 %v3729, %v4660
        %v4693 = vmax.f32 %v3730, %v4661
        %v4694 = vmax.f32 %v3731, %v4662
        %v4695 = vmax.f32 %v3732, %v4663
        %v4696 = vmax.f32 %v3733, %v4664
        %v4697 = vmax.f32 %v3734, %v4665
        %v4698 = vmax.f32 %v3735, %v4666
        %v4699 = vmax.f32 %v3736, %v4667
        %v4700 = vmax.f32 %v3737, %v4668
        %v4701 = vmax.f32 %v3738, %v4669
        %v4702 = vmax.f32 %v3739, %v4670
        %v4703 = vmax.f32 %v3740, %v4671
        %v4704 = vmax.f32 %v3741, %v4672
        %v4705 = vmax.f32 %v3742, %v4673
        %v4706 = vmax.f32 %v3743, %v4674
        %v4707 = vmax.f32 %v3744, %v4675
        %v4708 = vmax.f32 %v3745, %v4676
        %v4709 = vpack.c.bf16 %v4646, %v4645
        %v4710 = vpack.c.bf16 %v4648, %v4647
        %v4711 = vpack.c.bf16 %v4650, %v4649
        %v4712 = vpack.c.bf16 %v4652, %v4651
        %v4713 = vpack.c.bf16 %v4654, %v4653
        %v4714 = vpack.c.bf16 %v4656, %v4655
        %v4715 = vpack.c.bf16 %v4658, %v4657
        %v4716 = vpack.c.bf16 %v4660, %v4659
        %v4717 = vpack.c.bf16 %v4662, %v4661
        %v4718 = vpack.c.bf16 %v4664, %v4663
        %v4719 = vpack.c.bf16 %v4666, %v4665
        %v4720 = vpack.c.bf16 %v4668, %v4667
        %v4721 = vpack.c.bf16 %v4670, %v4669
        %v4722 = vpack.c.bf16 %v4672, %v4671
        %v4723 = vpack.c.bf16 %v4674, %v4673
        %v4724 = vpack.c.bf16 %v4676, %v4675
        %v4741 = vunpack.c.l.b16 %v4124
        %v4742 = vunpack.c.l.b16 %v4125
        %v4743 = vunpack.c.l.b16 %v4126
        %v4744 = vunpack.c.l.b16 %v4127
        %v4745 = vunpack.c.l.b16 %v4128
        %v4746 = vunpack.c.l.b16 %v4129
        %v4747 = vunpack.c.l.b16 %v4130
        %v4748 = vunpack.c.l.b16 %v4131
        %v4749 = vunpack.c.l.b16 %v4132
        %v4750 = vunpack.c.l.b16 %v4133
        %v4751 = vunpack.c.l.b16 %v4134
        %v4752 = vunpack.c.l.b16 %v4135
        %v4753 = vunpack.c.l.b16 %v4136
        %v4754 = vunpack.c.l.b16 %v4137
        %v4755 = vunpack.c.l.b16 %v4138
        %v4756 = vunpack.c.l.b16 %v4139
        %v4757 = vpack.c.b16 %v4742, %v4741
        %v4758 = vpack.c.b16 %v4744, %v4743
        %v4759 = vpack.c.b16 %v4746, %v4745
        %v4760 = vpack.c.b16 %v4748, %v4747
        %v4761 = vpack.c.b16 %v4750, %v4749
        %v4762 = vpack.c.b16 %v4752, %v4751
        %v4763 = vpack.c.b16 %v4754, %v4753
        %v4764 = vpack.c.b16 %v4756, %v4755
        %4765 = vrot.lane.b32.xlu0 %v4757, 32
        %v4766 = vpop.permute.xlu0 %4765
        %4767 = vrot.lane.b32.xlu0 %v4758, 32
        %v4768 = vpop.permute.xlu0 %4767
        %4769 = vrot.lane.b32.xlu0 %v4759, 32
        %v4770 = vpop.permute.xlu0 %4769
        %4771 = vrot.lane.b32.xlu0 %v4760, 32
        %v4772 = vpop.permute.xlu0 %4771
        %4773 = vrot.lane.b32.xlu0 %v4761, 32
        %v4774 = vpop.permute.xlu0 %4773
        %4775 = vrot.lane.b32.xlu0 %v4762, 32
        %v4776 = vpop.permute.xlu0 %4775
        %4777 = vrot.lane.b32.xlu0 %v4763, 32
        %v4778 = vpop.permute.xlu0 %4777
        %4779 = vrot.lane.b32.xlu0 %v4764, 32
        %v4780 = vpop.permute.xlu0 %4779
        %4789 = vmatpush.bf16.msra.mxu0 %v4780
        %4790 = vmatpush.bf16.msra.mxu0 %v4778
        %4791 = vmatpush.bf16.msra.mxu0 %v4776
        %4792 = vmatpush.bf16.msra.mxu0 %v4774
        %4793 = vmatpush.bf16.msra.mxu0 %v4772
        %4794 = vmatpush.bf16.msra.mxu0 %v4770
        %4795 = vmatpush.bf16.msra.mxu0 %v4768
        %4796 = vmatpush.bf16.msra.mxu0 %v4766
        %4797 = vmatmul.bf16.gmra.mxu0 %v4709
        %v4798 = vpop.f32.mrf.mxu0
        %v4799 = vadd.f32 0.0, %v4798
        %v4800 = vpop.f32.mrf.mxu0
        %v4801 = vadd.f32 0.0, %v4800
        %4802 = vmatmul.bf16.gmra.mxu0 %v4710
        %v4803 = vpop.f32.mrf.mxu0
        %v4804 = vadd.f32 0.0, %v4803
        %v4805 = vpop.f32.mrf.mxu0
        %v4806 = vadd.f32 0.0, %v4805
        %4807 = vmatmul.bf16.gmra.mxu0 %v4711
        %v4808 = vpop.f32.mrf.mxu0
        %v4809 = vadd.f32 0.0, %v4808
        %v4810 = vpop.f32.mrf.mxu0
        %v4811 = vadd.f32 0.0, %v4810
        %4812 = vmatmul.bf16.gmra.mxu0 %v4712
        %v4813 = vpop.f32.mrf.mxu0
        %v4814 = vadd.f32 0.0, %v4813
        %v4815 = vpop.f32.mrf.mxu0
        %v4816 = vadd.f32 0.0, %v4815
        %4817 = vmatmul.bf16.gmra.mxu0 %v4713
        %v4818 = vpop.f32.mrf.mxu0
        %v4819 = vadd.f32 0.0, %v4818
        %v4820 = vpop.f32.mrf.mxu0
        %v4821 = vadd.f32 0.0, %v4820
        %4822 = vmatmul.bf16.gmra.mxu0 %v4714
        %v4823 = vpop.f32.mrf.mxu0
        %v4824 = vadd.f32 0.0, %v4823
        %v4825 = vpop.f32.mrf.mxu0
        %v4826 = vadd.f32 0.0, %v4825
        %4827 = vmatmul.bf16.gmra.mxu0 %v4715
        %v4828 = vpop.f32.mrf.mxu0
        %v4829 = vadd.f32 0.0, %v4828
        %v4830 = vpop.f32.mrf.mxu0
        %v4831 = vadd.f32 0.0, %v4830
        %4832 = vmatmul.bf16.gmra.mxu0 %v4716
        %v4833 = vpop.f32.mrf.mxu0
        %v4834 = vadd.f32 0.0, %v4833
        %v4835 = vpop.f32.mrf.mxu0
        %v4836 = vadd.f32 0.0, %v4835
        %4837 = vmatmul.bf16.gmra.mxu0 %v4717
        %v4838 = vpop.f32.mrf.mxu0
        %v4839 = vadd.f32 0.0, %v4838
        %v4840 = vpop.f32.mrf.mxu0
        %v4841 = vadd.f32 0.0, %v4840
        %4842 = vmatmul.bf16.gmra.mxu0 %v4718
        %v4843 = vpop.f32.mrf.mxu0
        %v4844 = vadd.f32 0.0, %v4843
        %v4845 = vpop.f32.mrf.mxu0
        %v4846 = vadd.f32 0.0, %v4845
        %4847 = vmatmul.bf16.gmra.mxu0 %v4719
        %v4848 = vpop.f32.mrf.mxu0
        %v4849 = vadd.f32 0.0, %v4848
        %v4850 = vpop.f32.mrf.mxu0
        %v4851 = vadd.f32 0.0, %v4850
        %4852 = vmatmul.bf16.gmra.mxu0 %v4720
        %v4853 = vpop.f32.mrf.mxu0
        %v4854 = vadd.f32 0.0, %v4853
        %v4855 = vpop.f32.mrf.mxu0
        %v4856 = vadd.f32 0.0, %v4855
        %4857 = vmatmul.bf16.gmra.mxu0 %v4721
        %v4858 = vpop.f32.mrf.mxu0
        %v4859 = vadd.f32 0.0, %v4858
        %v4860 = vpop.f32.mrf.mxu0
        %v4861 = vadd.f32 0.0, %v4860
        %4862 = vmatmul.bf16.gmra.mxu0 %v4722
        %v4863 = vpop.f32.mrf.mxu0
        %v4864 = vadd.f32 0.0, %v4863
        %v4865 = vpop.f32.mrf.mxu0
        %v4866 = vadd.f32 0.0, %v4865
        %4867 = vmatmul.bf16.gmra.mxu0 %v4723
        %v4868 = vpop.f32.mrf.mxu0
        %v4869 = vadd.f32 0.0, %v4868
        %v4870 = vpop.f32.mrf.mxu0
        %v4871 = vadd.f32 0.0, %v4870
        %4872 = vmatmul.bf16.gmra.mxu0 %v4724
        %v4873 = vpop.f32.mrf.mxu0
        %v4874 = vadd.f32 0.0, %v4873
        %v4875 = vpop.f32.mrf.mxu0
        %v4876 = vadd.f32 0.0, %v4875
        %4877 = vdwg.mxu0
        %v4878 = vpack.c.bf16 %v4799, %v4799
        %v4879 = vpack.c.bf16 %v4801, %v4801
        %v4880 = vpack.c.bf16 %v4804, %v4804
        %v4881 = vpack.c.bf16 %v4806, %v4806
        %v4882 = vpack.c.bf16 %v4809, %v4809
        %v4883 = vpack.c.bf16 %v4811, %v4811
        %v4884 = vpack.c.bf16 %v4814, %v4814
        %v4885 = vpack.c.bf16 %v4816, %v4816
        %v4886 = vpack.c.bf16 %v4819, %v4819
        %v4887 = vpack.c.bf16 %v4821, %v4821
        %v4888 = vpack.c.bf16 %v4824, %v4824
        %v4889 = vpack.c.bf16 %v4826, %v4826
        %v4890 = vpack.c.bf16 %v4829, %v4829
        %v4891 = vpack.c.bf16 %v4831, %v4831
        %v4892 = vpack.c.bf16 %v4834, %v4834
        %v4893 = vpack.c.bf16 %v4836, %v4836
        %v4894 = vpack.c.bf16 %v4839, %v4839
        %v4895 = vpack.c.bf16 %v4841, %v4841
        %v4896 = vpack.c.bf16 %v4844, %v4844
        %v4897 = vpack.c.bf16 %v4846, %v4846
        %v4898 = vpack.c.bf16 %v4849, %v4849
        %v4899 = vpack.c.bf16 %v4851, %v4851
        %v4900 = vpack.c.bf16 %v4854, %v4854
        %v4901 = vpack.c.bf16 %v4856, %v4856
        %v4902 = vpack.c.bf16 %v4859, %v4859
        %v4903 = vpack.c.bf16 %v4861, %v4861
        %v4904 = vpack.c.bf16 %v4864, %v4864
        %v4905 = vpack.c.bf16 %v4866, %v4866
        %v4906 = vpack.c.bf16 %v4869, %v4869
        %v4907 = vpack.c.bf16 %v4871, %v4871
        %v4908 = vpack.c.bf16 %v4874, %v4874
        %v4909 = vpack.c.bf16 %v4876, %v4876
        %4942 = vrot.lane.b32.xlu0 %v4878, 96
        %v4943 = vpop.permute.xlu0 %4942
        %4944 = vrot.lane.b32.xlu0 %v4879, 96
        %v4945 = vpop.permute.xlu0 %4944
        %4946 = vrot.lane.b32.xlu0 %v4880, 96
        %v4947 = vpop.permute.xlu0 %4946
        %4948 = vrot.lane.b32.xlu0 %v4881, 96
        %v4949 = vpop.permute.xlu0 %4948
        %4950 = vrot.lane.b32.xlu0 %v4882, 96
        %v4951 = vpop.permute.xlu0 %4950
        %4952 = vrot.lane.b32.xlu0 %v4883, 96
        %v4953 = vpop.permute.xlu0 %4952
        %4954 = vrot.lane.b32.xlu0 %v4884, 96
        %v4955 = vpop.permute.xlu0 %4954
        %4956 = vrot.lane.b32.xlu0 %v4885, 96
        %v4957 = vpop.permute.xlu0 %4956
        %4958 = vrot.lane.b32.xlu0 %v4886, 96
        %v4959 = vpop.permute.xlu0 %4958
        %4960 = vrot.lane.b32.xlu0 %v4887, 96
        %v4961 = vpop.permute.xlu0 %4960
        %4962 = vrot.lane.b32.xlu0 %v4888, 96
        %v4963 = vpop.permute.xlu0 %4962
        %4964 = vrot.lane.b32.xlu0 %v4889, 96
        %v4965 = vpop.permute.xlu0 %4964
        %4966 = vrot.lane.b32.xlu0 %v4890, 96
        %v4967 = vpop.permute.xlu0 %4966
        %4968 = vrot.lane.b32.xlu0 %v4891, 96
        %v4969 = vpop.permute.xlu0 %4968
        %4970 = vrot.lane.b32.xlu0 %v4892, 96
        %v4971 = vpop.permute.xlu0 %4970
        %4972 = vrot.lane.b32.xlu0 %v4893, 96
        %v4973 = vpop.permute.xlu0 %4972
        %4974 = vrot.lane.b32.xlu0 %v4894, 96
        %v4975 = vpop.permute.xlu0 %4974
        %4976 = vrot.lane.b32.xlu0 %v4895, 96
        %v4977 = vpop.permute.xlu0 %4976
        %4978 = vrot.lane.b32.xlu0 %v4896, 96
        %v4979 = vpop.permute.xlu0 %4978
        %4980 = vrot.lane.b32.xlu0 %v4897, 96
        %v4981 = vpop.permute.xlu0 %4980
        %4982 = vrot.lane.b32.xlu0 %v4898, 96
        %v4983 = vpop.permute.xlu0 %4982
        %4984 = vrot.lane.b32.xlu0 %v4899, 96
        %v4985 = vpop.permute.xlu0 %4984
        %4986 = vrot.lane.b32.xlu0 %v4900, 96
        %v4987 = vpop.permute.xlu0 %4986
        %4988 = vrot.lane.b32.xlu0 %v4901, 96
        %v4989 = vpop.permute.xlu0 %4988
        %4990 = vrot.lane.b32.xlu0 %v4902, 96
        %v4991 = vpop.permute.xlu0 %4990
        %4992 = vrot.lane.b32.xlu0 %v4903, 96
        %v4993 = vpop.permute.xlu0 %4992
        %4994 = vrot.lane.b32.xlu0 %v4904, 96
        %v4995 = vpop.permute.xlu0 %4994
        %4996 = vrot.lane.b32.xlu0 %v4905, 96
        %v4997 = vpop.permute.xlu0 %4996
        %4998 = vrot.lane.b32.xlu0 %v4906, 96
        %v4999 = vpop.permute.xlu0 %4998
        %5000 = vrot.lane.b32.xlu0 %v4907, 96
        %v5001 = vpop.permute.xlu0 %5000
        %5002 = vrot.lane.b32.xlu0 %v4908, 96
        %v5003 = vpop.permute.xlu0 %5002
        %5004 = vrot.lane.b32.xlu0 %v4909, 96
        %v5005 = vpop.permute.xlu0 %5004
        %vm5038 = vcmask 1044224
        %5039 = vst.msk [vmem:[#allocation4] sm:$0xf] %vm5038, %v4943
        %5040 = vst.msk [vmem:[#allocation4 + $0x4] sm:$0xf] %vm5038, %v4945
        %5041 = vst.msk [vmem:[#allocation4 + $0x8] sm:$0xf] %vm5038, %v4947
        %5042 = vst.msk [vmem:[#allocation4 + $0xc] sm:$0xf] %vm5038, %v4949
        %5043 = vst.msk [vmem:[#allocation4 + $0x10] sm:$0xf] %vm5038, %v4951
        %5044 = vst.msk [vmem:[#allocation4 + $0x14] sm:$0xf] %vm5038, %v4953
        %5045 = vst.msk [vmem:[#allocation4 + $0x18] sm:$0xf] %vm5038, %v4955
        %5046 = vst.msk [vmem:[#allocation4 + $0x1c] sm:$0xf] %vm5038, %v4957
        %5047 = vst.msk [vmem:[#allocation4 + $0x20] sm:$0xf] %vm5038, %v4959
        %5048 = vst.msk [vmem:[#allocation4 + $0x24] sm:$0xf] %vm5038, %v4961
        %5049 = vst.msk [vmem:[#allocation4 + $0x28] sm:$0xf] %vm5038, %v4963
        %5050 = vst.msk [vmem:[#allocation4 + $0x2c] sm:$0xf] %vm5038, %v4965
        %5051 = vst.msk [vmem:[#allocation4 + $0x30] sm:$0xf] %vm5038, %v4967
        %5052 = vst.msk [vmem:[#allocation4 + $0x34] sm:$0xf] %vm5038, %v4969
        %5053 = vst.msk [vmem:[#allocation4 + $0x38] sm:$0xf] %vm5038, %v4971
        %5054 = vst.msk [vmem:[#allocation4 + $0x3c] sm:$0xf] %vm5038, %v4973
        %5055 = vst.msk [vmem:[#allocation4 + $0x40] sm:$0xf] %vm5038, %v4975
        %5056 = vst.msk [vmem:[#allocation4 + $0x44] sm:$0xf] %vm5038, %v4977
        %5057 = vst.msk [vmem:[#allocation4 + $0x48] sm:$0xf] %vm5038, %v4979
        %5058 = vst.msk [vmem:[#allocation4 + $0x4c] sm:$0xf] %vm5038, %v4981
        %5059 = vst.msk [vmem:[#allocation4 + $0x50] sm:$0xf] %vm5038, %v4983
        %5060 = vst.msk [vmem:[#allocation4 + $0x54] sm:$0xf] %vm5038, %v4985
        %5061 = vst.msk [vmem:[#allocation4 + $0x58] sm:$0xf] %vm5038, %v4987
        %5062 = vst.msk [vmem:[#allocation4 + $0x5c] sm:$0xf] %vm5038, %v4989
        %5063 = vst.msk [vmem:[#allocation4 + $0x60] sm:$0xf] %vm5038, %v4991
        %5064 = vst.msk [vmem:[#allocation4 + $0x64] sm:$0xf] %vm5038, %v4993
        %5065 = vst.msk [vmem:[#allocation4 + $0x68] sm:$0xf] %vm5038, %v4995
        %5066 = vst.msk [vmem:[#allocation4 + $0x6c] sm:$0xf] %vm5038, %v4997
        %5067 = vst.msk [vmem:[#allocation4 + $0x70] sm:$0xf] %vm5038, %v4999
        %5068 = vst.msk [vmem:[#allocation4 + $0x74] sm:$0xf] %vm5038, %v5001
        %5069 = vst.msk [vmem:[#allocation4 + $0x78] sm:$0xf] %vm5038, %v5003
        %5070 = vst.msk [vmem:[#allocation4 + $0x7c] sm:$0xf] %vm5038, %v5005
        %5071 = vst [vmem:[%s611] sm:$0xff] %v4677
        %5072 = vst [vmem:[%s611 + $0x8] sm:$0xff] %v4678
        %5073 = vst [vmem:[%s611 + $0x10] sm:$0xff] %v4679
        %5074 = vst [vmem:[%s611 + $0x18] sm:$0xff] %v4680
        %5075 = vst [vmem:[%s611 + $0x20] sm:$0xff] %v4681
        %5076 = vst [vmem:[%s611 + $0x28] sm:$0xff] %v4682
        %5077 = vst [vmem:[%s611 + $0x30] sm:$0xff] %v4683
        %5078 = vst [vmem:[%s611 + $0x38] sm:$0xff] %v4684
        %5079 = vst [vmem:[%s611 + $0x40] sm:$0xff] %v4685
        %5080 = vst [vmem:[%s611 + $0x48] sm:$0xff] %v4686
        %5081 = vst [vmem:[%s611 + $0x50] sm:$0xff] %v4687
        %5082 = vst [vmem:[%s611 + $0x58] sm:$0xff] %v4688
        %5083 = vst [vmem:[%s611 + $0x60] sm:$0xff] %v4689
        %5084 = vst [vmem:[%s611 + $0x68] sm:$0xff] %v4690
        %5085 = vst [vmem:[%s611 + $0x70] sm:$0xff] %v4691
        %5086 = vst [vmem:[%s611 + $0x78] sm:$0xff] %v4692
        %5087 = vst [vmem:[%s611 + $0x80] sm:$0xff] %v4693
        %5088 = vst [vmem:[%s611 + $0x88] sm:$0xff] %v4694
        %5089 = vst [vmem:[%s611 + $0x90] sm:$0xff] %v4695
        %5090 = vst [vmem:[%s611 + $0x98] sm:$0xff] %v4696
        %5091 = vst [vmem:[%s611 + $0xa0] sm:$0xff] %v4697
        %5092 = vst [vmem:[%s611 + $0xa8] sm:$0xff] %v4698
        %5093 = vst [vmem:[%s611 + $0xb0] sm:$0xff] %v4699
        %5094 = vst [vmem:[%s611 + $0xb8] sm:$0xff] %v4700
        %5095 = vst [vmem:[%s611 + $0xc0] sm:$0xff] %v4701
        %5096 = vst [vmem:[%s611 + $0xc8] sm:$0xff] %v4702
        %5097 = vst [vmem:[%s611 + $0xd0] sm:$0xff] %v4703
        %5098 = vst [vmem:[%s611 + $0xd8] sm:$0xff] %v4704
        %5099 = vst [vmem:[%s611 + $0xe0] sm:$0xff] %v4705
        %5100 = vst [vmem:[%s611 + $0xe8] sm:$0xff] %v4706
        %5101 = vst [vmem:[%s611 + $0xf0] sm:$0xff] %v4707
        %5102 = vst [vmem:[%s611 + $0xf8] sm:$0xff] %v4708
        %v5103 = vld [vmem:[#allocation4] sm:$0xf]
        %v5104 = vld [vmem:[#allocation4 + $0x4] sm:$0xf]
        %v5105 = vld [vmem:[#allocation4 + $0x8] sm:$0xf]
        %v5106 = vld [vmem:[#allocation4 + $0xc] sm:$0xf]
        %v5107 = vld [vmem:[#allocation4 + $0x10] sm:$0xf]
        %v5108 = vld [vmem:[#allocation4 + $0x14] sm:$0xf]
        %v5109 = vld [vmem:[#allocation4 + $0x18] sm:$0xf]
        %v5110 = vld [vmem:[#allocation4 + $0x1c] sm:$0xf]
        %v5111 = vld [vmem:[#allocation4 + $0x20] sm:$0xf]
        %v5112 = vld [vmem:[#allocation4 + $0x24] sm:$0xf]
        %v5113 = vld [vmem:[#allocation4 + $0x28] sm:$0xf]
        %v5114 = vld [vmem:[#allocation4 + $0x2c] sm:$0xf]
        %v5115 = vld [vmem:[#allocation4 + $0x30] sm:$0xf]
        %v5116 = vld [vmem:[#allocation4 + $0x34] sm:$0xf]
        %v5117 = vld [vmem:[#allocation4 + $0x38] sm:$0xf]
        %v5118 = vld [vmem:[#allocation4 + $0x3c] sm:$0xf]
        %v5119 = vld [vmem:[#allocation4 + $0x40] sm:$0xf]
        %v5120 = vld [vmem:[#allocation4 + $0x44] sm:$0xf]
        %v5121 = vld [vmem:[#allocation4 + $0x48] sm:$0xf]
        %v5122 = vld [vmem:[#allocation4 + $0x4c] sm:$0xf]
        %v5123 = vld [vmem:[#allocation4 + $0x50] sm:$0xf]
        %v5124 = vld [vmem:[#allocation4 + $0x54] sm:$0xf]
        %v5125 = vld [vmem:[#allocation4 + $0x58] sm:$0xf]
        %v5126 = vld [vmem:[#allocation4 + $0x5c] sm:$0xf]
        %v5127 = vld [vmem:[#allocation4 + $0x60] sm:$0xf]
        %v5128 = vld [vmem:[#allocation4 + $0x64] sm:$0xf]
        %v5129 = vld [vmem:[#allocation4 + $0x68] sm:$0xf]
        %v5130 = vld [vmem:[#allocation4 + $0x6c] sm:$0xf]
        %v5131 = vld [vmem:[#allocation4 + $0x70] sm:$0xf]
        %v5132 = vld [vmem:[#allocation4 + $0x74] sm:$0xf]
        %v5133 = vld [vmem:[#allocation4 + $0x78] sm:$0xf]
        %v5134 = vld [vmem:[#allocation4 + $0x7c] sm:$0xf]
        %v5135 = vld [vmem:[#allocation16] sm:$0xf]
        %v5136 = vld [vmem:[#allocation16 + $0x4] sm:$0xf]
        %v5137 = vld [vmem:[#allocation16 + $0x8] sm:$0xf]
        %v5138 = vld [vmem:[#allocation16 + $0xc] sm:$0xf]
        %v5139 = vld [vmem:[#allocation16 + $0x10] sm:$0xf]
        %v5140 = vld [vmem:[#allocation16 + $0x14] sm:$0xf]
        %v5141 = vld [vmem:[#allocation16 + $0x18] sm:$0xf]
        %v5142 = vld [vmem:[#allocation16 + $0x1c] sm:$0xf]
        %v5143 = vld [vmem:[#allocation16 + $0x20] sm:$0xf]
        %v5144 = vld [vmem:[#allocation16 + $0x24] sm:$0xf]
        %v5145 = vld [vmem:[#allocation16 + $0x28] sm:$0xf]
        %v5146 = vld [vmem:[#allocation16 + $0x2c] sm:$0xf]
        %v5147 = vld [vmem:[#allocation16 + $0x30] sm:$0xf]
        %v5148 = vld [vmem:[#allocation16 + $0x34] sm:$0xf]
        %v5149 = vld [vmem:[#allocation16 + $0x38] sm:$0xf]
        %v5150 = vld [vmem:[#allocation16 + $0x3c] sm:$0xf]
        %v5151 = vld [vmem:[%s10] sm:$0x1]
        %v5153 = vperm.slane %v5151, 0
        %v5187 = vunpack.c.l.b16 %v5103
        %v5188 = vunpack.c.l.b16 %v5104
        %v5189 = vunpack.c.l.b16 %v5105
        %v5190 = vunpack.c.l.b16 %v5106
        %v5191 = vunpack.c.l.b16 %v5107
        %v5192 = vunpack.c.l.b16 %v5108
        %v5193 = vunpack.c.l.b16 %v5109
        %v5194 = vunpack.c.l.b16 %v5110
        %v5195 = vunpack.c.l.b16 %v5111
        %v5196 = vunpack.c.l.b16 %v5112
        %v5197 = vunpack.c.l.b16 %v5113
        %v5198 = vunpack.c.l.b16 %v5114
        %v5199 = vunpack.c.l.b16 %v5115
        %v5200 = vunpack.c.l.b16 %v5116
        %v5201 = vunpack.c.l.b16 %v5117
        %v5202 = vunpack.c.l.b16 %v5118
        %v5203 = vunpack.c.l.b16 %v5119
        %v5204 = vunpack.c.l.b16 %v5120
        %v5205 = vunpack.c.l.b16 %v5121
        %v5206 = vunpack.c.l.b16 %v5122
        %v5207 = vunpack.c.l.b16 %v5123
        %v5208 = vunpack.c.l.b16 %v5124
        %v5209 = vunpack.c.l.b16 %v5125
        %v5210 = vunpack.c.l.b16 %v5126
        %v5211 = vunpack.c.l.b16 %v5127
        %v5212 = vunpack.c.l.b16 %v5128
        %v5213 = vunpack.c.l.b16 %v5129
        %v5214 = vunpack.c.l.b16 %v5130
        %v5215 = vunpack.c.l.b16 %v5131
        %v5216 = vunpack.c.l.b16 %v5132
        %v5217 = vunpack.c.l.b16 %v5133
        %v5218 = vunpack.c.l.b16 %v5134
        %v5219 = vpack.c.b16 %v5188, %v5187
        %v5220 = vpack.c.b16 %v5190, %v5189
        %v5221 = vpack.c.b16 %v5192, %v5191
        %v5222 = vpack.c.b16 %v5194, %v5193
        %v5223 = vpack.c.b16 %v5196, %v5195
        %v5224 = vpack.c.b16 %v5198, %v5197
        %v5225 = vpack.c.b16 %v5200, %v5199
        %v5226 = vpack.c.b16 %v5202, %v5201
        %v5227 = vpack.c.b16 %v5204, %v5203
        %v5228 = vpack.c.b16 %v5206, %v5205
        %v5229 = vpack.c.b16 %v5208, %v5207
        %v5230 = vpack.c.b16 %v5210, %v5209
        %v5231 = vpack.c.b16 %v5212, %v5211
        %v5232 = vpack.c.b16 %v5214, %v5213
        %v5233 = vpack.c.b16 %v5216, %v5215
        %v5234 = vpack.c.b16 %v5218, %v5217
        %v5267 = vunpack.c.l.b16 %v5135
        %v5268 = vunpack.c.l.b16 %v5136
        %v5269 = vunpack.c.l.b16 %v5137
        %v5270 = vunpack.c.l.b16 %v5138
        %v5271 = vunpack.c.l.b16 %v5139
        %v5272 = vunpack.c.l.b16 %v5140
        %v5273 = vunpack.c.l.b16 %v5141
        %v5274 = vunpack.c.l.b16 %v5142
        %v5275 = vunpack.c.l.b16 %v5143
        %v5276 = vunpack.c.l.b16 %v5144
        %v5277 = vunpack.c.l.b16 %v5145
        %v5278 = vunpack.c.l.b16 %v5146
        %v5279 = vunpack.c.l.b16 %v5147
        %v5280 = vunpack.c.l.b16 %v5148
        %v5281 = vunpack.c.l.b16 %v5149
        %v5282 = vunpack.c.l.b16 %v5150
        %v5283 = vpack.c.b16 %v5268, %v5267
        %v5284 = vpack.c.b16 %v5270, %v5269
        %v5285 = vpack.c.b16 %v5272, %v5271
        %v5286 = vpack.c.b16 %v5274, %v5273
        %v5287 = vpack.c.b16 %v5276, %v5275
        %v5288 = vpack.c.b16 %v5278, %v5277
        %v5289 = vpack.c.b16 %v5280, %v5279
        %v5290 = vpack.c.b16 %v5282, %v5281
        %5299 = vmatpush.bf16.msra.mxu0 %v5290
        %5300 = vmatpush.bf16.msra.mxu0 %v5289
        %5301 = vmatpush.bf16.msra.mxu0 %v5288
        %5302 = vmatpush.bf16.msra.mxu0 %v5287
        %5303 = vmatpush.bf16.msra.mxu0 %v5286
        %5304 = vmatpush.bf16.msra.mxu0 %v5285
        %5305 = vmatpush.bf16.msra.mxu0 %v5284
        %5306 = vmatpush.bf16.msra.mxu0 %v5283
        %5307 = vmatmul.bf16.gmra.mxu0 %v5219
        %v5308 = vpop.f32.mrf.mxu0
        %v5309 = vadd.f32 %v5153, %v5308
        %v5310 = vpop.f32.mrf.mxu0
        %v5311 = vadd.f32 %v5153, %v5310
        %5312 = vmatmul.bf16.gmra.mxu0 %v5220
        %v5313 = vpop.f32.mrf.mxu0
        %v5314 = vadd.f32 %v5153, %v5313
        %v5315 = vpop.f32.mrf.mxu0
        %v5316 = vadd.f32 %v5153, %v5315
        %5317 = vmatmul.bf16.gmra.mxu0 %v5221
        %v5318 = vpop.f32.mrf.mxu0
        %v5319 = vadd.f32 %v5153, %v5318
        %v5320 = vpop.f32.mrf.mxu0
        %v5321 = vadd.f32 %v5153, %v5320
        %5322 = vmatmul.bf16.gmra.mxu0 %v5222
        %v5323 = vpop.f32.mrf.mxu0
        %v5324 = vadd.f32 %v5153, %v5323
        %v5325 = vpop.f32.mrf.mxu0
        %v5326 = vadd.f32 %v5153, %v5325
        %5327 = vmatmul.bf16.gmra.mxu0 %v5223
        %v5328 = vpop.f32.mrf.mxu0
        %v5329 = vadd.f32 %v5153, %v5328
        %v5330 = vpop.f32.mrf.mxu0
        %v5331 = vadd.f32 %v5153, %v5330
        %5332 = vmatmul.bf16.gmra.mxu0 %v5224
        %v5333 = vpop.f32.mrf.mxu0
        %v5334 = vadd.f32 %v5153, %v5333
        %v5335 = vpop.f32.mrf.mxu0
        %v5336 = vadd.f32 %v5153, %v5335
        %5337 = vmatmul.bf16.gmra.mxu0 %v5225
        %v5338 = vpop.f32.mrf.mxu0
        %v5339 = vadd.f32 %v5153, %v5338
        %v5340 = vpop.f32.mrf.mxu0
        %v5341 = vadd.f32 %v5153, %v5340
        %5342 = vmatmul.bf16.gmra.mxu0 %v5226
        %v5343 = vpop.f32.mrf.mxu0
        %v5344 = vadd.f32 %v5153, %v5343
        %v5345 = vpop.f32.mrf.mxu0
        %v5346 = vadd.f32 %v5153, %v5345
        %5347 = vmatmul.bf16.gmra.mxu0 %v5227
        %v5348 = vpop.f32.mrf.mxu0
        %v5349 = vadd.f32 %v5153, %v5348
        %v5350 = vpop.f32.mrf.mxu0
        %v5351 = vadd.f32 %v5153, %v5350
        %5352 = vmatmul.bf16.gmra.mxu0 %v5228
        %v5353 = vpop.f32.mrf.mxu0
        %v5354 = vadd.f32 %v5153, %v5353
        %v5355 = vpop.f32.mrf.mxu0
        %v5356 = vadd.f32 %v5153, %v5355
        %5357 = vmatmul.bf16.gmra.mxu0 %v5229
        %v5358 = vpop.f32.mrf.mxu0
        %v5359 = vadd.f32 %v5153, %v5358
        %v5360 = vpop.f32.mrf.mxu0
        %v5361 = vadd.f32 %v5153, %v5360
        %5362 = vmatmul.bf16.gmra.mxu0 %v5230
        %v5363 = vpop.f32.mrf.mxu0
        %v5364 = vadd.f32 %v5153, %v5363
        %v5365 = vpop.f32.mrf.mxu0
        %v5366 = vadd.f32 %v5153, %v5365
        %5367 = vmatmul.bf16.gmra.mxu0 %v5231
        %v5368 = vpop.f32.mrf.mxu0
        %v5369 = vadd.f32 %v5153, %v5368
        %v5370 = vpop.f32.mrf.mxu0
        %v5371 = vadd.f32 %v5153, %v5370
        %5372 = vmatmul.bf16.gmra.mxu0 %v5232
        %v5373 = vpop.f32.mrf.mxu0
        %v5374 = vadd.f32 %v5153, %v5373
        %v5375 = vpop.f32.mrf.mxu0
        %v5376 = vadd.f32 %v5153, %v5375
        %5377 = vmatmul.bf16.gmra.mxu0 %v5233
        %v5378 = vpop.f32.mrf.mxu0
        %v5379 = vadd.f32 %v5153, %v5378
        %v5380 = vpop.f32.mrf.mxu0
        %v5381 = vadd.f32 %v5153, %v5380
        %5382 = vmatmul.bf16.gmra.mxu0 %v5234
        %v5383 = vpop.f32.mrf.mxu0
        %v5384 = vadd.f32 %v5153, %v5383
        %v5385 = vpop.f32.mrf.mxu0
        %v5386 = vadd.f32 %v5153, %v5385
        %5387 = vdwg.mxu0
        %5388 = vst [vmem:[%s604] sm:$0xff] %v5309
        %5389 = vst [vmem:[%s604 + $0x8] sm:$0xff] %v5311
        %5390 = vst [vmem:[%s604 + $0x10] sm:$0xff] %v5314
        %5391 = vst [vmem:[%s604 + $0x18] sm:$0xff] %v5316
        %5392 = vst [vmem:[%s604 + $0x20] sm:$0xff] %v5319
        %5393 = vst [vmem:[%s604 + $0x28] sm:$0xff] %v5321
        %5394 = vst [vmem:[%s604 + $0x30] sm:$0xff] %v5324
        %5395 = vst [vmem:[%s604 + $0x38] sm:$0xff] %v5326
        %5396 = vst [vmem:[%s604 + $0x40] sm:$0xff] %v5329
        %5397 = vst [vmem:[%s604 + $0x48] sm:$0xff] %v5331
        %5398 = vst [vmem:[%s604 + $0x50] sm:$0xff] %v5334
        %5399 = vst [vmem:[%s604 + $0x58] sm:$0xff] %v5336
        %5400 = vst [vmem:[%s604 + $0x60] sm:$0xff] %v5339
        %5401 = vst [vmem:[%s604 + $0x68] sm:$0xff] %v5341
        %5402 = vst [vmem:[%s604 + $0x70] sm:$0xff] %v5344
        %5403 = vst [vmem:[%s604 + $0x78] sm:$0xff] %v5346
        %5404 = vst [vmem:[%s604 + $0x80] sm:$0xff] %v5349
        %5405 = vst [vmem:[%s604 + $0x88] sm:$0xff] %v5351
        %5406 = vst [vmem:[%s604 + $0x90] sm:$0xff] %v5354
        %5407 = vst [vmem:[%s604 + $0x98] sm:$0xff] %v5356
        %5408 = vst [vmem:[%s604 + $0xa0] sm:$0xff] %v5359
        %5409 = vst [vmem:[%s604 + $0xa8] sm:$0xff] %v5361
        %5410 = vst [vmem:[%s604 + $0xb0] sm:$0xff] %v5364
        %5411 = vst [vmem:[%s604 + $0xb8] sm:$0xff] %v5366
        %5412 = vst [vmem:[%s604 + $0xc0] sm:$0xff] %v5369
        %5413 = vst [vmem:[%s604 + $0xc8] sm:$0xff] %v5371
        %5414 = vst [vmem:[%s604 + $0xd0] sm:$0xff] %v5374
        %5415 = vst [vmem:[%s604 + $0xd8] sm:$0xff] %v5376
        %5416 = vst [vmem:[%s604 + $0xe0] sm:$0xff] %v5379
        %5417 = vst [vmem:[%s604 + $0xe8] sm:$0xff] %v5381
        %5418 = vst [vmem:[%s604 + $0xf0] sm:$0xff] %v5384
        %5419 = vst [vmem:[%s604 + $0xf8] sm:$0xff] %v5386
        %s5420 = sand.u32 %s308, 1
        %s5421 = scalar_lea.sflag [#allocation7], %s5420
        %s5422 = sand.u32 %s308, 1
        %s5423 = smul.addr %s5422, 256
        %s5424 = scalar_lea.vmem [#allocation17], %s5423
        %s5425 = sand.u32 %s336, 1
        %s5426 = scalar_lea.sflag [#allocation19], %s5425
        %s5427 = sand.u32 %s336, 1
        %s5428 = smul.addr %s5427, 256
        %s5429 = scalar_lea.vmem [#allocation18], %s5428
        // Predicated region
        $region97: #{tpu_custom_call.1} parent=63 // pred_check
          %p5430 = pneg %p318
        $region98: #{tpu_custom_call.1} parent=63 // pred_check_branch
          %5432 = sbr.rel (%p5430) target = $region100
        $region99: #{tpu_custom_call.1} parent=63 // pred_region
          %s5433 = smul.u32 32, %s43
          %5435 = vsyncadd %s5421, 0
          %s5436 = smul.addr %s42, 64
          %s5437 = sadd.s32 %s5433, %s5436
          %s5438 = smul.addr %s5437, 8
          %s5439 = scalar_lea.hbm %s11, %s5438
          %s5440 = sshll.u32 %s5424, 4
          %s5441 = int_to_ptr.vmem [resolvable:$true] %s5440
          %s5442 = sshll.u32 %s5439, 4
          %s5443 = int_to_ptr.hbm [resolvable:$true] %s5442
          %5448 = dma.vmem_to_hbm [thread:$0]  %s5441, 4096, %s5443, %s5421, 128, 128, 8
        $region100: #{tpu_custom_call.1} parent=63 // pred_fallthru
          _
        // Predicated region
        $region101: #{tpu_custom_call.1} parent=63 // pred_check
          %p5449 = pneg %p346
        $region102: #{tpu_custom_call.1} parent=63 // pred_check_branch
          %5451 = sbr.rel (%p5449) target = $region104
        $region103: #{tpu_custom_call.1} parent=63 // pred_region
          %s5452 = smul.u32 32, %s43
          %5454 = vsyncadd %s5426, 0
          %s5455 = smul.addr %s42, 64
          %s5456 = sadd.s32 %s5452, %s5455
          %s5457 = smul.addr %s5456, 8
          %s5458 = scalar_lea.hbm %s12, %s5457
          %s5459 = sshll.u32 %s5429, 4
          %s5460 = int_to_ptr.vmem [resolvable:$true] %s5459
          %s5461 = sshll.u32 %s5458, 4
          %s5462 = int_to_ptr.hbm [resolvable:$true] %s5461
          %5467 = dma.vmem_to_hbm [thread:$0]  %s5460, 4096, %s5462, %s5426, 128, 128, 8
        $region104: #{tpu_custom_call.1} parent=63 // pred_fallthru
          _
      $region64: #{tpu_custom_call.1} parent=5 // pred_fallthru
        _
      %p5468 = scmp.le.s32.totalorder 2, %s33
      // Predicated region
      $region105: #{tpu_custom_call.1} parent=5 // pred_check
        %p5469 = pneg %p5468
      $region106: #{tpu_custom_call.1} parent=5 // pred_check_branch
        %5471 = sbr.rel (%p5469) target = $region108
      $region107: #{tpu_custom_call.1} parent=5 // pred_region
        %s5472 = ssub.s32 %s33, 2
        // Predicated region
        $region109: #{tpu_custom_call.1} parent=107 // pred_check
          %p5473 = pneg %p324
        $region110: #{tpu_custom_call.1} parent=107 // pred_check_branch
          %5475 = sbr.rel (%p5473) target = $region112
        $region111: #{tpu_custom_call.1} parent=107 // pred_region
          %s5476 = sand.u32 %s309, 1
          %s5477 = scalar_lea.sflag [#allocation7], %s5476
          %s5478 = sand.u32 %s309, 1
          %s5479 = smul.addr %s5478, 256
          %s5480 = scalar_lea.vmem [#allocation17], %s5479
          %5482 = dma.done %s5477, 4096
        $region112: #{tpu_custom_call.1} parent=107 // pred_fallthru
          _
        // Predicated region
        $region113: #{tpu_custom_call.1} parent=107 // pred_check
          %p5483 = pneg %p352
        $region114: #{tpu_custom_call.1} parent=107 // pred_check_branch
          %5485 = sbr.rel (%p5483) target = $region116
        $region115: #{tpu_custom_call.1} parent=107 // pred_region
          %s5486 = sand.u32 %s337, 1
          %s5487 = scalar_lea.sflag [#allocation19], %s5486
          %s5488 = sand.u32 %s337, 1
          %s5489 = smul.addr %s5488, 256
          %s5490 = scalar_lea.vmem [#allocation18], %s5489
          %5492 = dma.done %s5487, 4096
        $region116: #{tpu_custom_call.1} parent=107 // pred_fallthru
          _
      $region108: #{tpu_custom_call.1} parent=5 // pred_fallthru
        _
    $region6: #{tpu_custom_call.1} parent=1 // loop_footer
      %s37 = sadd.s32 1, %s33
    $region7: #{tpu_custom_call.1} parent=1 // loop_footer_branch
      %32 = sbr.rel target = $region3
    $region8: #{tpu_custom_call.1} parent=1 // loop_exit
      _
    %5493 = vsyncpa [#allocation6], 1
    %s5494 = scalar_lea.sflag [#allocation6], 1
    %5495 = vsyncpa %s5494, 1
    %5496 = vsyncpa [#allocation9], 1
    %s5497 = scalar_lea.sflag [#allocation9], 1
    %5498 = vsyncpa %s5497, 1
    %5499 = vsyncpa [#allocation12], 1
    %5500 = vsyncpa [#allocation15], 1
    %5501 = vsyncpa [#allocation7], 1
    %s5502 = scalar_lea.sflag [#allocation7], 1
    %5503 = vsyncpa %s5502, 1
    %5504 = vsyncpa [#allocation19], 1
    %s5505 = scalar_lea.sflag [#allocation19], 1
    %5506 = vsyncpa %s5505, 1

</llo_original>
